<compile_context>
chip_gen: v6e
topology: v6e:2x2x1
jax: 0.10.0
libtpu: 0.0.40
codegen_flags: <defaults>
</compile_context>

<pallas_src>
import functools

import jax
import jax.numpy as jnp
from jax.experimental import pallas as pl
from jax.experimental.pallas import tpu as pltpu


# ----------------------------------------------------------------------------
# helpers
# ----------------------------------------------------------------------------
def _round_up(x, m):
    return ((x + m - 1) // m) * m


def _choose_m_tiling(m):
    """(row_block, padded_rows).  Multiples of 16 (bf16 sublane packing); at least
    two blocks when possible so both v7x TensorCores get work."""
    m16 = _round_up(max(m, 1), 16)
    if m16 <= 32:
        return m16, m16
    if m16 <= 512:
        tm = _round_up((m16 + 1) // 2, 16)
        return tm, _round_up(m16, tm)
    tm = 256
    return tm, _round_up(m16, tm)


# ----------------------------------------------------------------------------
# Pallas kernels
# ----------------------------------------------------------------------------
def matmul_bias_kernel(a_ref, b_ref, bias_ref, o_ref, *, apply_relu):
    """(tm, K) @ (K, Np) with full (small) K in one MXU pass, fused bias (+ReLU).

    Operands are bf16, accumulation / epilogue in f32."""
    acc = jnp.dot(a_ref[...], b_ref[...], preferred_element_type=jnp.float32)
    acc = acc + bias_ref[...]
    if apply_relu:
        acc = jnp.maximum(acc, 0.0)
    o_ref[...] = acc.astype(o_ref.dtype)


def fusion_head_kernel(q_ref, k_ref, wq_ref, wk_ref, b_ref, o_ref, *, normalize):
    """F.normalize(q), F.normalize(k), concat, Linear == qn@Wq + kn@Wk + b.

    Padded feature columns of q/k are exactly zero (zero weight cols + zero bias in
    the producing fc), so including them in the norm reduction is exact."""
    q = q_ref[...].astype(jnp.float32)
    k = k_ref[...].astype(jnp.float32)
    if normalize:
        # PyTorch F.normalize: x / max(||x||_2, eps) with eps=1e-12
        # == x * rsqrt(max(sum(x*x), eps^2)); rsqrt runs on the EUP slot.
        eps2 = 1e-24
        q = q * jax.lax.rsqrt(jnp.maximum(jnp.sum(q * q, axis=1, keepdims=True), eps2))
        k = k * jax.lax.rsqrt(jnp.maximum(jnp.sum(k * k, axis=1, keepdims=True), eps2))
    out = jnp.dot(q.astype(wq_ref.dtype), wq_ref[...], preferred_element_type=jnp.float32)
    out = out + jnp.dot(k.astype(wk_ref.dtype), wk_ref[...], preferred_element_type=jnp.float32)
    out = out + b_ref[...]
    o_ref[...] = out.astype(o_ref.dtype)


# ----------------------------------------------------------------------------
# Pallas wrappers
# ----------------------------------------------------------------------------
def pallas_matmul_bias(a, w_packed, bias_packed, *, apply_relu, out_dtype):
    """a:(M,K) @ w_packed:(K,Np) + bias_packed:(1,Np) -> (M,Np).

    K stays a single full-dim block (K <= ~512 for this model); only M is padded
    (to the row block) and the output keeps its 128-lane padded width — callers
    slice the real channel count when/where needed."""
    m, k = a.shape
    kw, n_p = w_packed.shape
    assert k == kw, (k, kw)
    tm, mp = _choose_m_tiling(m)
    a = a.astype(jnp.bfloat16)
    if mp != m:
        a = jnp.pad(a, ((0, mp - m), (0, 0)))

    out = pl.pallas_call(
        functools.partial(matmul_bias_kernel, apply_relu=apply_relu),
        out_shape=jax.ShapeDtypeStruct((mp, n_p), out_dtype),
        grid_spec=pltpu.PrefetchScalarGridSpec(
            num_scalar_prefetch=0,
            grid=(mp // tm,),
            in_specs=[
                pl.BlockSpec((tm, k), lambda i: (i, 0)),    # full (small) K block
                pl.BlockSpec((k, n_p), lambda i: (0, 0)),   # weights resident
                pl.BlockSpec((1, n_p), lambda i: (0, 0)),   # bias resident
            ],
            out_specs=pl.BlockSpec((tm, n_p), lambda i: (i, 0)),
        ),
        compiler_params=pltpu.CompilerParams(
            dimension_semantics=("parallel",)),
    )(a, w_packed, bias_packed)
    return out[:m]                                          # (M, Np)


def pallas_fusion_head(fq, fk, wq, wk, bias, *, normalize=True):
    """Fused L2-norm + concat + Linear, tiled over rows (lane-dense output)."""
    m, dp = fq.shape
    cp = wq.shape[1]
    mp = _round_up(m, 8)
    tm = min(mp, 256)
    mp = _round_up(mp, tm)
    if mp != m:
        fq = jnp.pad(fq, ((0, mp - m), (0, 0)))
        fk = jnp.pad(fk, ((0, mp - m), (0, 0)))

    out = pl.pallas_call(
        functools.partial(fusion_head_kernel, normalize=normalize),
        out_shape=jax.ShapeDtypeStruct((mp, cp), jnp.float32),
        grid_spec=pltpu.PrefetchScalarGridSpec(
            num_scalar_prefetch=0,
            grid=(mp // tm,),
            in_specs=[
                pl.BlockSpec((tm, dp), lambda i: (i, 0)),
                pl.BlockSpec((tm, dp), lambda i: (i, 0)),
                pl.BlockSpec((dp, cp), lambda i: (0, 0)),
                pl.BlockSpec((dp, cp), lambda i: (0, 0)),
                pl.BlockSpec((1, cp), lambda i: (0, 0)),
            ],
            out_specs=pl.BlockSpec((tm, cp), lambda i: (i, 0)),
        ),
        compiler_params=pltpu.CompilerParams(
            dimension_semantics=("parallel",)),
    )(fq, fk, wq, wk, bias)
    return out[:m]                                          # (M, Cp)


# ----------------------------------------------------------------------------
# Conv layers: channels-last im2col (XLA glue, fused under jit) + Pallas matmul
# ----------------------------------------------------------------------------
def conv1d_relu(x, w_packed, bias_packed, *, cout, kernel, stride):
    """x:(N,T,C) bf16 channels-last, valid padding, fused bias+ReLU."""
    n, t, c = x.shape
    t_out = (t - kernel) // stride + 1
    idx = jnp.arange(t_out)[:, None] * stride + jnp.arange(kernel)[None, :]  # (T_out,K)
    patches = x[:, idx, :].reshape(n * t_out, kernel * c)                    # (M, K*C)
    out = pallas_matmul_bias(patches, w_packed, bias_packed,
                             apply_relu=True, out_dtype=jnp.bfloat16)
    return out[:, :cout].reshape(n, t_out, cout)                             # (N,T_out,Cout)


def conv2d_relu(x, w_packed, bias_packed, *, cout, kh, kw, stride):
    """x:(N,H,W,C) bf16 channels-last, valid padding, fused bias+ReLU."""
    n, h, w, c = x.shape
    ho = (h - kh) // stride + 1
    wo = (w - kw) // stride + 1
    hi = jnp.arange(ho)[:, None] * stride + jnp.arange(kh)[None, :]          # (Ho,KH)
    wi = jnp.arange(wo)[:, None] * stride + jnp.arange(kw)[None, :]          # (Wo,KW)
    patches = x[:, hi[:, None, :, None], wi[None, :, None, :], :]            # (N,Ho,Wo,KH,KW,C)
    patches = patches.reshape(n * ho * wo, kh * kw * c)
    out = pallas_matmul_bias(patches, w_packed, bias_packed,
                             apply_relu=True, out_dtype=jnp.bfloat16)
    return out[:, :cout].reshape(n, ho, wo, cout)                            # (N,Ho,Wo,Cout)


# ----------------------------------------------------------------------------
# Parameter init (PyTorch-style raw layouts) and one-time packing
# ----------------------------------------------------------------------------
CONV1D_LAYERS = ["e_conv1", "e_conv2", "e_conv3", "e_conv4"]
CONV2D_LAYERS = ["s_conv1", "s_conv2", "s_conv3"]


def _init_conv(key, cout, cin, *ks):
    k1, k2 = jax.random.split(key)
    fan_in = cin
    for kk in ks:
        fan_in *= kk
    w = jax.random.normal(k1, (cout, cin, *ks), jnp.float32) * (1.0 / (fan_in ** 0.5))
    b = jax.random.normal(k2, (cout,), jnp.float32) * 0.01
    return w, b


def _init_linear(key, din, dout):
    k1, k2 = jax.random.split(key)
    w = jax.random.normal(k1, (din, dout), jnp.float32) * (1.0 / (din ** 0.5))
    b = jax.random.normal(k2, (dout,), jnp.float32) * 0.01
    return w, b


def init_params(key, c_v1, c_v2, hidden, feat_dim, num_class):
    keys = jax.random.split(key, 12)
    p = {}
    # R1DNet stand-in: kernel_size=[7,11,11,7], stride=2
    p["e_conv1"] = _init_conv(keys[0], hidden, c_v1, 7)
    p["e_conv2"] = _init_conv(keys[1], 2 * hidden, hidden, 11)
    p["e_conv3"] = _init_conv(keys[2], 2 * hidden, 2 * hidden, 11)
    p["e_conv4"] = _init_conv(keys[3], 4 * hidden, 2 * hidden, 7)
    p["e_fc"] = _init_linear(keys[4], 4 * hidden, feat_dim)
    # R2DNet stand-in: 3x3 stride-2 convs
    p["s_conv1"] = _init_conv(keys[5], hidden, c_v2, 3, 3)
    p["s_conv2"] = _init_conv(keys[6], 2 * hidden, hidden, 3, 3)
    p["s_conv3"] = _init_conv(keys[7], 4 * hidden, 2 * hidden, 3, 3)
    p["s_fc"] = _init_linear(keys[8], 4 * hidden, feat_dim)
    # final_fc: Linear(2*feat_dim -> num_class)  (use_dropout/use_batch_norm = False)
    p["final_fc"] = _init_linear(keys[9], 2 * feat_dim, num_class)
    return p


def _pack_rhs(w_mat, b):
    """w_mat:(K,N), b:(N,) -> bf16 (K, Np=128-multiple) weight, f32 (1, Np) bias."""
    k, n = w_mat.shape
    n_p = _round_up(n, 128)
    wp = jnp.pad(w_mat, ((0, 0), (0, n_p - n))).astype(jnp.bfloat16)
    bp = jnp.pad(b.astype(jnp.float32), (0, n_p - n)).reshape(1, n_p)
    return wp, bp


def pack_params(raw):
    """Hoisted one-time weight reshape/transpose/pad/cast (no per-forward repacking).

    Returns (packed arrays pytree, python-int meta dict kept out of the jit pytree)."""
    packed, meta = {}, {}
    for name in CONV1D_LAYERS:
        w, b = raw[name]                                    # (Cout, Cin, K)
        cout, cin, k = w.shape
        wm = jnp.transpose(w, (2, 1, 0)).reshape(k * cin, cout)
        packed[name] = _pack_rhs(wm, b)
        meta[name] = dict(cout=cout, k=k, stride=2)
    for name in CONV2D_LAYERS:
        w, b = raw[name]                                    # (Cout, Cin, KH, KW)
        cout, cin, kh, kw = w.shape
        wm = jnp.transpose(w, (2, 3, 1, 0)).reshape(kh * kw * cin, cout)
        packed[name] = _pack_rhs(wm, b)
        meta[name] = dict(cout=cout, kh=kh, kw=kw, stride=2)
    for name in ["e_fc", "s_fc"]:
        w, b = raw[name]                                    # (Din, Dout)
        packed[name] = _pack_rhs(w, b)
        meta[name] = dict(dout=w.shape[1])
    # final_fc split into q/k halves; feature rows padded to the fc output's padded
    # lane width (those activation columns are exactly zero -> math unchanged).
    w, b = raw["final_fc"]                                  # (2*feat_dim, num_class)
    feat_dim = w.shape[0] // 2
    num_class = w.shape[1]
    dp = _round_up(meta["e_fc"]["dout"], 128)
    cp = _round_up(num_class, 128)
    wq = jnp.zeros((dp, cp), jnp.float32).at[:feat_dim, :num_class].set(w[:feat_dim])
    wk = jnp.zeros((dp, cp), jnp.float32).at[:feat_dim, :num_class].set(w[feat_dim:])
    bp = jnp.zeros((1, cp), jnp.float32).at[0, :num_class].set(b)
    packed["final_fc"] = (wq.astype(jnp.bfloat16), wk.astype(jnp.bfloat16), bp)
    meta["final_fc"] = dict(num_class=num_class, feat_dim=feat_dim)
    return packed, meta


# ----------------------------------------------------------------------------
# FusionClassifier forward
# ----------------------------------------------------------------------------
def r1d_encoder(packed, meta, x):
    # x: (N, T, C) bf16 channels-last
    for name in CONV1D_LAYERS:
        wp, bp = packed[name]
        m = meta[name]
        x = conv1d_relu(x, wp, bp, cout=m["cout"], kernel=m["k"], stride=m["stride"])
    h = jnp.mean(x.astype(jnp.float32), axis=1)             # global average pool (glue)
    wp, bp = packed["e_fc"]
    # f32 output; columns >= feat_dim are exactly zero (zero-padded weight cols/bias).
    return pallas_matmul_bias(h.astype(jnp.bfloat16), wp, bp,
                              apply_relu=False, out_dtype=jnp.float32)


def r2d_sampler(packed, meta, x):
    # x: (N, H, W, C) bf16 channels-last
    for name in CONV2D_LAYERS:
        wp, bp = packed[name]
        m = meta[name]
        x = conv2d_relu(x, wp, bp, cout=m["cout"], kh=m["kh"], kw=m["kw"],
                        stride=m["stride"])
    h = jnp.mean(x.astype(jnp.float32), axis=(1, 2))        # global average pool (glue)
    wp, bp = packed["s_fc"]
    return pallas_matmul_bias(h.astype(jnp.bfloat16), wp, bp,
                              apply_relu=False, out_dtype=jnp.float32)


def fusion_classifier_forward(packed, meta, x1, x2, *, use_l2_norm=True):
    batch_size, num_epoch, channel, time_len = x1.shape
    x1 = x1.reshape(batch_size * num_epoch, channel, time_len)
    x2 = x2.reshape(batch_size * num_epoch, *x2.shape[2:])
    # PyTorch NCT/NCHW -> channels-last bf16 (one layout transform at the entry).
    x1 = jnp.transpose(x1, (0, 2, 1)).astype(jnp.bfloat16)          # (N, T, C)
    x2 = jnp.transpose(x2, (0, 2, 3, 1)).astype(jnp.bfloat16)       # (N, H, W, C)

    feature_q = r1d_encoder(packed, meta, x1)               # (N, Dp) f32, padded cols = 0
    feature_k = r2d_sampler(packed, meta, x2)               # (N, Dp) f32, padded cols = 0

    wq, wk, bp = packed["final_fc"]
    num_class = meta["final_fc"]["num_class"]
    out = pallas_fusion_head(feature_q, feature_k, wq, wk, bp,
                             normalize=use_l2_norm)         # (N, Cp)
    return out[:, :num_class].reshape(batch_size, num_epoch, num_class)


# ----------------------------------------------------------------------------
if __name__ == "__main__":
    batch, num_epoch = 2, 2
    c_v1, time_len = 2, 200
    c_v2, H, W = 3, 32, 32
    hidden, feat_dim, num_class = 8, 32, 5

    raw_params = init_params(jax.random.PRNGKey(42), c_v1, c_v2, hidden,
                             feat_dim, num_class)
    packed_params, meta = pack_params(raw_params)

    kx1, kx2 = jax.random.split(jax.random.PRNGKey(0))
    x1 = jax.random.normal(kx1, (batch, num_epoch, c_v1, time_len), jnp.float32)
    x2 = jax.random.normal(kx2, (batch, num_epoch, c_v2, H, W), jnp.float32)

    # meta (python ints) is closed over so only arrays cross the jit boundary.
    fwd = jax.jit(lambda p, a, b: fusion_classifier_forward(p, meta, a, b,
                                                            use_l2_norm=True))
    out = jax.block_until_ready(fwd(packed_params, x1, x2))
    assert out.shape == (batch, num_epoch, num_class), out.shape
    assert bool(jnp.all(jnp.isfinite(out)))
    print("KERNEL_OK")
</pallas_src>

<mosaic_0001>
module attributes {stable_mosaic.version = 11 : i64} {
  func.func @matmul_bias_kernel(%arg0: i32, %arg1: memref<256x27xbf16, #tpu.memory_space<vmem>>, %arg2: memref<27x128xbf16, #tpu.memory_space<vmem>>, %arg3: memref<1x128xf32, #tpu.memory_space<vmem>>, %arg4: memref<256x128xbf16, #tpu.memory_space<vmem>>) attributes {dimension_semantics = [#tpu.dimension_semantics<parallel>], iteration_bounds = array<i64: 4>, scalar_prefetch = 0 : i64, scratch_operands = 0 : i64, tpu.core_type = #tpu.core_type<tc>, window_params = [{transform_indices = @transform_0, window_bounds = array<i64: 256, 27>}, {pipeline_mode = #tpu.pipeline_mode<synchronous>, transform_indices = @transform_1, window_bounds = array<i64: 27, 128>}, {pipeline_mode = #tpu.pipeline_mode<synchronous>, transform_indices = @transform_2, window_bounds = array<i64: 1, 128>}, {transform_indices = @transform_3, window_bounds = array<i64: 256, 128>}]} {
    %c0 = arith.constant 0 : index
    %c0_0 = arith.constant 0 : index
    %0 = vector.load %arg1[%c0, %c0_0] : memref<256x27xbf16, #tpu.memory_space<vmem>>, vector<256x27xbf16>
    %c0_1 = arith.constant 0 : index
    %c0_2 = arith.constant 0 : index
    %1 = vector.load %arg2[%c0_1, %c0_2] : memref<27x128xbf16, #tpu.memory_space<vmem>>, vector<27x128xbf16>
    %cst = arith.constant dense<0.000000e+00> : vector<256x128xf32>
    %2 = tpu.matmul %0, %1, %cst {dimension_numbers = #tpu.dot_dimension_numbers<[1], [0], [0], [1], [0, 0, 1, 1], [], []>} : vector<256x27xbf16>, vector<27x128xbf16>, vector<256x128xf32> -> vector<256x128xf32>
    %c0_3 = arith.constant 0 : index
    %c0_4 = arith.constant 0 : index
    %3 = vector.load %arg3[%c0_3, %c0_4] : memref<1x128xf32, #tpu.memory_space<vmem>>, vector<1x128xf32>
    %4 = vector.broadcast %3 : vector<1x128xf32> to vector<256x128xf32>
    %5 = arith.addf %2, %4 : vector<256x128xf32>
    %cst_5 = arith.constant 0.000000e+00 : f32
    %6 = vector.broadcast %cst_5 : f32 to vector<256x128xf32>
    %7 = arith.maximumf %5, %6 : vector<256x128xf32>
    %8 = arith.truncf %7 : vector<256x128xf32> to vector<256x128xbf16>
    %c0_6 = arith.constant 0 : index
    %c0_7 = arith.constant 0 : index
    %9 = vector.load %arg4[%c0_6, %c0_7] : memref<256x128xbf16, #tpu.memory_space<vmem>>, vector<256x128xbf16>
    tpu.vector_store %arg4[%c0_6, %c0_7], %8 {strides = array<i32>} : memref<256x128xbf16, #tpu.memory_space<vmem>>, vector<256x128xbf16>,
    return
  }
  func.func @transform_0(%arg0: i32) -> (i32, i32) {
    %c0_i32 = arith.constant 0 : i32
    %c0_i32_0 = arith.constant 0 : i32
    return %arg0, %c0_i32 : i32, i32
  }
  func.func @transform_1(%arg0: i32) -> (i32, i32) {
    %c0_i32 = arith.constant 0 : i32
    %c0_i32_0 = arith.constant 0 : i32
    %c0_i32_1 = arith.constant 0 : i32
    return %c0_i32, %c0_i32_0 : i32, i32
  }
  func.func @transform_2(%arg0: i32) -> (i32, i32) {
    %c0_i32 = arith.constant 0 : i32
    %c0_i32_0 = arith.constant 0 : i32
    %c0_i32_1 = arith.constant 0 : i32
    return %c0_i32, %c0_i32_0 : i32, i32
  }
  func.func @transform_3(%arg0: i32) -> (i32, i32) {
    %c0_i32 = arith.constant 0 : i32
    %c0_i32_0 = arith.constant 0 : i32
    return %arg0, %c0_i32 : i32, i32
  }
}

module attributes {stable_mosaic.version = 11 : i64} {
  func.func @matmul_bias_kernel(%arg0: i32, %arg1: memref<112x72xbf16, #tpu.memory_space<vmem>>, %arg2: memref<72x128xbf16, #tpu.memory_space<vmem>>, %arg3: memref<1x128xf32, #tpu.memory_space<vmem>>, %arg4: memref<112x128xbf16, #tpu.memory_space<vmem>>) attributes {dimension_semantics = [#tpu.dimension_semantics<parallel>], iteration_bounds = array<i64: 2>, scalar_prefetch = 0 : i64, scratch_operands = 0 : i64, tpu.core_type = #tpu.core_type<tc>, window_params = [{transform_indices = @transform_0, window_bounds = array<i64: 112, 72>}, {pipeline_mode = #tpu.pipeline_mode<synchronous>, transform_indices = @transform_1, window_bounds = array<i64: 72, 128>}, {pipeline_mode = #tpu.pipeline_mode<synchronous>, transform_indices = @transform_2, window_bounds = array<i64: 1, 128>}, {transform_indices = @transform_3, window_bounds = array<i64: 112, 128>}]} {
    %c0 = arith.constant 0 : index
    %c0_0 = arith.constant 0 : index
    %0 = vector.load %arg1[%c0, %c0_0] : memref<112x72xbf16, #tpu.memory_space<vmem>>, vector<112x72xbf16>
    %c0_1 = arith.constant 0 : index
    %c0_2 = arith.constant 0 : index
    %1 = vector.load %arg2[%c0_1, %c0_2] : memref<72x128xbf16, #tpu.memory_space<vmem>>, vector<72x128xbf16>
    %cst = arith.constant dense<0.000000e+00> : vector<112x128xf32>
    %2 = tpu.matmul %0, %1, %cst {dimension_numbers = #tpu.dot_dimension_numbers<[1], [0], [0], [1], [0, 0, 1, 1], [], []>} : vector<112x72xbf16>, vector<72x128xbf16>, vector<112x128xf32> -> vector<112x128xf32>
    %c0_3 = arith.constant 0 : index
    %c0_4 = arith.constant 0 : index
    %3 = vector.load %arg3[%c0_3, %c0_4] : memref<1x128xf32, #tpu.memory_space<vmem>>, vector<1x128xf32>
    %4 = vector.broadcast %3 : vector<1x128xf32> to vector<112x128xf32>
    %5 = arith.addf %2, %4 : vector<112x128xf32>
    %cst_5 = arith.constant 0.000000e+00 : f32
    %6 = vector.broadcast %cst_5 : f32 to vector<112x128xf32>
    %7 = arith.maximumf %5, %6 : vector<112x128xf32>
    %8 = arith.truncf %7 : vector<112x128xf32> to vector<112x128xbf16>
    %c0_6 = arith.constant 0 : index
    %c0_7 = arith.constant 0 : index
    %9 = vector.load %arg4[%c0_6, %c0_7] : memref<112x128xbf16, #tpu.memory_space<vmem>>, vector<112x128xbf16>
    tpu.vector_store %arg4[%c0_6, %c0_7], %8 {strides = array<i32>} : memref<112x128xbf16, #tpu.memory_space<vmem>>, vector<112x128xbf16>,
    return
  }
  func.func @transform_0(%arg0: i32) -> (i32, i32) {
    %c0_i32 = arith.constant 0 : i32
    %c0_i32_0 = arith.constant 0 : i32
    return %arg0, %c0_i32 : i32, i32
  }
  func.func @transform_1(%arg0: i32) -> (i32, i32) {
    %c0_i32 = arith.constant 0 : i32
    %c0_i32_0 = arith.constant 0 : i32
    %c0_i32_1 = arith.constant 0 : i32
    return %c0_i32, %c0_i32_0 : i32, i32
  }
  func.func @transform_2(%arg0: i32) -> (i32, i32) {
    %c0_i32 = arith.constant 0 : i32
    %c0_i32_0 = arith.constant 0 : i32
    %c0_i32_1 = arith.constant 0 : i32
    return %c0_i32, %c0_i32_0 : i32, i32
  }
  func.func @transform_3(%arg0: i32) -> (i32, i32) {
    %c0_i32 = arith.constant 0 : i32
    %c0_i32_0 = arith.constant 0 : i32
    return %arg0, %c0_i32 : i32, i32
  }
}

module attributes {stable_mosaic.version = 11 : i64} {
  func.func @matmul_bias_kernel(%arg0: i32, %arg1: memref<32x144xbf16, #tpu.memory_space<vmem>>, %arg2: memref<144x128xbf16, #tpu.memory_space<vmem>>, %arg3: memref<1x128xf32, #tpu.memory_space<vmem>>, %arg4: memref<32x128xbf16, #tpu.memory_space<vmem>>) attributes {dimension_semantics = [#tpu.dimension_semantics<parallel>], iteration_bounds = array<i64: 2>, scalar_prefetch = 0 : i64, scratch_operands = 0 : i64, tpu.core_type = #tpu.core_type<tc>, window_params = [{transform_indices = @transform_0, window_bounds = array<i64: 32, 144>}, {pipeline_mode = #tpu.pipeline_mode<synchronous>, transform_indices = @transform_1, window_bounds = array<i64: 144, 128>}, {pipeline_mode = #tpu.pipeline_mode<synchronous>, transform_indices = @transform_2, window_bounds = array<i64: 1, 128>}, {transform_indices = @transform_3, window_bounds = array<i64: 32, 128>}]} {
    %c0 = arith.constant 0 : index
    %c0_0 = arith.constant 0 : index
    %0 = vector.load %arg1[%c0, %c0_0] : memref<32x144xbf16, #tpu.memory_space<vmem>>, vector<32x144xbf16>
    %c0_1 = arith.constant 0 : index
    %c0_2 = arith.constant 0 : index
    %1 = vector.load %arg2[%c0_1, %c0_2] : memref<144x128xbf16, #tpu.memory_space<vmem>>, vector<144x128xbf16>
    %cst = arith.constant dense<0.000000e+00> : vector<32x128xf32>
    %2 = tpu.matmul %0, %1, %cst {dimension_numbers = #tpu.dot_dimension_numbers<[1], [0], [0], [1], [0, 0, 1, 1], [], []>} : vector<32x144xbf16>, vector<144x128xbf16>, vector<32x128xf32> -> vector<32x128xf32>
    %c0_3 = arith.constant 0 : index
    %c0_4 = arith.constant 0 : index
    %3 = vector.load %arg3[%c0_3, %c0_4] : memref<1x128xf32, #tpu.memory_space<vmem>>, vector<1x128xf32>
    %4 = vector.broadcast %3 : vector<1x128xf32> to vector<32x128xf32>
    %5 = arith.addf %2, %4 : vector<32x128xf32>
    %cst_5 = arith.constant 0.000000e+00 : f32
    %6 = vector.broadcast %cst_5 : f32 to vector<32x128xf32>
    %7 = arith.maximumf %5, %6 : vector<32x128xf32>
    %8 = arith.truncf %7 : vector<32x128xf32> to vector<32x128xbf16>
    %c0_6 = arith.constant 0 : index
    %c0_7 = arith.constant 0 : index
    %9 = vector.load %arg4[%c0_6, %c0_7] : memref<32x128xbf16, #tpu.memory_space<vmem>>, vector<32x128xbf16>
    tpu.vector_store %arg4[%c0_6, %c0_7], %8 {strides = array<i32>} : memref<32x128xbf16, #tpu.memory_space<vmem>>, vector<32x128xbf16>,
    return
  }
  func.func @transform_0(%arg0: i32) -> (i32, i32) {
    %c0_i32 = arith.constant 0 : i32
    %c0_i32_0 = arith.constant 0 : i32
    return %arg0, %c0_i32 : i32, i32
  }
  func.func @transform_1(%arg0: i32) -> (i32, i32) {
    %c0_i32 = arith.constant 0 : i32
    %c0_i32_0 = arith.constant 0 : i32
    %c0_i32_1 = arith.constant 0 : i32
    return %c0_i32, %c0_i32_0 : i32, i32
  }
  func.func @transform_2(%arg0: i32) -> (i32, i32) {
    %c0_i32 = arith.constant 0 : i32
    %c0_i32_0 = arith.constant 0 : i32
    %c0_i32_1 = arith.constant 0 : i32
    return %c0_i32, %c0_i32_0 : i32, i32
  }
  func.func @transform_3(%arg0: i32) -> (i32, i32) {
    %c0_i32 = arith.constant 0 : i32
    %c0_i32_0 = arith.constant 0 : i32
    return %arg0, %c0_i32 : i32, i32
  }
}

module attributes {stable_mosaic.version = 11 : i64} {
  func.func @matmul_bias_kernel(%arg0: i32, %arg1: memref<16x32xbf16, #tpu.memory_space<vmem>>, %arg2: memref<32x128xbf16, #tpu.memory_space<vmem>>, %arg3: memref<1x128xf32, #tpu.memory_space<vmem>>, %arg4: memref<16x128xf32, #tpu.memory_space<vmem>>) attributes {dimension_semantics = [#tpu.dimension_semantics<parallel>], iteration_bounds = array<i64: 1>, scalar_prefetch = 0 : i64, scratch_operands = 0 : i64, tpu.core_type = #tpu.core_type<tc>, window_params = [{transform_indices = @transform_0, window_bounds = array<i64: 16, 32>}, {pipeline_mode = #tpu.pipeline_mode<synchronous>, transform_indices = @transform_1, window_bounds = array<i64: 32, 128>}, {pipeline_mode = #tpu.pipeline_mode<synchronous>, transform_indices = @transform_2, window_bounds = array<i64: 1, 128>}, {transform_indices = @transform_3, window_bounds = array<i64: 16, 128>}]} {
    %c0 = arith.constant 0 : index
    %c0_0 = arith.constant 0 : index
    %0 = vector.load %arg1[%c0, %c0_0] : memref<16x32xbf16, #tpu.memory_space<vmem>>, vector<16x32xbf16>
    %c0_1 = arith.constant 0 : index
    %c0_2 = arith.constant 0 : index
    %1 = vector.load %arg2[%c0_1, %c0_2] : memref<32x128xbf16, #tpu.memory_space<vmem>>, vector<32x128xbf16>
    %cst = arith.constant dense<0.000000e+00> : vector<16x128xf32>
    %2 = tpu.matmul %0, %1, %cst {dimension_numbers = #tpu.dot_dimension_numbers<[1], [0], [0], [1], [0, 0, 1, 1], [], []>} : vector<16x32xbf16>, vector<32x128xbf16>, vector<16x128xf32> -> vector<16x128xf32>
    %c0_3 = arith.constant 0 : index
    %c0_4 = arith.constant 0 : index
    %3 = vector.load %arg3[%c0_3, %c0_4] : memref<1x128xf32, #tpu.memory_space<vmem>>, vector<1x128xf32>
    %4 = vector.broadcast %3 : vector<1x128xf32> to vector<16x128xf32>
    %5 = arith.addf %2, %4 : vector<16x128xf32>
    %c0_5 = arith.constant 0 : index
    %c0_6 = arith.constant 0 : index
    %6 = vector.load %arg4[%c0_5, %c0_6] : memref<16x128xf32, #tpu.memory_space<vmem>>, vector<16x128xf32>
    tpu.vector_store %arg4[%c0_5, %c0_6], %5 {strides = array<i32>} : memref<16x128xf32, #tpu.memory_space<vmem>>, vector<16x128xf32>,
    return
  }
  func.func @transform_0(%arg0: i32) -> (i32, i32) {
    %c0_i32 = arith.constant 0 : i32
    %c0_i32_0 = arith.constant 0 : i32
    return %arg0, %c0_i32 : i32, i32
  }
  func.func @transform_1(%arg0: i32) -> (i32, i32) {
    %c0_i32 = arith.constant 0 : i32
    %c0_i32_0 = arith.constant 0 : i32
    %c0_i32_1 = arith.constant 0 : i32
    return %c0_i32, %c0_i32_0 : i32, i32
  }
  func.func @transform_2(%arg0: i32) -> (i32, i32) {
    %c0_i32 = arith.constant 0 : i32
    %c0_i32_0 = arith.constant 0 : i32
    %c0_i32_1 = arith.constant 0 : i32
    return %c0_i32, %c0_i32_0 : i32, i32
  }
  func.func @transform_3(%arg0: i32) -> (i32, i32) {
    %c0_i32 = arith.constant 0 : i32
    %c0_i32_0 = arith.constant 0 : i32
    return %arg0, %c0_i32 : i32, i32
  }
}

module attributes {stable_mosaic.version = 11 : i64} {
  func.func @matmul_bias_kernel(%arg0: i32, %arg1: memref<208x14xbf16, #tpu.memory_space<vmem>>, %arg2: memref<14x128xbf16, #tpu.memory_space<vmem>>, %arg3: memref<1x128xf32, #tpu.memory_space<vmem>>, %arg4: memref<208x128xbf16, #tpu.memory_space<vmem>>) attributes {dimension_semantics = [#tpu.dimension_semantics<parallel>], iteration_bounds = array<i64: 2>, scalar_prefetch = 0 : i64, scratch_operands = 0 : i64, tpu.core_type = #tpu.core_type<tc>, window_params = [{transform_indices = @transform_0, window_bounds = array<i64: 208, 14>}, {pipeline_mode = #tpu.pipeline_mode<synchronous>, transform_indices = @transform_1, window_bounds = array<i64: 14, 128>}, {pipeline_mode = #tpu.pipeline_mode<synchronous>, transform_indices = @transform_2, window_bounds = array<i64: 1, 128>}, {transform_indices = @transform_3, window_bounds = array<i64: 208, 128>}]} {
    %c0 = arith.constant 0 : index
    %c0_0 = arith.constant 0 : index
    %0 = vector.load %arg1[%c0, %c0_0] : memref<208x14xbf16, #tpu.memory_space<vmem>>, vector<208x14xbf16>
    %c0_1 = arith.constant 0 : index
    %c0_2 = arith.constant 0 : index
    %1 = vector.load %arg2[%c0_1, %c0_2] : memref<14x128xbf16, #tpu.memory_space<vmem>>, vector<14x128xbf16>
    %cst = arith.constant dense<0.000000e+00> : vector<208x128xf32>
    %2 = tpu.matmul %0, %1, %cst {dimension_numbers = #tpu.dot_dimension_numbers<[1], [0], [0], [1], [0, 0, 1, 1], [], []>} : vector<208x14xbf16>, vector<14x128xbf16>, vector<208x128xf32> -> vector<208x128xf32>
    %c0_3 = arith.constant 0 : index
    %c0_4 = arith.constant 0 : index
    %3 = vector.load %arg3[%c0_3, %c0_4] : memref<1x128xf32, #tpu.memory_space<vmem>>, vector<1x128xf32>
    %4 = vector.broadcast %3 : vector<1x128xf32> to vector<208x128xf32>
    %5 = arith.addf %2, %4 : vector<208x128xf32>
    %cst_5 = arith.constant 0.000000e+00 : f32
    %6 = vector.broadcast %cst_5 : f32 to vector<208x128xf32>
    %7 = arith.maximumf %5, %6 : vector<208x128xf32>
    %8 = arith.truncf %7 : vector<208x128xf32> to vector<208x128xbf16>
    %c0_6 = arith.constant 0 : index
    %c0_7 = arith.constant 0 : index
    %9 = vector.load %arg4[%c0_6, %c0_7] : memref<208x128xbf16, #tpu.memory_space<vmem>>, vector<208x128xbf16>
    tpu.vector_store %arg4[%c0_6, %c0_7], %8 {strides = array<i32>} : memref<208x128xbf16, #tpu.memory_space<vmem>>, vector<208x128xbf16>,
    return
  }
  func.func @transform_0(%arg0: i32) -> (i32, i32) {
    %c0_i32 = arith.constant 0 : i32
    %c0_i32_0 = arith.constant 0 : i32
    return %arg0, %c0_i32 : i32, i32
  }
  func.func @transform_1(%arg0: i32) -> (i32, i32) {
    %c0_i32 = arith.constant 0 : i32
    %c0_i32_0 = arith.constant 0 : i32
    %c0_i32_1 = arith.constant 0 : i32
    return %c0_i32, %c0_i32_0 : i32, i32
  }
  func.func @transform_2(%arg0: i32) -> (i32, i32) {
    %c0_i32 = arith.constant 0 : i32
    %c0_i32_0 = arith.constant 0 : i32
    %c0_i32_1 = arith.constant 0 : i32
    return %c0_i32, %c0_i32_0 : i32, i32
  }
  func.func @transform_3(%arg0: i32) -> (i32, i32) {
    %c0_i32 = arith.constant 0 : i32
    %c0_i32_0 = arith.constant 0 : i32
    return %arg0, %c0_i32 : i32, i32
  }
}

module attributes {stable_mosaic.version = 11 : i64} {
  func.func @matmul_bias_kernel(%arg0: i32, %arg1: memref<96x88xbf16, #tpu.memory_space<vmem>>, %arg2: memref<88x128xbf16, #tpu.memory_space<vmem>>, %arg3: memref<1x128xf32, #tpu.memory_space<vmem>>, %arg4: memref<96x128xbf16, #tpu.memory_space<vmem>>) attributes {dimension_semantics = [#tpu.dimension_semantics<parallel>], iteration_bounds = array<i64: 2>, scalar_prefetch = 0 : i64, scratch_operands = 0 : i64, tpu.core_type = #tpu.core_type<tc>, window_params = [{transform_indices = @transform_0, window_bounds = array<i64: 96, 88>}, {pipeline_mode = #tpu.pipeline_mode<synchronous>, transform_indices = @transform_1, window_bounds = array<i64: 88, 128>}, {pipeline_mode = #tpu.pipeline_mode<synchronous>, transform_indices = @transform_2, window_bounds = array<i64: 1, 128>}, {transform_indices = @transform_3, window_bounds = array<i64: 96, 128>}]} {
    %c0 = arith.constant 0 : index
    %c0_0 = arith.constant 0 : index
    %0 = vector.load %arg1[%c0, %c0_0] : memref<96x88xbf16, #tpu.memory_space<vmem>>, vector<96x88xbf16>
    %c0_1 = arith.constant 0 : index
    %c0_2 = arith.constant 0 : index
    %1 = vector.load %arg2[%c0_1, %c0_2] : memref<88x128xbf16, #tpu.memory_space<vmem>>, vector<88x128xbf16>
    %cst = arith.constant dense<0.000000e+00> : vector<96x128xf32>
    %2 = tpu.matmul %0, %1, %cst {dimension_numbers = #tpu.dot_dimension_numbers<[1], [0], [0], [1], [0, 0, 1, 1], [], []>} : vector<96x88xbf16>, vector<88x128xbf16>, vector<96x128xf32> -> vector<96x128xf32>
    %c0_3 = arith.constant 0 : index
    %c0_4 = arith.constant 0 : index
    %3 = vector.load %arg3[%c0_3, %c0_4] : memref<1x128xf32, #tpu.memory_space<vmem>>, vector<1x128xf32>
    %4 = vector.broadcast %3 : vector<1x128xf32> to vector<96x128xf32>
    %5 = arith.addf %2, %4 : vector<96x128xf32>
    %cst_5 = arith.constant 0.000000e+00 : f32
    %6 = vector.broadcast %cst_5 : f32 to vector<96x128xf32>
    %7 = arith.maximumf %5, %6 : vector<96x128xf32>
    %8 = arith.truncf %7 : vector<96x128xf32> to vector<96x128xbf16>
    %c0_6 = arith.constant 0 : index
    %c0_7 = arith.constant 0 : index
    %9 = vector.load %arg4[%c0_6, %c0_7] : memref<96x128xbf16, #tpu.memory_space<vmem>>, vector<96x128xbf16>
    tpu.vector_store %arg4[%c0_6, %c0_7], %8 {strides = array<i32>} : memref<96x128xbf16, #tpu.memory_space<vmem>>, vector<96x128xbf16>,
    return
  }
  func.func @transform_0(%arg0: i32) -> (i32, i32) {
    %c0_i32 = arith.constant 0 : i32
    %c0_i32_0 = arith.constant 0 : i32
    return %arg0, %c0_i32 : i32, i32
  }
  func.func @transform_1(%arg0: i32) -> (i32, i32) {
    %c0_i32 = arith.constant 0 : i32
    %c0_i32_0 = arith.constant 0 : i32
    %c0_i32_1 = arith.constant 0 : i32
    return %c0_i32, %c0_i32_0 : i32, i32
  }
  func.func @transform_2(%arg0: i32) -> (i32, i32) {
    %c0_i32 = arith.constant 0 : i32
    %c0_i32_0 = arith.constant 0 : i32
    %c0_i32_1 = arith.constant 0 : i32
    return %c0_i32, %c0_i32_0 : i32, i32
  }
  func.func @transform_3(%arg0: i32) -> (i32, i32) {
    %c0_i32 = arith.constant 0 : i32
    %c0_i32_0 = arith.constant 0 : i32
    return %arg0, %c0_i32 : i32, i32
  }
}

module attributes {stable_mosaic.version = 11 : i64} {
  func.func @matmul_bias_kernel(%arg0: i32, %arg1: memref<48x176xbf16, #tpu.memory_space<vmem>>, %arg2: memref<176x128xbf16, #tpu.memory_space<vmem>>, %arg3: memref<1x128xf32, #tpu.memory_space<vmem>>, %arg4: memref<48x128xbf16, #tpu.memory_space<vmem>>) attributes {dimension_semantics = [#tpu.dimension_semantics<parallel>], iteration_bounds = array<i64: 2>, scalar_prefetch = 0 : i64, scratch_operands = 0 : i64, tpu.core_type = #tpu.core_type<tc>, window_params = [{transform_indices = @transform_0, window_bounds = array<i64: 48, 176>}, {pipeline_mode = #tpu.pipeline_mode<synchronous>, transform_indices = @transform_1, window_bounds = array<i64: 176, 128>}, {pipeline_mode = #tpu.pipeline_mode<synchronous>, transform_indices = @transform_2, window_bounds = array<i64: 1, 128>}, {transform_indices = @transform_3, window_bounds = array<i64: 48, 128>}]} {
    %c0 = arith.constant 0 : index
    %c0_0 = arith.constant 0 : index
    %0 = vector.load %arg1[%c0, %c0_0] : memref<48x176xbf16, #tpu.memory_space<vmem>>, vector<48x176xbf16>
    %c0_1 = arith.constant 0 : index
    %c0_2 = arith.constant 0 : index
    %1 = vector.load %arg2[%c0_1, %c0_2] : memref<176x128xbf16, #tpu.memory_space<vmem>>, vector<176x128xbf16>
    %cst = arith.constant dense<0.000000e+00> : vector<48x128xf32>
    %2 = tpu.matmul %0, %1, %cst {dimension_numbers = #tpu.dot_dimension_numbers<[1], [0], [0], [1], [0, 0, 1, 1], [], []>} : vector<48x176xbf16>, vector<176x128xbf16>, vector<48x128xf32> -> vector<48x128xf32>
    %c0_3 = arith.constant 0 : index
    %c0_4 = arith.constant 0 : index
    %3 = vector.load %arg3[%c0_3, %c0_4] : memref<1x128xf32, #tpu.memory_space<vmem>>, vector<1x128xf32>
    %4 = vector.broadcast %3 : vector<1x128xf32> to vector<48x128xf32>
    %5 = arith.addf %2, %4 : vector<48x128xf32>
    %cst_5 = arith.constant 0.000000e+00 : f32
    %6 = vector.broadcast %cst_5 : f32 to vector<48x128xf32>
    %7 = arith.maximumf %5, %6 : vector<48x128xf32>
    %8 = arith.truncf %7 : vector<48x128xf32> to vector<48x128xbf16>
    %c0_6 = arith.constant 0 : index
    %c0_7 = arith.constant 0 : index
    %9 = vector.load %arg4[%c0_6, %c0_7] : memref<48x128xbf16, #tpu.memory_space<vmem>>, vector<48x128xbf16>
    tpu.vector_store %arg4[%c0_6, %c0_7], %8 {strides = array<i32>} : memref<48x128xbf16, #tpu.memory_space<vmem>>, vector<48x128xbf16>,
    return
  }
  func.func @transform_0(%arg0: i32) -> (i32, i32) {
    %c0_i32 = arith.constant 0 : i32
    %c0_i32_0 = arith.constant 0 : i32
    return %arg0, %c0_i32 : i32, i32
  }
  func.func @transform_1(%arg0: i32) -> (i32, i32) {
    %c0_i32 = arith.constant 0 : i32
    %c0_i32_0 = arith.constant 0 : i32
    %c0_i32_1 = arith.constant 0 : i32
    return %c0_i32, %c0_i32_0 : i32, i32
  }
  func.func @transform_2(%arg0: i32) -> (i32, i32) {
    %c0_i32 = arith.constant 0 : i32
    %c0_i32_0 = arith.constant 0 : i32
    %c0_i32_1 = arith.constant 0 : i32
    return %c0_i32, %c0_i32_0 : i32, i32
  }
  func.func @transform_3(%arg0: i32) -> (i32, i32) {
    %c0_i32 = arith.constant 0 : i32
    %c0_i32_0 = arith.constant 0 : i32
    return %arg0, %c0_i32 : i32, i32
  }
}

module attributes {stable_mosaic.version = 11 : i64} {
  func.func @matmul_bias_kernel(%arg0: i32, %arg1: memref<32x112xbf16, #tpu.memory_space<vmem>>, %arg2: memref<112x128xbf16, #tpu.memory_space<vmem>>, %arg3: memref<1x128xf32, #tpu.memory_space<vmem>>, %arg4: memref<32x128xbf16, #tpu.memory_space<vmem>>) attributes {dimension_semantics = [#tpu.dimension_semantics<parallel>], iteration_bounds = array<i64: 1>, scalar_prefetch = 0 : i64, scratch_operands = 0 : i64, tpu.core_type = #tpu.core_type<tc>, window_params = [{transform_indices = @transform_0, window_bounds = array<i64: 32, 112>}, {pipeline_mode = #tpu.pipeline_mode<synchronous>, transform_indices = @transform_1, window_bounds = array<i64: 112, 128>}, {pipeline_mode = #tpu.pipeline_mode<synchronous>, transform_indices = @transform_2, window_bounds = array<i64: 1, 128>}, {transform_indices = @transform_3, window_bounds = array<i64: 32, 128>}]} {
    %c0 = arith.constant 0 : index
    %c0_0 = arith.constant 0 : index
    %0 = vector.load %arg1[%c0, %c0_0] : memref<32x112xbf16, #tpu.memory_space<vmem>>, vector<32x112xbf16>
    %c0_1 = arith.constant 0 : index
    %c0_2 = arith.constant 0 : index
    %1 = vector.load %arg2[%c0_1, %c0_2] : memref<112x128xbf16, #tpu.memory_space<vmem>>, vector<112x128xbf16>
    %cst = arith.constant dense<0.000000e+00> : vector<32x128xf32>
    %2 = tpu.matmul %0, %1, %cst {dimension_numbers = #tpu.dot_dimension_numbers<[1], [0], [0], [1], [0, 0, 1, 1], [], []>} : vector<32x112xbf16>, vector<112x128xbf16>, vector<32x128xf32> -> vector<32x128xf32>
    %c0_3 = arith.constant 0 : index
    %c0_4 = arith.constant 0 : index
    %3 = vector.load %arg3[%c0_3, %c0_4] : memref<1x128xf32, #tpu.memory_space<vmem>>, vector<1x128xf32>
    %4 = vector.broadcast %3 : vector<1x128xf32> to vector<32x128xf32>
    %5 = arith.addf %2, %4 : vector<32x128xf32>
    %cst_5 = arith.constant 0.000000e+00 : f32
    %6 = vector.broadcast %cst_5 : f32 to vector<32x128xf32>
    %7 = arith.maximumf %5, %6 : vector<32x128xf32>
    %8 = arith.truncf %7 : vector<32x128xf32> to vector<32x128xbf16>
    %c0_6 = arith.constant 0 : index
    %c0_7 = arith.constant 0 : index
    %9 = vector.load %arg4[%c0_6, %c0_7] : memref<32x128xbf16, #tpu.memory_space<vmem>>, vector<32x128xbf16>
    tpu.vector_store %arg4[%c0_6, %c0_7], %8 {strides = array<i32>} : memref<32x128xbf16, #tpu.memory_space<vmem>>, vector<32x128xbf16>,
    return
  }
  func.func @transform_0(%arg0: i32) -> (i32, i32) {
    %c0_i32 = arith.constant 0 : i32
    %c0_i32_0 = arith.constant 0 : i32
    return %arg0, %c0_i32 : i32, i32
  }
  func.func @transform_1(%arg0: i32) -> (i32, i32) {
    %c0_i32 = arith.constant 0 : i32
    %c0_i32_0 = arith.constant 0 : i32
    %c0_i32_1 = arith.constant 0 : i32
    return %c0_i32, %c0_i32_0 : i32, i32
  }
  func.func @transform_2(%arg0: i32) -> (i32, i32) {
    %c0_i32 = arith.constant 0 : i32
    %c0_i32_0 = arith.constant 0 : i32
    %c0_i32_1 = arith.constant 0 : i32
    return %c0_i32, %c0_i32_0 : i32, i32
  }
  func.func @transform_3(%arg0: i32) -> (i32, i32) {
    %c0_i32 = arith.constant 0 : i32
    %c0_i32_0 = arith.constant 0 : i32
    return %arg0, %c0_i32 : i32, i32
  }
}

module attributes {stable_mosaic.version = 11 : i64} {
  func.func @fusion_head_kernel(%arg0: i32, %arg1: memref<8x128xf32, #tpu.memory_space<vmem>>, %arg2: memref<8x128xf32, #tpu.memory_space<vmem>>, %arg3: memref<128x128xbf16, #tpu.memory_space<vmem>>, %arg4: memref<128x128xbf16, #tpu.memory_space<vmem>>, %arg5: memref<1x128xf32, #tpu.memory_space<vmem>>, %arg6: memref<8x128xf32, #tpu.memory_space<vmem>>) attributes {dimension_semantics = [#tpu.dimension_semantics<parallel>], iteration_bounds = array<i64: 1>, scalar_prefetch = 0 : i64, scratch_operands = 0 : i64, tpu.core_type = #tpu.core_type<tc>, window_params = [{transform_indices = @transform_0, window_bounds = array<i64: 8, 128>}, {transform_indices = @transform_1, window_bounds = array<i64: 8, 128>}, {pipeline_mode = #tpu.pipeline_mode<synchronous>, transform_indices = @transform_2, window_bounds = array<i64: 128, 128>}, {pipeline_mode = #tpu.pipeline_mode<synchronous>, transform_indices = @transform_3, window_bounds = array<i64: 128, 128>}, {pipeline_mode = #tpu.pipeline_mode<synchronous>, transform_indices = @transform_4, window_bounds = array<i64: 1, 128>}, {transform_indices = @transform_5, window_bounds = array<i64: 8, 128>}]} {
    %c0 = arith.constant 0 : index
    %c0_0 = arith.constant 0 : index
    %0 = vector.load %arg1[%c0, %c0_0] : memref<8x128xf32, #tpu.memory_space<vmem>>, vector<8x128xf32>
    %c0_1 = arith.constant 0 : index
    %c0_2 = arith.constant 0 : index
    %1 = vector.load %arg2[%c0_1, %c0_2] : memref<8x128xf32, #tpu.memory_space<vmem>>, vector<8x128xf32>
    %2 = arith.mulf %0, %0 : vector<8x128xf32>
    %cst = arith.constant dense<0.000000e+00> : vector<8xf32>
    %3 = vector.multi_reduction <add>, %2, %cst [1] : vector<8x128xf32> to vector<8xf32>
    %4 = vector.shape_cast %3 : vector<8xf32> to vector<8x1xf32>
    %cst_3 = arith.constant 1.000000e-24 : f32
    %5 = vector.broadcast %cst_3 : f32 to vector<8x1xf32>
    %6 = arith.maximumf %4, %5 : vector<8x1xf32>
    %7 = math.rsqrt %6 : vector<8x1xf32>
    %8 = vector.broadcast %7 : vector<8x1xf32> to vector<8x128xf32>
    %9 = arith.mulf %0, %8 : vector<8x128xf32>
    %10 = arith.mulf %1, %1 : vector<8x128xf32>
    %cst_4 = arith.constant dense<0.000000e+00> : vector<8xf32>
    %11 = vector.multi_reduction <add>, %10, %cst_4 [1] : vector<8x128xf32> to vector<8xf32>
    %12 = vector.shape_cast %11 : vector<8xf32> to vector<8x1xf32>
    %cst_5 = arith.constant 1.000000e-24 : f32
    %13 = vector.broadcast %cst_5 : f32 to vector<8x1xf32>
    %14 = arith.maximumf %12, %13 : vector<8x1xf32>
    %15 = math.rsqrt %14 : vector<8x1xf32>
    %16 = vector.broadcast %15 : vector<8x1xf32> to vector<8x128xf32>
    %17 = arith.mulf %1, %16 : vector<8x128xf32>
    %18 = arith.truncf %9 : vector<8x128xf32> to vector<8x128xbf16>
    %c0_6 = arith.constant 0 : index
    %c0_7 = arith.constant 0 : index
    %19 = vector.load %arg3[%c0_6, %c0_7] : memref<128x128xbf16, #tpu.memory_space<vmem>>, vector<128x128xbf16>
    %cst_8 = arith.constant dense<0.000000e+00> : vector<8x128xf32>
    %20 = tpu.matmul %18, %19, %cst_8 {dimension_numbers = #tpu.dot_dimension_numbers<[1], [0], [0], [1], [0, 0, 1, 1], [], []>} : vector<8x128xbf16>, vector<128x128xbf16>, vector<8x128xf32> -> vector<8x128xf32>
    %21 = arith.truncf %17 : vector<8x128xf32> to vector<8x128xbf16>
    %c0_9 = arith.constant 0 : index
    %c0_10 = arith.constant 0 : index
    %22 = vector.load %arg4[%c0_9, %c0_10] : memref<128x128xbf16, #tpu.memory_space<vmem>>, vector<128x128xbf16>
    %cst_11 = arith.constant dense<0.000000e+00> : vector<8x128xf32>
    %23 = tpu.matmul %21, %22, %cst_11 {dimension_numbers = #tpu.dot_dimension_numbers<[1], [0], [0], [1], [0, 0, 1, 1], [], []>} : vector<8x128xbf16>, vector<128x128xbf16>, vector<8x128xf32> -> vector<8x128xf32>
    %24 = arith.addf %20, %23 : vector<8x128xf32>
    %c0_12 = arith.constant 0 : index
    %c0_13 = arith.constant 0 : index
    %25 = vector.load %arg5[%c0_12, %c0_13] : memref<1x128xf32, #tpu.memory_space<vmem>>, vector<1x128xf32>
    %26 = vector.broadcast %25 : vector<1x128xf32> to vector<8x128xf32>
    %27 = arith.addf %24, %26 : vector<8x128xf32>
    %c0_14 = arith.constant 0 : index
    %c0_15 = arith.constant 0 : index
    %28 = vector.load %arg6[%c0_14, %c0_15] : memref<8x128xf32, #tpu.memory_space<vmem>>, vector<8x128xf32>
    tpu.vector_store %arg6[%c0_14, %c0_15], %27 {strides = array<i32>} : memref<8x128xf32, #tpu.memory_space<vmem>>, vector<8x128xf32>,
    return
  }
  func.func @transform_0(%arg0: i32) -> (i32, i32) {
    %c0_i32 = arith.constant 0 : i32
    %c0_i32_0 = arith.constant 0 : i32
    return %arg0, %c0_i32 : i32, i32
  }
  func.func @transform_1(%arg0: i32) -> (i32, i32) {
    %c0_i32 = arith.constant 0 : i32
    %c0_i32_0 = arith.constant 0 : i32
    return %arg0, %c0_i32 : i32, i32
  }
  func.func @transform_2(%arg0: i32) -> (i32, i32) {
    %c0_i32 = arith.constant 0 : i32
    %c0_i32_0 = arith.constant 0 : i32
    %c0_i32_1 = arith.constant 0 : i32
    return %c0_i32, %c0_i32_0 : i32, i32
  }
  func.func @transform_3(%arg0: i32) -> (i32, i32) {
    %c0_i32 = arith.constant 0 : i32
    %c0_i32_0 = arith.constant 0 : i32
    %c0_i32_1 = arith.constant 0 : i32
    return %c0_i32, %c0_i32_0 : i32, i32
  }
  func.func @transform_4(%arg0: i32) -> (i32, i32) {
    %c0_i32 = arith.constant 0 : i32
    %c0_i32_0 = arith.constant 0 : i32
    %c0_i32_1 = arith.constant 0 : i32
    return %c0_i32, %c0_i32_0 : i32, i32
  }
  func.func @transform_5(%arg0: i32) -> (i32, i32) {
    %c0_i32 = arith.constant 0 : i32
    %c0_i32_0 = arith.constant 0 : i32
    return %arg0, %c0_i32 : i32, i32
  }
}

</mosaic_0001>

<llo_original>
// kernel: _lambda_.15
$region0: #{_lambda_.15}
  #allocation0 [shape = 'u32[]', space=smem, size = 0x4, offset = 0x4, fixed_abs, tag = 'smem constant byte address 0x4 - core index']
  #allocation1 [shape = 'u32[144,128]{1,0:T(1,128)}', space=vmem, size = 0x12000, scoped, tag = 'internal scratch']
  %s0 = inlined_call_operand.vmem [shape: bf16[1024,27], index: 0, kind: input, shape index: {}]
  %s1 = inlined_call_operand.vmem [shape: bf16[27,128], index: 1, kind: input, shape index: {}]
  %s2 = inlined_call_operand.vmem [shape: f32[1,128], index: 2, kind: input, shape index: {}]
  %s3 = inlined_call_operand.vmem [shape: bf16[1024,128], index: 3, kind: output, shape index: {}]
  %s4 = sld [smem:[#allocation0]]
  $region45: #{_lambda_.15} parent=0
    _
  %s6 = ssub.s32 1, %s4
  %s7 = scalar_select 0, %s6, %s4
  loop: start=0, step=1, limit=6
  $region2: #{_lambda_.15} parent=0 // loop_pre_header
    _
  $region3: #{_lambda_.15} parent=0 // loop_header
    %s9 = sphi 0, %s13
    %p10 = scmp.ge.s32.totalorder %s9, 6
    %s19 = sphi 0, %s21
    %s22 = sphi 0, %s19
    %s23 = sphi 0, %s22
    %s39 = sphi 0, %s23
    %s43 = sphi 0, %s43
    %s45 = sphi 0, %s43
    %s46 = sphi 0, %s45
    %s60 = sphi 0, %s46
    %s64 = sphi 0, %s64
    %s66 = sphi 0, %s64
    %s67 = sphi 0, %s66
    %s81 = sphi 0, %s67
    %s87 = sphi 0, %s89
    %s90 = sphi 0, %s87
    %s91 = sphi 0, %s90
    %s107 = sphi 0, %s91
  $region4: #{_lambda_.15} parent=0 // loop_header_branch
    %12 = sbr.rel (%p10) target = $region8
  $region5: #{_lambda_.15} parent=0 // loop_body
    %s14 = ssub.s32 %s9, 1
    %s15 = ssub.s32 %s9, 2
    %s16 = sadd.s32 %s9, 1
    %s17 = ssub.s32 %s9, %s16
    %p18 = scmp.eq.s32.totalorder %s17, 0
    %s20 = sadd.s32 %s19, 1
    %s21 = scalar_select %p18, %s19, %s20
    %p24 = pneg %p18
    %p25 = scmp.eq.s32.totalorder %s9, 3
    %p26 = por %p24, %p25
    %p27 = scmp.ne.s32.totalorder %s19, %s22
    %p28 = scmp.eq.s32.totalorder %s9, 0
    %p29 = por %p27, %p28
    %p30 = scmp.ne.s32.totalorder %s19, %s22
    %p31 = scmp.eq.s32.totalorder %s14, 3
    %p32 = por %p30, %p31
    %p33 = scmp.ne.s32.totalorder %s22, %s23
    %p34 = scmp.eq.s32.totalorder %s14, 0
    %p35 = por %p33, %p34
    %p36 = scmp.ne.s32.totalorder %s22, %s23
    %p37 = scmp.eq.s32.totalorder %s15, 3
    %p38 = por %p36, %p37
    %p40 = scmp.ne.s32.totalorder %s23, %s39
    %p41 = scmp.eq.s32.totalorder %s15, 0
    %p42 = por %p40, %p41
    %s44 = sadd.s32 %s43, 1
    %p47 = scmp.eq.s32.totalorder %s9, 3
    %p48 = scmp.ne.s32.totalorder %s43, %s45
    %p49 = scmp.eq.s32.totalorder %s9, 0
    %p50 = por %p48, %p49
    %p51 = scmp.ne.s32.totalorder %s43, %s45
    %p52 = scmp.eq.s32.totalorder %s14, 3
    %p53 = por %p51, %p52
    %p54 = scmp.ne.s32.totalorder %s45, %s46
    %p55 = scmp.eq.s32.totalorder %s14, 0
    %p56 = por %p54, %p55
    %p57 = scmp.ne.s32.totalorder %s45, %s46
    %p58 = scmp.eq.s32.totalorder %s15, 3
    %p59 = por %p57, %p58
    %p61 = scmp.ne.s32.totalorder %s46, %s60
    %p62 = scmp.eq.s32.totalorder %s15, 0
    %p63 = por %p61, %p62
    %s65 = sadd.s32 %s64, 1
    %p68 = scmp.eq.s32.totalorder %s9, 3
    %p69 = scmp.ne.s32.totalorder %s64, %s66
    %p70 = scmp.eq.s32.totalorder %s9, 0
    %p71 = por %p69, %p70
    %p72 = scmp.ne.s32.totalorder %s64, %s66
    %p73 = scmp.eq.s32.totalorder %s14, 3
    %p74 = por %p72, %p73
    %p75 = scmp.ne.s32.totalorder %s66, %s67
    %p76 = scmp.eq.s32.totalorder %s14, 0
    %p77 = por %p75, %p76
    %p78 = scmp.ne.s32.totalorder %s66, %s67
    %p79 = scmp.eq.s32.totalorder %s15, 3
    %p80 = por %p78, %p79
    %p82 = scmp.ne.s32.totalorder %s67, %s81
    %p83 = scmp.eq.s32.totalorder %s15, 0
    %p84 = por %p82, %p83
    %s85 = ssub.s32 %s9, %s16
    %p86 = scmp.eq.s32.totalorder %s85, 0
    %s88 = sadd.s32 %s87, 1
    %s89 = scalar_select %p86, %s87, %s88
    %p92 = pneg %p86
    %p93 = scmp.eq.s32.totalorder %s9, 3
    %p94 = por %p92, %p93
    %p95 = scmp.ne.s32.totalorder %s87, %s90
    %p96 = scmp.eq.s32.totalorder %s9, 0
    %p97 = por %p95, %p96
    %p98 = scmp.ne.s32.totalorder %s87, %s90
    %p99 = scmp.eq.s32.totalorder %s14, 3
    %p100 = por %p98, %p99
    %p101 = scmp.ne.s32.totalorder %s90, %s91
    %p102 = scmp.eq.s32.totalorder %s14, 0
    %p103 = por %p101, %p102
    %p104 = scmp.ne.s32.totalorder %s90, %s91
    %p105 = scmp.eq.s32.totalorder %s15, 3
    %p106 = por %p104, %p105
    %p108 = scmp.ne.s32.totalorder %s91, %s107
    %p109 = scmp.eq.s32.totalorder %s15, 0
    %p110 = por %p108, %p109
    %p111 = scmp.le.s32.totalorder 1, %s9
    %p112 = scmp.lt.s32.totalorder %s9, 5
    %p113 = pnand %p111, %p112
    %p114 = pneg %p113
    // Predicated region
    $region9: #{_lambda_.15} parent=5 // pred_check
      _
    $region10: #{_lambda_.15} parent=5 // pred_check_branch
      %116 = sbr.rel (%p113) target = $region12
    $region11: #{_lambda_.15} parent=5 // pred_region
      %s117 = ssub.s32 %s9, 1
      // Predicated region
      $region13: #{_lambda_.15} parent=11 // pred_check
        %p118 = pneg %p56
      $region14: #{_lambda_.15} parent=11 // pred_check_branch
        %120 = sbr.rel (%p118) target = $region16
      $region15: #{_lambda_.15} parent=11 // pred_region
        _
      $region16: #{_lambda_.15} parent=11 // pred_fallthru
        _
      // Predicated region
      $region17: #{_lambda_.15} parent=11 // pred_check
        %p121 = pneg %p77
      $region18: #{_lambda_.15} parent=11 // pred_check_branch
        %123 = sbr.rel (%p121) target = $region20
      $region19: #{_lambda_.15} parent=11 // pred_region
        _
      $region20: #{_lambda_.15} parent=11 // pred_fallthru
        _
    $region12: #{_lambda_.15} parent=5 // pred_fallthru
      _
    %p124 = scmp.lt.s32.totalorder %s9, 4
    // Predicated region
    $region21: #{_lambda_.15} parent=5 // pred_check
      %p125 = pneg %p124
    $region22: #{_lambda_.15} parent=5 // pred_check_branch
      %127 = sbr.rel (%p125) target = $region24
    $region23: #{_lambda_.15} parent=5 // pred_region
      // Predicated region
      $region25: #{_lambda_.15} parent=23 // pred_check
        %p128 = pneg %p29
      $region26: #{_lambda_.15} parent=23 // pred_check_branch
        %130 = sbr.rel (%p128) target = $region28
      $region27: #{_lambda_.15} parent=23 // pred_region
        %s131 = smul.u32 32, %s9
        %p132 = scmp.lt.s32.totalorder %s131, 127
        %s133 = scalar_select %p132, %s131, 127
        %s134 = smul.addr %s133, 4
        %s135 = scalar_lea.vmem %s0, %s134
        %s136 = smul.u32 32, %s9
      $region28: #{_lambda_.15} parent=23 // pred_fallthru
        _
    $region24: #{_lambda_.15} parent=5 // pred_fallthru
      _
    %p137 = scmp.le.s32.totalorder 1, %s9
    %p138 = scmp.lt.s32.totalorder %s9, 5
    %p139 = pnand %p137, %p138
    %p140 = pneg %p139
    // Predicated region
    $region29: #{_lambda_.15} parent=5 // pred_check
      _
    $region30: #{_lambda_.15} parent=5 // pred_check_branch
      %142 = sbr.rel (%p139) target = $region32
    $region31: #{_lambda_.15} parent=5 // pred_region
      %s143 = ssub.s32 %s9, 1
      %s144 = smul.u32 32, %s14
      %p145 = scmp.lt.s32.totalorder %s144, 127
      %s146 = scalar_select %p145, %s144, 127
      %s147 = smul.addr %s146, 4
      %s148 = scalar_lea.vmem %s0, %s147
      %p149 = pneg %p35
      %p150 = pneg %p32
      %p151 = pneg %p56
      %p152 = pneg %p53
      %p153 = pneg %p77
      %p154 = pneg %p74
      %p155 = pneg %p103
      %p156 = pneg %p100
      %s157 = smul.u32 32, %s14
      %p158 = scmp.lt.s32.totalorder %s157, 127
      %s159 = scalar_select %p158, %s157, 127
      %s160 = smul.addr %s159, 4
      %s161 = scalar_lea.vmem %s3, %s160
      %s162 = smul.u32 32, %s14
      %p163 = scmp.lt.s32.totalorder %s162, 127
      %s164 = scalar_select %p163, %s162, 127
      %s165 = smul.addr %s164, 4
      %s166 = scalar_lea.vmem %s0, %s165
      %s167 = smul.u32 32, %s14
      %s168 = smul.u32 32, %s14
      %p169 = scmp.lt.s32.totalorder %s168, 127
      %s170 = scalar_select %p169, %s168, 127
      %s171 = smul.addr %s170, 4
      %s172 = scalar_lea.vmem %s3, %s171
      %s173 = smul.u32 32, %s14
      %v175 = vld [vmem:[%s166] sm:$0xf]
      %v176 = vld [vmem:[%s166 + $0x4] sm:$0xf]
      %v177 = vld [vmem:[%s166 + $0x8] sm:$0xf]
      %v178 = vld [vmem:[%s166 + $0xc] sm:$0xf]
      %v179 = vld [vmem:[%s166 + $0x10] sm:$0xf]
      %v180 = vld [vmem:[%s166 + $0x14] sm:$0xf]
      %v181 = vld [vmem:[%s166 + $0x18] sm:$0xf]
      %v182 = vld [vmem:[%s166 + $0x1c] sm:$0xf]
      %v183 = vld [vmem:[%s166 + $0x20] sm:$0xf]
      %v184 = vld [vmem:[%s166 + $0x24] sm:$0xf]
      %v185 = vld [vmem:[%s166 + $0x28] sm:$0xf]
      %v186 = vld [vmem:[%s166 + $0x2c] sm:$0xf]
      %v187 = vld [vmem:[%s166 + $0x30] sm:$0xf]
      %v188 = vld [vmem:[%s166 + $0x34] sm:$0xf]
      %v189 = vld [vmem:[%s166 + $0x38] sm:$0xf]
      %v190 = vld [vmem:[%s166 + $0x3c] sm:$0xf]
      %v191 = vld [vmem:[%s166 + $0x40] sm:$0xf]
      %v192 = vld [vmem:[%s166 + $0x44] sm:$0xf]
      %v193 = vld [vmem:[%s166 + $0x48] sm:$0xf]
      %v194 = vld [vmem:[%s166 + $0x4c] sm:$0xf]
      %v195 = vld [vmem:[%s166 + $0x50] sm:$0xf]
      %v196 = vld [vmem:[%s166 + $0x54] sm:$0xf]
      %v197 = vld [vmem:[%s166 + $0x58] sm:$0xf]
      %v198 = vld [vmem:[%s166 + $0x5c] sm:$0xf]
      %v199 = vld [vmem:[%s166 + $0x60] sm:$0xf]
      %v200 = vld [vmem:[%s166 + $0x64] sm:$0xf]
      %v201 = vld [vmem:[%s166 + $0x68] sm:$0xf]
      %v202 = vld [vmem:[%s166 + $0x6c] sm:$0xf]
      %v203 = vld [vmem:[%s166 + $0x70] sm:$0xf]
      %v204 = vld [vmem:[%s166 + $0x74] sm:$0xf]
      %v205 = vld [vmem:[%s166 + $0x78] sm:$0xf]
      %v206 = vld [vmem:[%s166 + $0x7c] sm:$0xf]
      %v207 = vld [vmem:[%s1] sm:$0xf]
      %v208 = vld [vmem:[%s1 + $0x4] sm:$0xf]
      %v209 = vld [vmem:[%s1 + $0x8] sm:$0xf]
      %v210 = vld [vmem:[%s1 + $0xc] sm:$0x3]
      %v211 = vld [vmem:[%s2] sm:$0x1]
      %v213 = vlaneseq
      %v214 = vshrl.u32 %v213, 7
      %v215 = vsub.s32 0, %v214
      %v216 = vrot.slane %v211, %v215
      %v250 = vunpack.c.l.b16 %v175
      %v251 = vunpack.c.l.b16 %v176
      %v252 = vunpack.c.l.b16 %v177
      %v253 = vunpack.c.l.b16 %v178
      %v254 = vunpack.c.l.b16 %v179
      %v255 = vunpack.c.l.b16 %v180
      %v256 = vunpack.c.l.b16 %v181
      %v257 = vunpack.c.l.b16 %v182
      %v258 = vunpack.c.l.b16 %v183
      %v259 = vunpack.c.l.b16 %v184
      %v260 = vunpack.c.l.b16 %v185
      %v261 = vunpack.c.l.b16 %v186
      %v262 = vunpack.c.l.b16 %v187
      %v263 = vunpack.c.l.b16 %v188
      %v264 = vunpack.c.l.b16 %v189
      %v265 = vunpack.c.l.b16 %v190
      %v266 = vunpack.c.l.b16 %v191
      %v267 = vunpack.c.l.b16 %v192
      %v268 = vunpack.c.l.b16 %v193
      %v269 = vunpack.c.l.b16 %v194
      %v270 = vunpack.c.l.b16 %v195
      %v271 = vunpack.c.l.b16 %v196
      %v272 = vunpack.c.l.b16 %v197
      %v273 = vunpack.c.l.b16 %v198
      %v274 = vunpack.c.l.b16 %v199
      %v275 = vunpack.c.l.b16 %v200
      %v276 = vunpack.c.l.b16 %v201
      %v277 = vunpack.c.l.b16 %v202
      %v278 = vunpack.c.l.b16 %v203
      %v279 = vunpack.c.l.b16 %v204
      %v280 = vunpack.c.l.b16 %v205
      %v281 = vunpack.c.l.b16 %v206
      %v282 = vpack.c.b16 %v251, %v250
      %v283 = vpack.c.b16 %v253, %v252
      %v284 = vpack.c.b16 %v255, %v254
      %v285 = vpack.c.b16 %v257, %v256
      %v286 = vpack.c.b16 %v259, %v258
      %v287 = vpack.c.b16 %v261, %v260
      %v288 = vpack.c.b16 %v263, %v262
      %v289 = vpack.c.b16 %v265, %v264
      %v290 = vpack.c.b16 %v267, %v266
      %v291 = vpack.c.b16 %v269, %v268
      %v292 = vpack.c.b16 %v271, %v270
      %v293 = vpack.c.b16 %v273, %v272
      %v294 = vpack.c.b16 %v275, %v274
      %v295 = vpack.c.b16 %v277, %v276
      %v296 = vpack.c.b16 %v279, %v278
      %v297 = vpack.c.b16 %v281, %v280
      %v302 = vunpack.c.l.b16 %v207
      %v303 = vunpack.c.l.b16 %v208
      %v304 = vunpack.c.l.b16 %v209
      %v305 = vunpack.c.l.b16 %v210
      %v306 = vpack.c.b16 %v303, %v302
      %v307 = vpack.c.b16 %v305, %v304
      %vm309 = vcmask 220160
      %v311 = vsel %vm309, %v282, 0
      %v314 = vsel %vm309, %v283, 0
      %v317 = vsel %vm309, %v284, 0
      %v320 = vsel %vm309, %v285, 0
      %v323 = vsel %vm309, %v286, 0
      %v326 = vsel %vm309, %v287, 0
      %v329 = vsel %vm309, %v288, 0
      %v332 = vsel %vm309, %v289, 0
      %v335 = vsel %vm309, %v290, 0
      %v338 = vsel %vm309, %v291, 0
      %v341 = vsel %vm309, %v292, 0
      %v344 = vsel %vm309, %v293, 0
      %v347 = vsel %vm309, %v294, 0
      %v350 = vsel %vm309, %v295, 0
      %v353 = vsel %vm309, %v296, 0
      %v356 = vsel %vm309, %v297, 0
      %vm358 = vcmask 1044480
      %vm359 = vcmask 1045504
      %v360 = vsel %vm358, 4294967295, 65535
      %v361 = vsel %vm359, %v360, 0
      %v363 = vand.u32 %v307, %v361
      %365 = vmatprep.subr.bf16.mxu0 0
      %366 = vmatpush1.bf16.msra.mxu0 0
      %367 = vmatprep.subr.bf16.mxu0 0
      %368 = vmatpush1.bf16.msra.mxu0 0
      %369 = vmatprep.subr.bf16.mxu0 0
      %370 = vmatpush1.bf16.msra.mxu0 0
      %371 = vmatprep.subr.bf16.mxu0 0
      %372 = vmatpush1.bf16.msra.mxu0 0
      %373 = vmatprep.subr.bf16.mxu0 0
      %374 = vmatpush1.bf16.msra.mxu0 0
      %375 = vmatprep.subr.bf16.mxu0 0
      %376 = vmatpush1.bf16.msra.mxu0 0
      %377 = vmatprep.subr.bf16.mxu0 0
      %378 = vmatpush1.bf16.msra.mxu0 %v363
      %379 = vmatprep.subr.bf16.mxu0 0
      %380 = vmatpush1.bf16.msra.mxu0 %v306
      %381 = vmatprep.subr.bf16.mxu0 0
      %382 = vmatpush2.bf16.msra.mxu0 0
      %383 = vmatprep.subr.bf16.mxu0 0
      %384 = vmatpush2.bf16.msra.mxu0 0
      %385 = vmatprep.subr.bf16.mxu0 0
      %386 = vmatpush2.bf16.msra.mxu0 0
      %387 = vmatprep.subr.bf16.mxu0 0
      %388 = vmatpush2.bf16.msra.mxu0 0
      %389 = vmatprep.subr.bf16.mxu0 0
      %390 = vmatpush2.bf16.msra.mxu0 0
      %391 = vmatprep.subr.bf16.mxu0 0
      %392 = vmatpush2.bf16.msra.mxu0 0
      %393 = vmatprep.subr.bf16.mxu0 0
      %394 = vmatpush2.bf16.msra.mxu0 0
      %395 = vmatprep.subr.bf16.mxu0 0
      %396 = vmatpush2.bf16.msra.mxu0 0
      %397 = vmatprep.mubr.bf16.mxu0 0
      %398 = vmatmul.mubr.bf16.gmra.mxu0 %v311
      %v399 = vpop.f32.mrf.mxu0
      %v400 = vadd.f32 %v216, %v399
      %v401 = vpop.f32.mrf.mxu0
      %v402 = vpop.f32.mrf.mxu0
      %v403 = vadd.f32 %v216, %v402
      %v404 = vpop.f32.mrf.mxu0
      %405 = vmatprep.mubr.bf16.mxu0 0
      %406 = vmatmul.mubr.bf16.gmra.mxu0 %v314
      %v407 = vpop.f32.mrf.mxu0
      %v408 = vadd.f32 %v216, %v407
      %v409 = vpop.f32.mrf.mxu0
      %v410 = vpop.f32.mrf.mxu0
      %v411 = vadd.f32 %v216, %v410
      %v412 = vpop.f32.mrf.mxu0
      %413 = vmatprep.mubr.bf16.mxu0 0
      %414 = vmatmul.mubr.bf16.gmra.mxu0 %v317
      %v415 = vpop.f32.mrf.mxu0
      %v416 = vadd.f32 %v216, %v415
      %v417 = vpop.f32.mrf.mxu0
      %v418 = vpop.f32.mrf.mxu0
      %v419 = vadd.f32 %v216, %v418
      %v420 = vpop.f32.mrf.mxu0
      %421 = vmatprep.mubr.bf16.mxu0 0
      %422 = vmatmul.mubr.bf16.gmra.mxu0 %v320
      %v423 = vpop.f32.mrf.mxu0
      %v424 = vadd.f32 %v216, %v423
      %v425 = vpop.f32.mrf.mxu0
      %v426 = vpop.f32.mrf.mxu0
      %v427 = vadd.f32 %v216, %v426
      %v428 = vpop.f32.mrf.mxu0
      %429 = vmatprep.mubr.bf16.mxu0 0
      %430 = vmatmul.mubr.bf16.gmra.mxu0 %v323
      %v431 = vpop.f32.mrf.mxu0
      %v432 = vadd.f32 %v216, %v431
      %v433 = vpop.f32.mrf.mxu0
      %v434 = vpop.f32.mrf.mxu0
      %v435 = vadd.f32 %v216, %v434
      %v436 = vpop.f32.mrf.mxu0
      %437 = vmatprep.mubr.bf16.mxu0 0
      %438 = vmatmul.mubr.bf16.gmra.mxu0 %v326
      %v439 = vpop.f32.mrf.mxu0
      %v440 = vadd.f32 %v216, %v439
      %v441 = vpop.f32.mrf.mxu0
      %v442 = vpop.f32.mrf.mxu0
      %v443 = vadd.f32 %v216, %v442
      %v444 = vpop.f32.mrf.mxu0
      %445 = vmatprep.mubr.bf16.mxu0 0
      %446 = vmatmul.mubr.bf16.gmra.mxu0 %v329
      %v447 = vpop.f32.mrf.mxu0
      %v448 = vadd.f32 %v216, %v447
      %v449 = vpop.f32.mrf.mxu0
      %v450 = vpop.f32.mrf.mxu0
      %v451 = vadd.f32 %v216, %v450
      %v452 = vpop.f32.mrf.mxu0
      %453 = vmatprep.mubr.bf16.mxu0 0
      %454 = vmatmul.mubr.bf16.gmra.mxu0 %v332
      %v455 = vpop.f32.mrf.mxu0
      %v456 = vadd.f32 %v216, %v455
      %v457 = vpop.f32.mrf.mxu0
      %v458 = vpop.f32.mrf.mxu0
      %v459 = vadd.f32 %v216, %v458
      %v460 = vpop.f32.mrf.mxu0
      %461 = vmatprep.mubr.bf16.mxu0 0
      %462 = vmatmul.mubr.bf16.gmra.mxu0 %v335
      %v463 = vpop.f32.mrf.mxu0
      %v464 = vadd.f32 %v216, %v463
      %v465 = vpop.f32.mrf.mxu0
      %v466 = vpop.f32.mrf.mxu0
      %v467 = vadd.f32 %v216, %v466
      %v468 = vpop.f32.mrf.mxu0
      %469 = vmatprep.mubr.bf16.mxu0 0
      %470 = vmatmul.mubr.bf16.gmra.mxu0 %v338
      %v471 = vpop.f32.mrf.mxu0
      %v472 = vadd.f32 %v216, %v471
      %v473 = vpop.f32.mrf.mxu0
      %v474 = vpop.f32.mrf.mxu0
      %v475 = vadd.f32 %v216, %v474
      %v476 = vpop.f32.mrf.mxu0
      %477 = vmatprep.mubr.bf16.mxu0 0
      %478 = vmatmul.mubr.bf16.gmra.mxu0 %v341
      %v479 = vpop.f32.mrf.mxu0
      %v480 = vadd.f32 %v216, %v479
      %v481 = vpop.f32.mrf.mxu0
      %v482 = vpop.f32.mrf.mxu0
      %v483 = vadd.f32 %v216, %v482
      %v484 = vpop.f32.mrf.mxu0
      %485 = vmatprep.mubr.bf16.mxu0 0
      %486 = vmatmul.mubr.bf16.gmra.mxu0 %v344
      %v487 = vpop.f32.mrf.mxu0
      %v488 = vadd.f32 %v216, %v487
      %v489 = vpop.f32.mrf.mxu0
      %v490 = vpop.f32.mrf.mxu0
      %v491 = vadd.f32 %v216, %v490
      %v492 = vpop.f32.mrf.mxu0
      %493 = vmatprep.mubr.bf16.mxu0 0
      %494 = vmatmul.mubr.bf16.gmra.mxu0 %v347
      %v495 = vpop.f32.mrf.mxu0
      %v496 = vadd.f32 %v216, %v495
      %v497 = vpop.f32.mrf.mxu0
      %v498 = vpop.f32.mrf.mxu0
      %v499 = vadd.f32 %v216, %v498
      %v500 = vpop.f32.mrf.mxu0
      %501 = vmatprep.mubr.bf16.mxu0 0
      %502 = vmatmul.mubr.bf16.gmra.mxu0 %v350
      %v503 = vpop.f32.mrf.mxu0
      %v504 = vadd.f32 %v216, %v503
      %v505 = vpop.f32.mrf.mxu0
      %v506 = vpop.f32.mrf.mxu0
      %v507 = vadd.f32 %v216, %v506
      %v508 = vpop.f32.mrf.mxu0
      %509 = vmatprep.mubr.bf16.mxu0 0
      %510 = vmatmul.mubr.bf16.gmra.mxu0 %v353
      %v511 = vpop.f32.mrf.mxu0
      %v512 = vadd.f32 %v216, %v511
      %v513 = vpop.f32.mrf.mxu0
      %v514 = vpop.f32.mrf.mxu0
      %v515 = vadd.f32 %v216, %v514
      %v516 = vpop.f32.mrf.mxu0
      %517 = vmatprep.mubr.bf16.mxu0 0
      %518 = vmatmul.mubr.bf16.gmra.mxu0 %v356
      %v519 = vpop.f32.mrf.mxu0
      %v520 = vadd.f32 %v216, %v519
      %v521 = vpop.f32.mrf.mxu0
      %v522 = vpop.f32.mrf.mxu0
      %v523 = vadd.f32 %v216, %v522
      %v524 = vpop.f32.mrf.mxu0
      %525 = vdwg.mxu0
      %v526 = vmax.f32 %v400, 0.0
      %v527 = vmax.f32 %v403, 0.0
      %v528 = vmax.f32 %v408, 0.0
      %v529 = vmax.f32 %v411, 0.0
      %v530 = vmax.f32 %v416, 0.0
      %v531 = vmax.f32 %v419, 0.0
      %v532 = vmax.f32 %v424, 0.0
      %v533 = vmax.f32 %v427, 0.0
      %v534 = vmax.f32 %v432, 0.0
      %v535 = vmax.f32 %v435, 0.0
      %v536 = vmax.f32 %v440, 0.0
      %v537 = vmax.f32 %v443, 0.0
      %v538 = vmax.f32 %v448, 0.0
      %v539 = vmax.f32 %v451, 0.0
      %v540 = vmax.f32 %v456, 0.0
      %v541 = vmax.f32 %v459, 0.0
      %v542 = vmax.f32 %v464, 0.0
      %v543 = vmax.f32 %v467, 0.0
      %v544 = vmax.f32 %v472, 0.0
      %v545 = vmax.f32 %v475, 0.0
      %v546 = vmax.f32 %v480, 0.0
      %v547 = vmax.f32 %v483, 0.0
      %v548 = vmax.f32 %v488, 0.0
      %v549 = vmax.f32 %v491, 0.0
      %v550 = vmax.f32 %v496, 0.0
      %v551 = vmax.f32 %v499, 0.0
      %v552 = vmax.f32 %v504, 0.0
      %v553 = vmax.f32 %v507, 0.0
      %v554 = vmax.f32 %v512, 0.0
      %v555 = vmax.f32 %v515, 0.0
      %v556 = vmax.f32 %v520, 0.0
      %v557 = vmax.f32 %v523, 0.0
      %v558 = vpack.c.bf16 %v527, %v526
      %v559 = vpack.c.bf16 %v529, %v528
      %v560 = vpack.c.bf16 %v531, %v530
      %v561 = vpack.c.bf16 %v533, %v532
      %v562 = vpack.c.bf16 %v535, %v534
      %v563 = vpack.c.bf16 %v537, %v536
      %v564 = vpack.c.bf16 %v539, %v538
      %v565 = vpack.c.bf16 %v541, %v540
      %v566 = vpack.c.bf16 %v543, %v542
      %v567 = vpack.c.bf16 %v545, %v544
      %v568 = vpack.c.bf16 %v547, %v546
      %v569 = vpack.c.bf16 %v549, %v548
      %v570 = vpack.c.bf16 %v551, %v550
      %v571 = vpack.c.bf16 %v553, %v552
      %v572 = vpack.c.bf16 %v555, %v554
      %v573 = vpack.c.bf16 %v557, %v556
      %v590 = vunpack.c.l.b16 %v558
      %v591 = vunpack.c.h.b16 %v558
      %v592 = vunpack.c.l.b16 %v559
      %v593 = vunpack.c.h.b16 %v559
      %v594 = vunpack.c.l.b16 %v560
      %v595 = vunpack.c.h.b16 %v560
      %v596 = vunpack.c.l.b16 %v561
      %v597 = vunpack.c.h.b16 %v561
      %v598 = vunpack.c.l.b16 %v562
      %v599 = vunpack.c.h.b16 %v562
      %v600 = vunpack.c.l.b16 %v563
      %v601 = vunpack.c.h.b16 %v563
      %v602 = vunpack.c.l.b16 %v564
      %v603 = vunpack.c.h.b16 %v564
      %v604 = vunpack.c.l.b16 %v565
      %v605 = vunpack.c.h.b16 %v565
      %v606 = vunpack.c.l.b16 %v566
      %v607 = vunpack.c.h.b16 %v566
      %v608 = vunpack.c.l.b16 %v567
      %v609 = vunpack.c.h.b16 %v567
      %v610 = vunpack.c.l.b16 %v568
      %v611 = vunpack.c.h.b16 %v568
      %v612 = vunpack.c.l.b16 %v569
      %v613 = vunpack.c.h.b16 %v569
      %v614 = vunpack.c.l.b16 %v570
      %v615 = vunpack.c.h.b16 %v570
      %v616 = vunpack.c.l.b16 %v571
      %v617 = vunpack.c.h.b16 %v571
      %v618 = vunpack.c.l.b16 %v572
      %v619 = vunpack.c.h.b16 %v572
      %v620 = vunpack.c.l.b16 %v573
      %v621 = vunpack.c.h.b16 %v573
      %v622 = vpack.c.b16 %v590, %v590
      %v623 = vpack.c.b16 %v591, %v591
      %v624 = vpack.c.b16 %v592, %v592
      %v625 = vpack.c.b16 %v593, %v593
      %v626 = vpack.c.b16 %v594, %v594
      %v627 = vpack.c.b16 %v595, %v595
      %v628 = vpack.c.b16 %v596, %v596
      %v629 = vpack.c.b16 %v597, %v597
      %v630 = vpack.c.b16 %v598, %v598
      %v631 = vpack.c.b16 %v599, %v599
      %v632 = vpack.c.b16 %v600, %v600
      %v633 = vpack.c.b16 %v601, %v601
      %v634 = vpack.c.b16 %v602, %v602
      %v635 = vpack.c.b16 %v603, %v603
      %v636 = vpack.c.b16 %v604, %v604
      %v637 = vpack.c.b16 %v605, %v605
      %v638 = vpack.c.b16 %v606, %v606
      %v639 = vpack.c.b16 %v607, %v607
      %v640 = vpack.c.b16 %v608, %v608
      %v641 = vpack.c.b16 %v609, %v609
      %v642 = vpack.c.b16 %v610, %v610
      %v643 = vpack.c.b16 %v611, %v611
      %v644 = vpack.c.b16 %v612, %v612
      %v645 = vpack.c.b16 %v613, %v613
      %v646 = vpack.c.b16 %v614, %v614
      %v647 = vpack.c.b16 %v615, %v615
      %v648 = vpack.c.b16 %v616, %v616
      %v649 = vpack.c.b16 %v617, %v617
      %v650 = vpack.c.b16 %v618, %v618
      %v651 = vpack.c.b16 %v619, %v619
      %v652 = vpack.c.b16 %v620, %v620
      %v653 = vpack.c.b16 %v621, %v621
      %686 = vst [vmem:[%s172] sm:$0xf] %v622
      %687 = vst [vmem:[%s172 + $0x4] sm:$0xf] %v623
      %688 = vst [vmem:[%s172 + $0x8] sm:$0xf] %v624
      %689 = vst [vmem:[%s172 + $0xc] sm:$0xf] %v625
      %690 = vst [vmem:[%s172 + $0x10] sm:$0xf] %v626
      %691 = vst [vmem:[%s172 + $0x14] sm:$0xf] %v627
      %692 = vst [vmem:[%s172 + $0x18] sm:$0xf] %v628
      %693 = vst [vmem:[%s172 + $0x1c] sm:$0xf] %v629
      %694 = vst [vmem:[%s172 + $0x20] sm:$0xf] %v630
      %695 = vst [vmem:[%s172 + $0x24] sm:$0xf] %v631
      %696 = vst [vmem:[%s172 + $0x28] sm:$0xf] %v632
      %697 = vst [vmem:[%s172 + $0x2c] sm:$0xf] %v633
      %698 = vst [vmem:[%s172 + $0x30] sm:$0xf] %v634
      %699 = vst [vmem:[%s172 + $0x34] sm:$0xf] %v635
      %700 = vst [vmem:[%s172 + $0x38] sm:$0xf] %v636
      %701 = vst [vmem:[%s172 + $0x3c] sm:$0xf] %v637
      %702 = vst [vmem:[%s172 + $0x40] sm:$0xf] %v638
      %703 = vst [vmem:[%s172 + $0x44] sm:$0xf] %v639
      %704 = vst [vmem:[%s172 + $0x48] sm:$0xf] %v640
      %705 = vst [vmem:[%s172 + $0x4c] sm:$0xf] %v641
      %706 = vst [vmem:[%s172 + $0x50] sm:$0xf] %v642
      %707 = vst [vmem:[%s172 + $0x54] sm:$0xf] %v643
      %708 = vst [vmem:[%s172 + $0x58] sm:$0xf] %v644
      %709 = vst [vmem:[%s172 + $0x5c] sm:$0xf] %v645
      %710 = vst [vmem:[%s172 + $0x60] sm:$0xf] %v646
      %711 = vst [vmem:[%s172 + $0x64] sm:$0xf] %v647
      %712 = vst [vmem:[%s172 + $0x68] sm:$0xf] %v648
      %713 = vst [vmem:[%s172 + $0x6c] sm:$0xf] %v649
      %714 = vst [vmem:[%s172 + $0x70] sm:$0xf] %v650
      %715 = vst [vmem:[%s172 + $0x74] sm:$0xf] %v651
      %716 = vst [vmem:[%s172 + $0x78] sm:$0xf] %v652
      %717 = vst [vmem:[%s172 + $0x7c] sm:$0xf] %v653
      %s718 = smul.u32 32, %s14
      %p719 = scmp.lt.s32.totalorder %s718, 127
      %s720 = scalar_select %p719, %s718, 127
      %s721 = smul.addr %s720, 4
      %s722 = scalar_lea.vmem %s3, %s721
      // Predicated region
      $region33: #{_lambda_.15} parent=31 // pred_check
        %p723 = pneg %p100
      $region34: #{_lambda_.15} parent=31 // pred_check_branch
        %725 = sbr.rel (%p723) target = $region36
      $region35: #{_lambda_.15} parent=31 // pred_region
        %s726 = smul.u32 32, %s14
      $region36: #{_lambda_.15} parent=31 // pred_fallthru
        _
    $region32: #{_lambda_.15} parent=5 // pred_fallthru
      _
    %p727 = scmp.le.s32.totalorder 2, %s9
    // Predicated region
    $region37: #{_lambda_.15} parent=5 // pred_check
      %p728 = pneg %p727
    $region38: #{_lambda_.15} parent=5 // pred_check_branch
      %730 = sbr.rel (%p728) target = $region40
    $region39: #{_lambda_.15} parent=5 // pred_region
      %s731 = ssub.s32 %s9, 2
      // Predicated region
      $region41: #{_lambda_.15} parent=39 // pred_check
        %p732 = pneg %p106
      $region42: #{_lambda_.15} parent=39 // pred_check_branch
        %734 = sbr.rel (%p732) target = $region44
      $region43: #{_lambda_.15} parent=39 // pred_region
        %s735 = smul.u32 32, %s15
        %p736 = scmp.lt.s32.totalorder %s735, 127
        %s737 = scalar_select %p736, %s735, 127
        %s738 = smul.addr %s737, 4
        %s739 = scalar_lea.vmem %s3, %s738
      $region44: #{_lambda_.15} parent=39 // pred_fallthru
        _
    $region40: #{_lambda_.15} parent=5 // pred_fallthru
      _
  $region6: #{_lambda_.15} parent=0 // loop_footer
    %s13 = sadd.s32 1, %s9
  $region7: #{_lambda_.15} parent=0 // loop_footer_branch
    %8 = sbr.rel target = $region3
  $region8: #{_lambda_.15} parent=0 // loop_exit
    _

// kernel: _lambda_.16
$region0: #{_lambda_.16}
  #allocation0 [shape = 'u32[]', space=smem, size = 0x4, offset = 0x4, fixed_abs, tag = 'smem constant byte address 0x4 - core index']
  #allocation1 [shape = 'u32[144,128]{1,0:T(1,128)}', space=vmem, size = 0x12000, scoped, tag = 'internal scratch']
  %s0 = inlined_call_operand.vmem [shape: bf16[224,72], index: 0, kind: input, shape index: {}]
  %s1 = inlined_call_operand.vmem [shape: bf16[72,128], index: 1, kind: input, shape index: {}]
  %s2 = inlined_call_operand.vmem [shape: f32[1,128], index: 2, kind: input, shape index: {}]
  %s3 = inlined_call_operand.vmem [shape: bf16[224,128], index: 3, kind: output, shape index: {}]
  %s4 = sld [smem:[#allocation0]]
  $region45: #{_lambda_.16} parent=0
    _
  %s6 = ssub.s32 1, %s4
  %s7 = scalar_select 0, %s6, %s4
  loop: start=0, step=1, limit=4
  $region2: #{_lambda_.16} parent=0 // loop_pre_header
    _
  $region3: #{_lambda_.16} parent=0 // loop_header
    %s9 = sphi 0, %s13
    %p10 = scmp.ge.s32.totalorder %s9, 4
    %s19 = sphi 0, %s21
    %s22 = sphi 0, %s19
    %s23 = sphi 0, %s22
    %s39 = sphi 0, %s23
    %s43 = sphi 0, %s43
    %s45 = sphi 0, %s43
    %s46 = sphi 0, %s45
    %s60 = sphi 0, %s46
    %s64 = sphi 0, %s64
    %s66 = sphi 0, %s64
    %s67 = sphi 0, %s66
    %s81 = sphi 0, %s67
    %s87 = sphi 0, %s89
    %s90 = sphi 0, %s87
    %s91 = sphi 0, %s90
    %s107 = sphi 0, %s91
  $region4: #{_lambda_.16} parent=0 // loop_header_branch
    %12 = sbr.rel (%p10) target = $region8
  $region5: #{_lambda_.16} parent=0 // loop_body
    %s14 = ssub.s32 %s9, 1
    %s15 = ssub.s32 %s9, 2
    %s16 = sadd.s32 %s9, 1
    %s17 = ssub.s32 %s9, %s16
    %p18 = scmp.eq.s32.totalorder %s17, 0
    %s20 = sadd.s32 %s19, 1
    %s21 = scalar_select %p18, %s19, %s20
    %p24 = pneg %p18
    %p25 = scmp.eq.s32.totalorder %s9, 1
    %p26 = por %p24, %p25
    %p27 = scmp.ne.s32.totalorder %s19, %s22
    %p28 = scmp.eq.s32.totalorder %s9, 0
    %p29 = por %p27, %p28
    %p30 = scmp.ne.s32.totalorder %s19, %s22
    %p31 = scmp.eq.s32.totalorder %s14, 1
    %p32 = por %p30, %p31
    %p33 = scmp.ne.s32.totalorder %s22, %s23
    %p34 = scmp.eq.s32.totalorder %s14, 0
    %p35 = por %p33, %p34
    %p36 = scmp.ne.s32.totalorder %s22, %s23
    %p37 = scmp.eq.s32.totalorder %s15, 1
    %p38 = por %p36, %p37
    %p40 = scmp.ne.s32.totalorder %s23, %s39
    %p41 = scmp.eq.s32.totalorder %s15, 0
    %p42 = por %p40, %p41
    %s44 = sadd.s32 %s43, 1
    %p47 = scmp.eq.s32.totalorder %s9, 1
    %p48 = scmp.ne.s32.totalorder %s43, %s45
    %p49 = scmp.eq.s32.totalorder %s9, 0
    %p50 = por %p48, %p49
    %p51 = scmp.ne.s32.totalorder %s43, %s45
    %p52 = scmp.eq.s32.totalorder %s14, 1
    %p53 = por %p51, %p52
    %p54 = scmp.ne.s32.totalorder %s45, %s46
    %p55 = scmp.eq.s32.totalorder %s14, 0
    %p56 = por %p54, %p55
    %p57 = scmp.ne.s32.totalorder %s45, %s46
    %p58 = scmp.eq.s32.totalorder %s15, 1
    %p59 = por %p57, %p58
    %p61 = scmp.ne.s32.totalorder %s46, %s60
    %p62 = scmp.eq.s32.totalorder %s15, 0
    %p63 = por %p61, %p62
    %s65 = sadd.s32 %s64, 1
    %p68 = scmp.eq.s32.totalorder %s9, 1
    %p69 = scmp.ne.s32.totalorder %s64, %s66
    %p70 = scmp.eq.s32.totalorder %s9, 0
    %p71 = por %p69, %p70
    %p72 = scmp.ne.s32.totalorder %s64, %s66
    %p73 = scmp.eq.s32.totalorder %s14, 1
    %p74 = por %p72, %p73
    %p75 = scmp.ne.s32.totalorder %s66, %s67
    %p76 = scmp.eq.s32.totalorder %s14, 0
    %p77 = por %p75, %p76
    %p78 = scmp.ne.s32.totalorder %s66, %s67
    %p79 = scmp.eq.s32.totalorder %s15, 1
    %p80 = por %p78, %p79
    %p82 = scmp.ne.s32.totalorder %s67, %s81
    %p83 = scmp.eq.s32.totalorder %s15, 0
    %p84 = por %p82, %p83
    %s85 = ssub.s32 %s9, %s16
    %p86 = scmp.eq.s32.totalorder %s85, 0
    %s88 = sadd.s32 %s87, 1
    %s89 = scalar_select %p86, %s87, %s88
    %p92 = pneg %p86
    %p93 = scmp.eq.s32.totalorder %s9, 1
    %p94 = por %p92, %p93
    %p95 = scmp.ne.s32.totalorder %s87, %s90
    %p96 = scmp.eq.s32.totalorder %s9, 0
    %p97 = por %p95, %p96
    %p98 = scmp.ne.s32.totalorder %s87, %s90
    %p99 = scmp.eq.s32.totalorder %s14, 1
    %p100 = por %p98, %p99
    %p101 = scmp.ne.s32.totalorder %s90, %s91
    %p102 = scmp.eq.s32.totalorder %s14, 0
    %p103 = por %p101, %p102
    %p104 = scmp.ne.s32.totalorder %s90, %s91
    %p105 = scmp.eq.s32.totalorder %s15, 1
    %p106 = por %p104, %p105
    %p108 = scmp.ne.s32.totalorder %s91, %s107
    %p109 = scmp.eq.s32.totalorder %s15, 0
    %p110 = por %p108, %p109
    %p111 = scmp.le.s32.totalorder 1, %s9
    %p112 = scmp.lt.s32.totalorder %s9, 3
    %p113 = pnand %p111, %p112
    %p114 = pneg %p113
    // Predicated region
    $region9: #{_lambda_.16} parent=5 // pred_check
      _
    $region10: #{_lambda_.16} parent=5 // pred_check_branch
      %116 = sbr.rel (%p113) target = $region12
    $region11: #{_lambda_.16} parent=5 // pred_region
      %s117 = ssub.s32 %s9, 1
      // Predicated region
      $region13: #{_lambda_.16} parent=11 // pred_check
        %p118 = pneg %p56
      $region14: #{_lambda_.16} parent=11 // pred_check_branch
        %120 = sbr.rel (%p118) target = $region16
      $region15: #{_lambda_.16} parent=11 // pred_region
        _
      $region16: #{_lambda_.16} parent=11 // pred_fallthru
        _
      // Predicated region
      $region17: #{_lambda_.16} parent=11 // pred_check
        %p121 = pneg %p77
      $region18: #{_lambda_.16} parent=11 // pred_check_branch
        %123 = sbr.rel (%p121) target = $region20
      $region19: #{_lambda_.16} parent=11 // pred_region
        _
      $region20: #{_lambda_.16} parent=11 // pred_fallthru
        _
    $region12: #{_lambda_.16} parent=5 // pred_fallthru
      _
    %p124 = scmp.lt.s32.totalorder %s9, 2
    // Predicated region
    $region21: #{_lambda_.16} parent=5 // pred_check
      %p125 = pneg %p124
    $region22: #{_lambda_.16} parent=5 // pred_check_branch
      %127 = sbr.rel (%p125) target = $region24
    $region23: #{_lambda_.16} parent=5 // pred_region
      // Predicated region
      $region25: #{_lambda_.16} parent=23 // pred_check
        %p128 = pneg %p29
      $region26: #{_lambda_.16} parent=23 // pred_check_branch
        %130 = sbr.rel (%p128) target = $region28
      $region27: #{_lambda_.16} parent=23 // pred_region
        %s131 = smul.u32 14, %s9
        %p132 = scmp.lt.s32.totalorder %s131, 27
        %s133 = scalar_select %p132, %s131, 27
        %s134 = smul.addr %s133, 4
        %s135 = scalar_lea.vmem %s0, %s134
        %s136 = smul.u32 14, %s9
      $region28: #{_lambda_.16} parent=23 // pred_fallthru
        _
    $region24: #{_lambda_.16} parent=5 // pred_fallthru
      _
    %p137 = scmp.le.s32.totalorder 1, %s9
    %p138 = scmp.lt.s32.totalorder %s9, 3
    %p139 = pnand %p137, %p138
    %p140 = pneg %p139
    // Predicated region
    $region29: #{_lambda_.16} parent=5 // pred_check
      _
    $region30: #{_lambda_.16} parent=5 // pred_check_branch
      %142 = sbr.rel (%p139) target = $region32
    $region31: #{_lambda_.16} parent=5 // pred_region
      %s143 = ssub.s32 %s9, 1
      %s144 = smul.u32 14, %s14
      %p145 = scmp.lt.s32.totalorder %s144, 27
      %s146 = scalar_select %p145, %s144, 27
      %s147 = smul.addr %s146, 4
      %s148 = scalar_lea.vmem %s0, %s147
      %p149 = pneg %p35
      %p150 = pneg %p32
      %p151 = pneg %p56
      %p152 = pneg %p53
      %p153 = pneg %p77
      %p154 = pneg %p74
      %p155 = pneg %p103
      %p156 = pneg %p100
      %s157 = smul.u32 14, %s14
      %p158 = scmp.lt.s32.totalorder %s157, 27
      %s159 = scalar_select %p158, %s157, 27
      %s160 = smul.addr %s159, 4
      %s161 = scalar_lea.vmem %s3, %s160
      %s162 = smul.u32 14, %s14
      %p163 = scmp.lt.s32.totalorder %s162, 27
      %s164 = scalar_select %p163, %s162, 27
      %s165 = smul.addr %s164, 4
      %s166 = scalar_lea.vmem %s0, %s165
      %s167 = smul.u32 14, %s14
      %s168 = smul.u32 14, %s14
      %p169 = scmp.lt.s32.totalorder %s168, 27
      %s170 = scalar_select %p169, %s168, 27
      %s171 = smul.addr %s170, 4
      %s172 = scalar_lea.vmem %s3, %s171
      %s173 = smul.u32 14, %s14
      %v175 = vld [vmem:[%s166] sm:$0xf]
      %v176 = vld [vmem:[%s166 + $0x4] sm:$0xf]
      %v177 = vld [vmem:[%s166 + $0x8] sm:$0xf]
      %v178 = vld [vmem:[%s166 + $0xc] sm:$0xf]
      %v179 = vld [vmem:[%s166 + $0x10] sm:$0xf]
      %v180 = vld [vmem:[%s166 + $0x14] sm:$0xf]
      %v181 = vld [vmem:[%s166 + $0x18] sm:$0xf]
      %v182 = vld [vmem:[%s166 + $0x1c] sm:$0xf]
      %v183 = vld [vmem:[%s166 + $0x20] sm:$0xf]
      %v184 = vld [vmem:[%s166 + $0x24] sm:$0xf]
      %v185 = vld [vmem:[%s166 + $0x28] sm:$0xf]
      %v186 = vld [vmem:[%s166 + $0x2c] sm:$0xf]
      %v187 = vld [vmem:[%s166 + $0x30] sm:$0xf]
      %v188 = vld [vmem:[%s166 + $0x34] sm:$0xf]
      %v189 = vld [vmem:[%s1] sm:$0xf]
      %v190 = vld [vmem:[%s1 + $0x4] sm:$0xf]
      %v191 = vld [vmem:[%s1 + $0x8] sm:$0xf]
      %v192 = vld [vmem:[%s1 + $0xc] sm:$0xf]
      %v193 = vld [vmem:[%s1 + $0x10] sm:$0xf]
      %v194 = vld [vmem:[%s1 + $0x14] sm:$0xf]
      %v195 = vld [vmem:[%s1 + $0x18] sm:$0xf]
      %v196 = vld [vmem:[%s1 + $0x1c] sm:$0xf]
      %v197 = vld [vmem:[%s1 + $0x20] sm:$0xf]
      %v198 = vld [vmem:[%s2] sm:$0x1]
      %v200 = vlaneseq
      %v201 = vshrl.u32 %v200, 7
      %v202 = vsub.s32 0, %v201
      %v203 = vrot.slane %v198, %v202
      %v219 = vunpack.c.l.b16 %v175
      %v220 = vunpack.c.l.b16 %v176
      %v221 = vunpack.c.l.b16 %v177
      %v222 = vunpack.c.l.b16 %v178
      %v223 = vunpack.c.l.b16 %v179
      %v224 = vunpack.c.l.b16 %v180
      %v225 = vunpack.c.l.b16 %v181
      %v226 = vunpack.c.l.b16 %v182
      %v227 = vunpack.c.l.b16 %v183
      %v228 = vunpack.c.l.b16 %v184
      %v229 = vunpack.c.l.b16 %v185
      %v230 = vunpack.c.l.b16 %v186
      %v231 = vunpack.c.l.b16 %v187
      %v232 = vunpack.c.l.b16 %v188
      %v233 = vpack.c.b16 %v220, %v219
      %v234 = vpack.c.b16 %v222, %v221
      %v235 = vpack.c.b16 %v224, %v223
      %v236 = vpack.c.b16 %v226, %v225
      %v237 = vpack.c.b16 %v228, %v227
      %v238 = vpack.c.b16 %v230, %v229
      %v239 = vpack.c.b16 %v232, %v231
      %v249 = vunpack.c.l.b16 %v189
      %v250 = vunpack.c.l.b16 %v190
      %v251 = vunpack.c.l.b16 %v191
      %v252 = vunpack.c.l.b16 %v192
      %v253 = vunpack.c.l.b16 %v193
      %v254 = vunpack.c.l.b16 %v194
      %v255 = vunpack.c.l.b16 %v195
      %v256 = vunpack.c.l.b16 %v196
      %v257 = vunpack.c.l.b16 %v197
      %v258 = vpack.c.b16 %v250, %v249
      %v259 = vpack.c.b16 %v252, %v251
      %v260 = vpack.c.b16 %v254, %v253
      %v261 = vpack.c.b16 %v256, %v255
      %v262 = vpack.c.b16 %v257, %v257
      %vm267 = vcmask 588800
      %v269 = vsel %vm267, %v233, 0
      %v272 = vsel %vm267, %v234, 0
      %v275 = vsel %vm267, %v235, 0
      %v278 = vsel %vm267, %v236, 0
      %v281 = vsel %vm267, %v237, 0
      %v284 = vsel %vm267, %v238, 0
      %v287 = vsel %vm267, %v239, 0
      %vm289 = vcmask 1043456
      %v291 = vsel %vm289, %v262, 0
      %293 = vmatprep.subr.bf16.mxu0 0
      %294 = vmatpush1.bf16.msra.mxu0 0
      %295 = vmatprep.subr.bf16.mxu0 0
      %296 = vmatpush1.bf16.msra.mxu0 0
      %297 = vmatprep.subr.bf16.mxu0 0
      %298 = vmatpush1.bf16.msra.mxu0 0
      %299 = vmatprep.subr.bf16.mxu0 0
      %300 = vmatpush1.bf16.msra.mxu0 %v291
      %301 = vmatprep.subr.bf16.mxu0 0
      %302 = vmatpush1.bf16.msra.mxu0 %v261
      %303 = vmatprep.subr.bf16.mxu0 0
      %304 = vmatpush1.bf16.msra.mxu0 %v260
      %305 = vmatprep.subr.bf16.mxu0 0
      %306 = vmatpush1.bf16.msra.mxu0 %v259
      %307 = vmatprep.subr.bf16.mxu0 0
      %308 = vmatpush1.bf16.msra.mxu0 %v258
      %309 = vmatprep.subr.bf16.mxu0 0
      %310 = vmatpush2.bf16.msra.mxu0 0
      %311 = vmatprep.subr.bf16.mxu0 0
      %312 = vmatpush2.bf16.msra.mxu0 0
      %313 = vmatprep.subr.bf16.mxu0 0
      %314 = vmatpush2.bf16.msra.mxu0 0
      %315 = vmatprep.subr.bf16.mxu0 0
      %316 = vmatpush2.bf16.msra.mxu0 0
      %317 = vmatprep.subr.bf16.mxu0 0
      %318 = vmatpush2.bf16.msra.mxu0 0
      %319 = vmatprep.subr.bf16.mxu0 0
      %320 = vmatpush2.bf16.msra.mxu0 0
      %321 = vmatprep.subr.bf16.mxu0 0
      %322 = vmatpush2.bf16.msra.mxu0 0
      %323 = vmatprep.subr.bf16.mxu0 0
      %324 = vmatpush2.bf16.msra.mxu0 0
      %325 = vmatprep.mubr.bf16.mxu0 0
      %326 = vmatmul.mubr.bf16.gmra.mxu0 %v269
      %v327 = vpop.f32.mrf.mxu0
      %v328 = vadd.f32 %v203, %v327
      %v329 = vpop.f32.mrf.mxu0
      %v330 = vpop.f32.mrf.mxu0
      %v331 = vadd.f32 %v203, %v330
      %v332 = vpop.f32.mrf.mxu0
      %333 = vmatprep.mubr.bf16.mxu0 0
      %334 = vmatmul.mubr.bf16.gmra.mxu0 %v272
      %v335 = vpop.f32.mrf.mxu0
      %v336 = vadd.f32 %v203, %v335
      %v337 = vpop.f32.mrf.mxu0
      %v338 = vpop.f32.mrf.mxu0
      %v339 = vadd.f32 %v203, %v338
      %v340 = vpop.f32.mrf.mxu0
      %341 = vmatprep.mubr.bf16.mxu0 0
      %342 = vmatmul.mubr.bf16.gmra.mxu0 %v275
      %v343 = vpop.f32.mrf.mxu0
      %v344 = vadd.f32 %v203, %v343
      %v345 = vpop.f32.mrf.mxu0
      %v346 = vpop.f32.mrf.mxu0
      %v347 = vadd.f32 %v203, %v346
      %v348 = vpop.f32.mrf.mxu0
      %349 = vmatprep.mubr.bf16.mxu0 0
      %350 = vmatmul.mubr.bf16.gmra.mxu0 %v278
      %v351 = vpop.f32.mrf.mxu0
      %v352 = vadd.f32 %v203, %v351
      %v353 = vpop.f32.mrf.mxu0
      %v354 = vpop.f32.mrf.mxu0
      %v355 = vadd.f32 %v203, %v354
      %v356 = vpop.f32.mrf.mxu0
      %357 = vmatprep.mubr.bf16.mxu0 0
      %358 = vmatmul.mubr.bf16.gmra.mxu0 %v281
      %v359 = vpop.f32.mrf.mxu0
      %v360 = vadd.f32 %v203, %v359
      %v361 = vpop.f32.mrf.mxu0
      %v362 = vpop.f32.mrf.mxu0
      %v363 = vadd.f32 %v203, %v362
      %v364 = vpop.f32.mrf.mxu0
      %365 = vmatprep.mubr.bf16.mxu0 0
      %366 = vmatmul.mubr.bf16.gmra.mxu0 %v284
      %v367 = vpop.f32.mrf.mxu0
      %v368 = vadd.f32 %v203, %v367
      %v369 = vpop.f32.mrf.mxu0
      %v370 = vpop.f32.mrf.mxu0
      %v371 = vadd.f32 %v203, %v370
      %v372 = vpop.f32.mrf.mxu0
      %373 = vmatprep.mubr.bf16.mxu0 0
      %374 = vmatmul.mubr.bf16.gmra.mxu0 %v287
      %v375 = vpop.f32.mrf.mxu0
      %v376 = vadd.f32 %v203, %v375
      %v377 = vpop.f32.mrf.mxu0
      %v378 = vpop.f32.mrf.mxu0
      %v379 = vadd.f32 %v203, %v378
      %v380 = vpop.f32.mrf.mxu0
      %381 = vdwg.mxu0
      %v382 = vmax.f32 %v328, 0.0
      %v383 = vmax.f32 %v331, 0.0
      %v384 = vmax.f32 %v336, 0.0
      %v385 = vmax.f32 %v339, 0.0
      %v386 = vmax.f32 %v344, 0.0
      %v387 = vmax.f32 %v347, 0.0
      %v388 = vmax.f32 %v352, 0.0
      %v389 = vmax.f32 %v355, 0.0
      %v390 = vmax.f32 %v360, 0.0
      %v391 = vmax.f32 %v363, 0.0
      %v392 = vmax.f32 %v368, 0.0
      %v393 = vmax.f32 %v371, 0.0
      %v394 = vmax.f32 %v376, 0.0
      %v395 = vmax.f32 %v379, 0.0
      %v396 = vpack.c.bf16 %v383, %v382
      %v397 = vpack.c.bf16 %v385, %v384
      %v398 = vpack.c.bf16 %v387, %v386
      %v399 = vpack.c.bf16 %v389, %v388
      %v400 = vpack.c.bf16 %v391, %v390
      %v401 = vpack.c.bf16 %v393, %v392
      %v402 = vpack.c.bf16 %v395, %v394
      %v410 = vunpack.c.l.b16 %v396
      %v411 = vunpack.c.h.b16 %v396
      %v412 = vunpack.c.l.b16 %v397
      %v413 = vunpack.c.h.b16 %v397
      %v414 = vunpack.c.l.b16 %v398
      %v415 = vunpack.c.h.b16 %v398
      %v416 = vunpack.c.l.b16 %v399
      %v417 = vunpack.c.h.b16 %v399
      %v418 = vunpack.c.l.b16 %v400
      %v419 = vunpack.c.h.b16 %v400
      %v420 = vunpack.c.l.b16 %v401
      %v421 = vunpack.c.h.b16 %v401
      %v422 = vunpack.c.l.b16 %v402
      %v423 = vunpack.c.h.b16 %v402
      %v424 = vpack.c.b16 %v410, %v410
      %v425 = vpack.c.b16 %v411, %v411
      %v426 = vpack.c.b16 %v412, %v412
      %v427 = vpack.c.b16 %v413, %v413
      %v428 = vpack.c.b16 %v414, %v414
      %v429 = vpack.c.b16 %v415, %v415
      %v430 = vpack.c.b16 %v416, %v416
      %v431 = vpack.c.b16 %v417, %v417
      %v432 = vpack.c.b16 %v418, %v418
      %v433 = vpack.c.b16 %v419, %v419
      %v434 = vpack.c.b16 %v420, %v420
      %v435 = vpack.c.b16 %v421, %v421
      %v436 = vpack.c.b16 %v422, %v422
      %v437 = vpack.c.b16 %v423, %v423
      %452 = vst [vmem:[%s172] sm:$0xf] %v424
      %453 = vst [vmem:[%s172 + $0x4] sm:$0xf] %v425
      %454 = vst [vmem:[%s172 + $0x8] sm:$0xf] %v426
      %455 = vst [vmem:[%s172 + $0xc] sm:$0xf] %v427
      %456 = vst [vmem:[%s172 + $0x10] sm:$0xf] %v428
      %457 = vst [vmem:[%s172 + $0x14] sm:$0xf] %v429
      %458 = vst [vmem:[%s172 + $0x18] sm:$0xf] %v430
      %459 = vst [vmem:[%s172 + $0x1c] sm:$0xf] %v431
      %460 = vst [vmem:[%s172 + $0x20] sm:$0xf] %v432
      %461 = vst [vmem:[%s172 + $0x24] sm:$0xf] %v433
      %462 = vst [vmem:[%s172 + $0x28] sm:$0xf] %v434
      %463 = vst [vmem:[%s172 + $0x2c] sm:$0xf] %v435
      %464 = vst [vmem:[%s172 + $0x30] sm:$0xf] %v436
      %465 = vst [vmem:[%s172 + $0x34] sm:$0xf] %v437
      %s466 = smul.u32 14, %s14
      %p467 = scmp.lt.s32.totalorder %s466, 27
      %s468 = scalar_select %p467, %s466, 27
      %s469 = smul.addr %s468, 4
      %s470 = scalar_lea.vmem %s3, %s469
      // Predicated region
      $region33: #{_lambda_.16} parent=31 // pred_check
        %p471 = pneg %p100
      $region34: #{_lambda_.16} parent=31 // pred_check_branch
        %473 = sbr.rel (%p471) target = $region36
      $region35: #{_lambda_.16} parent=31 // pred_region
        %s474 = smul.u32 14, %s14
      $region36: #{_lambda_.16} parent=31 // pred_fallthru
        _
    $region32: #{_lambda_.16} parent=5 // pred_fallthru
      _
    %p475 = scmp.le.s32.totalorder 2, %s9
    // Predicated region
    $region37: #{_lambda_.16} parent=5 // pred_check
      %p476 = pneg %p475
    $region38: #{_lambda_.16} parent=5 // pred_check_branch
      %478 = sbr.rel (%p476) target = $region40
    $region39: #{_lambda_.16} parent=5 // pred_region
      %s479 = ssub.s32 %s9, 2
      // Predicated region
      $region41: #{_lambda_.16} parent=39 // pred_check
        %p480 = pneg %p106
      $region42: #{_lambda_.16} parent=39 // pred_check_branch
        %482 = sbr.rel (%p480) target = $region44
      $region43: #{_lambda_.16} parent=39 // pred_region
        %s483 = smul.u32 14, %s15
        %p484 = scmp.lt.s32.totalorder %s483, 27
        %s485 = scalar_select %p484, %s483, 27
        %s486 = smul.addr %s485, 4
        %s487 = scalar_lea.vmem %s3, %s486
      $region44: #{_lambda_.16} parent=39 // pred_fallthru
        _
    $region40: #{_lambda_.16} parent=5 // pred_fallthru
      _
  $region6: #{_lambda_.16} parent=0 // loop_footer
    %s13 = sadd.s32 1, %s9
  $region7: #{_lambda_.16} parent=0 // loop_footer_branch
    %8 = sbr.rel target = $region3
  $region8: #{_lambda_.16} parent=0 // loop_exit
    _

// kernel: _lambda_.17
$region0: #{_lambda_.17}
  #allocation0 [shape = 'u32[]', space=smem, size = 0x4, offset = 0x4, fixed_abs, tag = 'smem constant byte address 0x4 - core index']
  #allocation1 [shape = 'u32[144,128]{1,0:T(1,128)}', space=vmem, size = 0x12000, scoped, tag = 'internal scratch']
  %s0 = inlined_call_operand.vmem [shape: bf16[64,144], index: 0, kind: input, shape index: {}]
  %s1 = inlined_call_operand.vmem [shape: bf16[144,128], index: 1, kind: input, shape index: {}]
  %s2 = inlined_call_operand.vmem [shape: f32[1,128], index: 2, kind: input, shape index: {}]
  %s3 = inlined_call_operand.vmem [shape: bf16[64,128], index: 3, kind: output, shape index: {}]
  %s4 = sld [smem:[#allocation0]]
  $region45: #{_lambda_.17} parent=0
    _
  %s6 = ssub.s32 1, %s4
  %s7 = scalar_select 0, %s6, %s4
  loop: start=0, step=1, limit=4
  $region2: #{_lambda_.17} parent=0 // loop_pre_header
    _
  $region3: #{_lambda_.17} parent=0 // loop_header
    %s9 = sphi 0, %s13
    %p10 = scmp.ge.s32.totalorder %s9, 4
    %s19 = sphi 0, %s21
    %s22 = sphi 0, %s19
    %s23 = sphi 0, %s22
    %s39 = sphi 0, %s23
    %s43 = sphi 0, %s43
    %s45 = sphi 0, %s43
    %s46 = sphi 0, %s45
    %s60 = sphi 0, %s46
    %s64 = sphi 0, %s64
    %s66 = sphi 0, %s64
    %s67 = sphi 0, %s66
    %s81 = sphi 0, %s67
    %s87 = sphi 0, %s89
    %s90 = sphi 0, %s87
    %s91 = sphi 0, %s90
    %s107 = sphi 0, %s91
  $region4: #{_lambda_.17} parent=0 // loop_header_branch
    %12 = sbr.rel (%p10) target = $region8
  $region5: #{_lambda_.17} parent=0 // loop_body
    %s14 = ssub.s32 %s9, 1
    %s15 = ssub.s32 %s9, 2
    %s16 = sadd.s32 %s9, 1
    %s17 = ssub.s32 %s9, %s16
    %p18 = scmp.eq.s32.totalorder %s17, 0
    %s20 = sadd.s32 %s19, 1
    %s21 = scalar_select %p18, %s19, %s20
    %p24 = pneg %p18
    %p25 = scmp.eq.s32.totalorder %s9, 1
    %p26 = por %p24, %p25
    %p27 = scmp.ne.s32.totalorder %s19, %s22
    %p28 = scmp.eq.s32.totalorder %s9, 0
    %p29 = por %p27, %p28
    %p30 = scmp.ne.s32.totalorder %s19, %s22
    %p31 = scmp.eq.s32.totalorder %s14, 1
    %p32 = por %p30, %p31
    %p33 = scmp.ne.s32.totalorder %s22, %s23
    %p34 = scmp.eq.s32.totalorder %s14, 0
    %p35 = por %p33, %p34
    %p36 = scmp.ne.s32.totalorder %s22, %s23
    %p37 = scmp.eq.s32.totalorder %s15, 1
    %p38 = por %p36, %p37
    %p40 = scmp.ne.s32.totalorder %s23, %s39
    %p41 = scmp.eq.s32.totalorder %s15, 0
    %p42 = por %p40, %p41
    %s44 = sadd.s32 %s43, 1
    %p47 = scmp.eq.s32.totalorder %s9, 1
    %p48 = scmp.ne.s32.totalorder %s43, %s45
    %p49 = scmp.eq.s32.totalorder %s9, 0
    %p50 = por %p48, %p49
    %p51 = scmp.ne.s32.totalorder %s43, %s45
    %p52 = scmp.eq.s32.totalorder %s14, 1
    %p53 = por %p51, %p52
    %p54 = scmp.ne.s32.totalorder %s45, %s46
    %p55 = scmp.eq.s32.totalorder %s14, 0
    %p56 = por %p54, %p55
    %p57 = scmp.ne.s32.totalorder %s45, %s46
    %p58 = scmp.eq.s32.totalorder %s15, 1
    %p59 = por %p57, %p58
    %p61 = scmp.ne.s32.totalorder %s46, %s60
    %p62 = scmp.eq.s32.totalorder %s15, 0
    %p63 = por %p61, %p62
    %s65 = sadd.s32 %s64, 1
    %p68 = scmp.eq.s32.totalorder %s9, 1
    %p69 = scmp.ne.s32.totalorder %s64, %s66
    %p70 = scmp.eq.s32.totalorder %s9, 0
    %p71 = por %p69, %p70
    %p72 = scmp.ne.s32.totalorder %s64, %s66
    %p73 = scmp.eq.s32.totalorder %s14, 1
    %p74 = por %p72, %p73
    %p75 = scmp.ne.s32.totalorder %s66, %s67
    %p76 = scmp.eq.s32.totalorder %s14, 0
    %p77 = por %p75, %p76
    %p78 = scmp.ne.s32.totalorder %s66, %s67
    %p79 = scmp.eq.s32.totalorder %s15, 1
    %p80 = por %p78, %p79
    %p82 = scmp.ne.s32.totalorder %s67, %s81
    %p83 = scmp.eq.s32.totalorder %s15, 0
    %p84 = por %p82, %p83
    %s85 = ssub.s32 %s9, %s16
    %p86 = scmp.eq.s32.totalorder %s85, 0
    %s88 = sadd.s32 %s87, 1
    %s89 = scalar_select %p86, %s87, %s88
    %p92 = pneg %p86
    %p93 = scmp.eq.s32.totalorder %s9, 1
    %p94 = por %p92, %p93
    %p95 = scmp.ne.s32.totalorder %s87, %s90
    %p96 = scmp.eq.s32.totalorder %s9, 0
    %p97 = por %p95, %p96
    %p98 = scmp.ne.s32.totalorder %s87, %s90
    %p99 = scmp.eq.s32.totalorder %s14, 1
    %p100 = por %p98, %p99
    %p101 = scmp.ne.s32.totalorder %s90, %s91
    %p102 = scmp.eq.s32.totalorder %s14, 0
    %p103 = por %p101, %p102
    %p104 = scmp.ne.s32.totalorder %s90, %s91
    %p105 = scmp.eq.s32.totalorder %s15, 1
    %p106 = por %p104, %p105
    %p108 = scmp.ne.s32.totalorder %s91, %s107
    %p109 = scmp.eq.s32.totalorder %s15, 0
    %p110 = por %p108, %p109
    %p111 = scmp.le.s32.totalorder 1, %s9
    %p112 = scmp.lt.s32.totalorder %s9, 3
    %p113 = pnand %p111, %p112
    %p114 = pneg %p113
    // Predicated region
    $region9: #{_lambda_.17} parent=5 // pred_check
      _
    $region10: #{_lambda_.17} parent=5 // pred_check_branch
      %116 = sbr.rel (%p113) target = $region12
    $region11: #{_lambda_.17} parent=5 // pred_region
      %s117 = ssub.s32 %s9, 1
      // Predicated region
      $region13: #{_lambda_.17} parent=11 // pred_check
        %p118 = pneg %p56
      $region14: #{_lambda_.17} parent=11 // pred_check_branch
        %120 = sbr.rel (%p118) target = $region16
      $region15: #{_lambda_.17} parent=11 // pred_region
        _
      $region16: #{_lambda_.17} parent=11 // pred_fallthru
        _
      // Predicated region
      $region17: #{_lambda_.17} parent=11 // pred_check
        %p121 = pneg %p77
      $region18: #{_lambda_.17} parent=11 // pred_check_branch
        %123 = sbr.rel (%p121) target = $region20
      $region19: #{_lambda_.17} parent=11 // pred_region
        _
      $region20: #{_lambda_.17} parent=11 // pred_fallthru
        _
    $region12: #{_lambda_.17} parent=5 // pred_fallthru
      _
    %p124 = scmp.lt.s32.totalorder %s9, 2
    // Predicated region
    $region21: #{_lambda_.17} parent=5 // pred_check
      %p125 = pneg %p124
    $region22: #{_lambda_.17} parent=5 // pred_check_branch
      %127 = sbr.rel (%p125) target = $region24
    $region23: #{_lambda_.17} parent=5 // pred_region
      // Predicated region
      $region25: #{_lambda_.17} parent=23 // pred_check
        %p128 = pneg %p29
      $region26: #{_lambda_.17} parent=23 // pred_check_branch
        %130 = sbr.rel (%p128) target = $region28
      $region27: #{_lambda_.17} parent=23 // pred_region
        %s131 = smul.u32 4, %s9
        %p132 = scmp.lt.s32.totalorder %s131, 7
        %s133 = scalar_select %p132, %s131, 7
        %s134 = smul.addr %s133, 2
        %s135 = smul.addr %s134, 4
        %s136 = scalar_lea.vmem %s0, %s135
        %s137 = smul.u32 4, %s9
      $region28: #{_lambda_.17} parent=23 // pred_fallthru
        _
    $region24: #{_lambda_.17} parent=5 // pred_fallthru
      _
    %p138 = scmp.le.s32.totalorder 1, %s9
    %p139 = scmp.lt.s32.totalorder %s9, 3
    %p140 = pnand %p138, %p139
    %p141 = pneg %p140
    // Predicated region
    $region29: #{_lambda_.17} parent=5 // pred_check
      _
    $region30: #{_lambda_.17} parent=5 // pred_check_branch
      %143 = sbr.rel (%p140) target = $region32
    $region31: #{_lambda_.17} parent=5 // pred_region
      %s144 = ssub.s32 %s9, 1
      %s145 = smul.u32 4, %s14
      %p146 = scmp.lt.s32.totalorder %s145, 7
      %s147 = scalar_select %p146, %s145, 7
      %s148 = smul.addr %s147, 2
      %s149 = smul.addr %s148, 4
      %s150 = scalar_lea.vmem %s0, %s149
      %p151 = pneg %p35
      %p152 = pneg %p32
      %p153 = pneg %p56
      %p154 = pneg %p53
      %p155 = pneg %p77
      %p156 = pneg %p74
      %p157 = pneg %p103
      %p158 = pneg %p100
      %s159 = smul.u32 4, %s14
      %p160 = scmp.lt.s32.totalorder %s159, 7
      %s161 = scalar_select %p160, %s159, 7
      %s162 = smul.addr %s161, 4
      %s163 = scalar_lea.vmem %s3, %s162
      %s164 = smul.u32 4, %s14
      %p165 = scmp.lt.s32.totalorder %s164, 7
      %s166 = scalar_select %p165, %s164, 7
      %s167 = smul.addr %s166, 2
      %s168 = smul.addr %s167, 4
      %s169 = scalar_lea.vmem %s0, %s168
      %s170 = smul.u32 4, %s14
      %s171 = smul.u32 4, %s14
      %p172 = scmp.lt.s32.totalorder %s171, 7
      %s173 = scalar_select %p172, %s171, 7
      %s174 = smul.addr %s173, 4
      %s175 = scalar_lea.vmem %s3, %s174
      %s176 = smul.u32 4, %s14
      %v178 = vld [vmem:[%s169] sm:$0xff]
      %v179 = vld [vmem:[%s169 + $0x8] sm:$0xff]
      %v180 = vld [vmem:[%s169 + $0x10] sm:$0xff]
      %v181 = vld [vmem:[%s169 + $0x18] sm:$0xff]
      %v182 = vld [vmem:[%s1] sm:$0xf]
      %v183 = vld [vmem:[%s1 + $0x4] sm:$0xf]
      %v184 = vld [vmem:[%s1 + $0x8] sm:$0xf]
      %v185 = vld [vmem:[%s1 + $0xc] sm:$0xf]
      %v186 = vld [vmem:[%s1 + $0x10] sm:$0xf]
      %v187 = vld [vmem:[%s1 + $0x14] sm:$0xf]
      %v188 = vld [vmem:[%s1 + $0x18] sm:$0xf]
      %v189 = vld [vmem:[%s1 + $0x1c] sm:$0xf]
      %v190 = vld [vmem:[%s1 + $0x20] sm:$0xf]
      %v191 = vld [vmem:[%s1 + $0x24] sm:$0xf]
      %v192 = vld [vmem:[%s1 + $0x28] sm:$0xf]
      %v193 = vld [vmem:[%s1 + $0x2c] sm:$0xf]
      %v194 = vld [vmem:[%s1 + $0x30] sm:$0xf]
      %v195 = vld [vmem:[%s1 + $0x34] sm:$0xf]
      %v196 = vld [vmem:[%s1 + $0x38] sm:$0xf]
      %v197 = vld [vmem:[%s1 + $0x3c] sm:$0xf]
      %v198 = vld [vmem:[%s1 + $0x40] sm:$0xf]
      %v199 = vld [vmem:[%s1 + $0x44] sm:$0xf]
      %v200 = vld [vmem:[%s2] sm:$0x1]
      %v202 = vlaneseq
      %v203 = vshrl.u32 %v202, 7
      %v204 = vsub.s32 0, %v203
      %v205 = vrot.slane %v200, %v204
      %v211 = vunpack.c.l.b16 %v178
      %v212 = vunpack.c.h.b16 %v178
      %v213 = vunpack.c.l.b16 %v179
      %v214 = vunpack.c.h.b16 %v179
      %v215 = vunpack.c.l.b16 %v180
      %v216 = vunpack.c.h.b16 %v180
      %v217 = vunpack.c.l.b16 %v181
      %v218 = vunpack.c.h.b16 %v181
      %v219 = vpack.c.b16 %v213, %v211
      %v220 = vpack.c.b16 %v214, %v212
      %v221 = vpack.c.b16 %v217, %v215
      %v222 = vpack.c.b16 %v218, %v216
      %v243 = vunpack.c.l.b16 %v182
      %v244 = vunpack.c.l.b16 %v183
      %v245 = vunpack.c.l.b16 %v184
      %v246 = vunpack.c.l.b16 %v185
      %v247 = vunpack.c.l.b16 %v186
      %v248 = vunpack.c.l.b16 %v187
      %v249 = vunpack.c.l.b16 %v188
      %v250 = vunpack.c.l.b16 %v189
      %v251 = vunpack.c.l.b16 %v190
      %v252 = vunpack.c.l.b16 %v191
      %v253 = vunpack.c.l.b16 %v192
      %v254 = vunpack.c.l.b16 %v193
      %v255 = vunpack.c.l.b16 %v194
      %v256 = vunpack.c.l.b16 %v195
      %v257 = vunpack.c.l.b16 %v196
      %v258 = vunpack.c.l.b16 %v197
      %v259 = vunpack.c.l.b16 %v198
      %v260 = vunpack.c.l.b16 %v199
      %v261 = vpack.c.b16 %v244, %v243
      %v262 = vpack.c.b16 %v246, %v245
      %v263 = vpack.c.b16 %v248, %v247
      %v264 = vpack.c.b16 %v250, %v249
      %v265 = vpack.c.b16 %v252, %v251
      %v266 = vpack.c.b16 %v254, %v253
      %v267 = vpack.c.b16 %v256, %v255
      %v268 = vpack.c.b16 %v258, %v257
      %v269 = vpack.c.b16 %v260, %v259
      %vm279 = vcmask 130048
      %v281 = vsel %vm279, %v220, 0
      %v284 = vsel %vm279, %v222, 0
      %286 = vmatprep.subr.bf16.mxu0 0
      %287 = vmatpush1.bf16.msra.mxu0 %v268
      %288 = vmatprep.subr.bf16.mxu0 0
      %289 = vmatpush1.bf16.msra.mxu0 %v267
      %290 = vmatprep.subr.bf16.mxu0 0
      %291 = vmatpush1.bf16.msra.mxu0 %v266
      %292 = vmatprep.subr.bf16.mxu0 0
      %293 = vmatpush1.bf16.msra.mxu0 %v265
      %294 = vmatprep.subr.bf16.mxu0 0
      %295 = vmatpush1.bf16.msra.mxu0 %v264
      %296 = vmatprep.subr.bf16.mxu0 0
      %297 = vmatpush1.bf16.msra.mxu0 %v263
      %298 = vmatprep.subr.bf16.mxu0 0
      %299 = vmatpush1.bf16.msra.mxu0 %v262
      %300 = vmatprep.subr.bf16.mxu0 0
      %301 = vmatpush1.bf16.msra.mxu0 %v261
      %302 = vmatprep.subr.bf16.mxu0 0
      %303 = vmatpush2.bf16.msra.mxu0 0
      %304 = vmatprep.subr.bf16.mxu0 0
      %305 = vmatpush2.bf16.msra.mxu0 0
      %306 = vmatprep.subr.bf16.mxu0 0
      %307 = vmatpush2.bf16.msra.mxu0 0
      %308 = vmatprep.subr.bf16.mxu0 0
      %309 = vmatpush2.bf16.msra.mxu0 0
      %310 = vmatprep.subr.bf16.mxu0 0
      %311 = vmatpush2.bf16.msra.mxu0 0
      %312 = vmatprep.subr.bf16.mxu0 0
      %313 = vmatpush2.bf16.msra.mxu0 0
      %314 = vmatprep.subr.bf16.mxu0 0
      %315 = vmatpush2.bf16.msra.mxu0 0
      %316 = vmatprep.subr.bf16.mxu0 0
      %317 = vmatpush2.bf16.msra.mxu0 %v269
      %318 = vmatprep.mubr.bf16.mxu0 %v281
      %319 = vmatmul.mubr.bf16.gmra.mxu0 %v219
      %v320 = vpop.f32.mrf.mxu0
      %v321 = vadd.f32 %v205, %v320
      %v322 = vpop.f32.mrf.mxu0
      %v323 = vpop.f32.mrf.mxu0
      %v324 = vadd.f32 %v205, %v323
      %v325 = vpop.f32.mrf.mxu0
      %326 = vmatprep.mubr.bf16.mxu0 %v284
      %327 = vmatmul.mubr.bf16.gmra.mxu0 %v221
      %v328 = vpop.f32.mrf.mxu0
      %v329 = vadd.f32 %v205, %v328
      %v330 = vpop.f32.mrf.mxu0
      %v331 = vpop.f32.mrf.mxu0
      %v332 = vadd.f32 %v205, %v331
      %v333 = vpop.f32.mrf.mxu0
      %334 = vdwg.mxu0
      %v335 = vmax.f32 %v321, 0.0
      %v336 = vmax.f32 %v324, 0.0
      %v337 = vmax.f32 %v329, 0.0
      %v338 = vmax.f32 %v332, 0.0
      %v339 = vpack.c.bf16 %v336, %v335
      %v340 = vpack.c.bf16 %v338, %v337
      %v343 = vunpack.c.l.b16 %v339
      %v344 = vunpack.c.h.b16 %v339
      %v345 = vunpack.c.l.b16 %v340
      %v346 = vunpack.c.h.b16 %v340
      %v347 = vpack.c.b16 %v343, %v343
      %v348 = vpack.c.b16 %v344, %v344
      %v349 = vpack.c.b16 %v345, %v345
      %v350 = vpack.c.b16 %v346, %v346
      %355 = vst [vmem:[%s175] sm:$0xf] %v347
      %356 = vst [vmem:[%s175 + $0x4] sm:$0xf] %v348
      %357 = vst [vmem:[%s175 + $0x8] sm:$0xf] %v349
      %358 = vst [vmem:[%s175 + $0xc] sm:$0xf] %v350
      %s359 = smul.u32 4, %s14
      %p360 = scmp.lt.s32.totalorder %s359, 7
      %s361 = scalar_select %p360, %s359, 7
      %s362 = smul.addr %s361, 4
      %s363 = scalar_lea.vmem %s3, %s362
      // Predicated region
      $region33: #{_lambda_.17} parent=31 // pred_check
        %p364 = pneg %p100
      $region34: #{_lambda_.17} parent=31 // pred_check_branch
        %366 = sbr.rel (%p364) target = $region36
      $region35: #{_lambda_.17} parent=31 // pred_region
        %s367 = smul.u32 4, %s14
      $region36: #{_lambda_.17} parent=31 // pred_fallthru
        _
    $region32: #{_lambda_.17} parent=5 // pred_fallthru
      _
    %p368 = scmp.le.s32.totalorder 2, %s9
    // Predicated region
    $region37: #{_lambda_.17} parent=5 // pred_check
      %p369 = pneg %p368
    $region38: #{_lambda_.17} parent=5 // pred_check_branch
      %371 = sbr.rel (%p369) target = $region40
    $region39: #{_lambda_.17} parent=5 // pred_region
      %s372 = ssub.s32 %s9, 2
      // Predicated region
      $region41: #{_lambda_.17} parent=39 // pred_check
        %p373 = pneg %p106
      $region42: #{_lambda_.17} parent=39 // pred_check_branch
        %375 = sbr.rel (%p373) target = $region44
      $region43: #{_lambda_.17} parent=39 // pred_region
        %s376 = smul.u32 4, %s15
        %p377 = scmp.lt.s32.totalorder %s376, 7
        %s378 = scalar_select %p377, %s376, 7
        %s379 = smul.addr %s378, 4
        %s380 = scalar_lea.vmem %s3, %s379
      $region44: #{_lambda_.17} parent=39 // pred_fallthru
        _
    $region40: #{_lambda_.17} parent=5 // pred_fallthru
      _
  $region6: #{_lambda_.17} parent=0 // loop_footer
    %s13 = sadd.s32 1, %s9
  $region7: #{_lambda_.17} parent=0 // loop_footer_branch
    %8 = sbr.rel target = $region3
  $region8: #{_lambda_.17} parent=0 // loop_exit
    _

// kernel: _lambda_.18
$region0: #{_lambda_.18}
  #allocation0 [shape = 'u32[]', space=smem, size = 0x4, offset = 0x4, fixed_abs, tag = 'smem constant byte address 0x4 - core index']
  #allocation1 [shape = 'u32[144,128]{1,0:T(1,128)}', space=vmem, size = 0x12000, scoped, tag = 'internal scratch']
  %s0 = inlined_call_operand.vmem [shape: bf16[16,32], index: 0, kind: input, shape index: {}]
  %s1 = inlined_call_operand.vmem [shape: bf16[32,128], index: 1, kind: input, shape index: {}]
  %s2 = inlined_call_operand.vmem [shape: f32[1,128], index: 2, kind: input, shape index: {}]
  %s3 = inlined_call_operand.vmem [shape: f32[16,128], index: 3, kind: output, shape index: {}]
  %s4 = sld [smem:[#allocation0]]
  $region22: #{_lambda_.18} parent=0
    _
  %s6 = ssub.s32 1, %s4
  %s7 = scalar_select 0, %s6, %s4
  // Predicated region
  $region2: #{_lambda_.18} parent=0 // pred_check
    _
  $region3: #{_lambda_.18} parent=0 // pred_check_branch
    %9 = sbr.rel (0) target = $region5
  $region4: #{_lambda_.18} parent=0 // pred_region
    _
  $region5: #{_lambda_.18} parent=0 // pred_fallthru
    _
  // Predicated region
  $region6: #{_lambda_.18} parent=0 // pred_check
    _
  $region7: #{_lambda_.18} parent=0 // pred_check_branch
    %11 = sbr.rel (0) target = $region9
  $region8: #{_lambda_.18} parent=0 // pred_region
    _
  $region9: #{_lambda_.18} parent=0 // pred_fallthru
    _
  // Predicated region
  $region10: #{_lambda_.18} parent=0 // pred_check
    _
  $region11: #{_lambda_.18} parent=0 // pred_check_branch
    %13 = sbr.rel (0) target = $region13
  $region12: #{_lambda_.18} parent=0 // pred_region
    _
  $region13: #{_lambda_.18} parent=0 // pred_fallthru
    _
  %v15 = vld [vmem:[%s0] sm:$0xf]
  %v16 = vld [vmem:[%s0 + $0x4] sm:$0xf]
  %v17 = vld [vmem:[%s1] sm:$0xf]
  %v18 = vld [vmem:[%s1 + $0x4] sm:$0xf]
  %v19 = vld [vmem:[%s1 + $0x8] sm:$0xf]
  %v20 = vld [vmem:[%s1 + $0xc] sm:$0xf]
  %v21 = vld [vmem:[%s2] sm:$0x1]
  %v23 = vlaneseq
  %v24 = vshrl.u32 %v23, 7
  %v25 = vsub.s32 0, %v24
  %v26 = vrot.slane %v21, %v25
  %v30 = vunpack.c.l.b16 %v15
  %v31 = vunpack.c.l.b16 %v16
  %v32 = vpack.c.b16 %v31, %v30
  %v37 = vunpack.c.l.b16 %v17
  %v38 = vunpack.c.l.b16 %v18
  %v39 = vunpack.c.l.b16 %v19
  %v40 = vunpack.c.l.b16 %v20
  %v41 = vpack.c.b16 %v38, %v37
  %v42 = vpack.c.b16 %v40, %v39
  %vm45 = vcmask 261120
  %v47 = vsel %vm45, %v32, 0
  %49 = vmatprep.subr.bf16.mxu0 0
  %50 = vmatpush1.bf16.msra.mxu0 0
  %51 = vmatprep.subr.bf16.mxu0 0
  %52 = vmatpush1.bf16.msra.mxu0 0
  %53 = vmatprep.subr.bf16.mxu0 0
  %54 = vmatpush1.bf16.msra.mxu0 0
  %55 = vmatprep.subr.bf16.mxu0 0
  %56 = vmatpush1.bf16.msra.mxu0 0
  %57 = vmatprep.subr.bf16.mxu0 0
  %58 = vmatpush1.bf16.msra.mxu0 0
  %59 = vmatprep.subr.bf16.mxu0 0
  %60 = vmatpush1.bf16.msra.mxu0 0
  %61 = vmatprep.subr.bf16.mxu0 0
  %62 = vmatpush1.bf16.msra.mxu0 %v42
  %63 = vmatprep.subr.bf16.mxu0 0
  %64 = vmatpush1.bf16.msra.mxu0 %v41
  %65 = vmatprep.subr.bf16.mxu0 0
  %66 = vmatpush2.bf16.msra.mxu0 0
  %67 = vmatprep.subr.bf16.mxu0 0
  %68 = vmatpush2.bf16.msra.mxu0 0
  %69 = vmatprep.subr.bf16.mxu0 0
  %70 = vmatpush2.bf16.msra.mxu0 0
  %71 = vmatprep.subr.bf16.mxu0 0
  %72 = vmatpush2.bf16.msra.mxu0 0
  %73 = vmatprep.subr.bf16.mxu0 0
  %74 = vmatpush2.bf16.msra.mxu0 0
  %75 = vmatprep.subr.bf16.mxu0 0
  %76 = vmatpush2.bf16.msra.mxu0 0
  %77 = vmatprep.subr.bf16.mxu0 0
  %78 = vmatpush2.bf16.msra.mxu0 0
  %79 = vmatprep.subr.bf16.mxu0 0
  %80 = vmatpush2.bf16.msra.mxu0 0
  %81 = vmatprep.mubr.bf16.mxu0 0
  %82 = vmatmul.mubr.bf16.gmra.mxu0 %v47
  %v83 = vpop.f32.mrf.mxu0
  %v84 = vadd.f32 %v26, %v83
  %v85 = vpop.f32.mrf.mxu0
  %v86 = vpop.f32.mrf.mxu0
  %v87 = vadd.f32 %v26, %v86
  %v88 = vpop.f32.mrf.mxu0
  %89 = vdwg.mxu0
  %90 = vst [vmem:[%s3] sm:$0xff] %v84
  %91 = vst [vmem:[%s3 + $0x8] sm:$0xff] %v87
  // Predicated region
  $region14: #{_lambda_.18} parent=0 // pred_check
    _
  $region15: #{_lambda_.18} parent=0 // pred_check_branch
    %93 = sbr.rel (0) target = $region17
  $region16: #{_lambda_.18} parent=0 // pred_region
    _
  $region17: #{_lambda_.18} parent=0 // pred_fallthru
    _
  // Predicated region
  $region18: #{_lambda_.18} parent=0 // pred_check
    _
  $region19: #{_lambda_.18} parent=0 // pred_check_branch
    %95 = sbr.rel (0) target = $region21
  $region20: #{_lambda_.18} parent=0 // pred_region
    _
  $region21: #{_lambda_.18} parent=0 // pred_fallthru
    _

// kernel: _lambda_.10
$region0: #{_lambda_.10}
  #allocation0 [shape = 'u32[]', space=smem, size = 0x4, offset = 0x4, fixed_abs, tag = 'smem constant byte address 0x4 - core index']
  #allocation1 [shape = 'u32[144,128]{1,0:T(1,128)}', space=vmem, size = 0x12000, scoped, tag = 'internal scratch']
  %s0 = inlined_call_operand.vmem [shape: bf16[416,14], index: 0, kind: input, shape index: {}]
  %s1 = inlined_call_operand.vmem [shape: bf16[14,128], index: 1, kind: input, shape index: {}]
  %s2 = inlined_call_operand.vmem [shape: f32[1,128], index: 2, kind: input, shape index: {}]
  %s3 = inlined_call_operand.vmem [shape: bf16[416,128], index: 3, kind: output, shape index: {}]
  %s4 = sld [smem:[#allocation0]]
  $region45: #{_lambda_.10} parent=0
    _
  %s6 = ssub.s32 1, %s4
  %s7 = scalar_select 0, %s6, %s4
  loop: start=0, step=1, limit=4
  $region2: #{_lambda_.10} parent=0 // loop_pre_header
    _
  $region3: #{_lambda_.10} parent=0 // loop_header
    %s9 = sphi 0, %s13
    %p10 = scmp.ge.s32.totalorder %s9, 4
    %s19 = sphi 0, %s21
    %s22 = sphi 0, %s19
    %s23 = sphi 0, %s22
    %s39 = sphi 0, %s23
    %s43 = sphi 0, %s43
    %s45 = sphi 0, %s43
    %s46 = sphi 0, %s45
    %s60 = sphi 0, %s46
    %s64 = sphi 0, %s64
    %s66 = sphi 0, %s64
    %s67 = sphi 0, %s66
    %s81 = sphi 0, %s67
    %s87 = sphi 0, %s89
    %s90 = sphi 0, %s87
    %s91 = sphi 0, %s90
    %s107 = sphi 0, %s91
  $region4: #{_lambda_.10} parent=0 // loop_header_branch
    %12 = sbr.rel (%p10) target = $region8
  $region5: #{_lambda_.10} parent=0 // loop_body
    %s14 = ssub.s32 %s9, 1
    %s15 = ssub.s32 %s9, 2
    %s16 = sadd.s32 %s9, 1
    %s17 = ssub.s32 %s9, %s16
    %p18 = scmp.eq.s32.totalorder %s17, 0
    %s20 = sadd.s32 %s19, 1
    %s21 = scalar_select %p18, %s19, %s20
    %p24 = pneg %p18
    %p25 = scmp.eq.s32.totalorder %s9, 1
    %p26 = por %p24, %p25
    %p27 = scmp.ne.s32.totalorder %s19, %s22
    %p28 = scmp.eq.s32.totalorder %s9, 0
    %p29 = por %p27, %p28
    %p30 = scmp.ne.s32.totalorder %s19, %s22
    %p31 = scmp.eq.s32.totalorder %s14, 1
    %p32 = por %p30, %p31
    %p33 = scmp.ne.s32.totalorder %s22, %s23
    %p34 = scmp.eq.s32.totalorder %s14, 0
    %p35 = por %p33, %p34
    %p36 = scmp.ne.s32.totalorder %s22, %s23
    %p37 = scmp.eq.s32.totalorder %s15, 1
    %p38 = por %p36, %p37
    %p40 = scmp.ne.s32.totalorder %s23, %s39
    %p41 = scmp.eq.s32.totalorder %s15, 0
    %p42 = por %p40, %p41
    %s44 = sadd.s32 %s43, 1
    %p47 = scmp.eq.s32.totalorder %s9, 1
    %p48 = scmp.ne.s32.totalorder %s43, %s45
    %p49 = scmp.eq.s32.totalorder %s9, 0
    %p50 = por %p48, %p49
    %p51 = scmp.ne.s32.totalorder %s43, %s45
    %p52 = scmp.eq.s32.totalorder %s14, 1
    %p53 = por %p51, %p52
    %p54 = scmp.ne.s32.totalorder %s45, %s46
    %p55 = scmp.eq.s32.totalorder %s14, 0
    %p56 = por %p54, %p55
    %p57 = scmp.ne.s32.totalorder %s45, %s46
    %p58 = scmp.eq.s32.totalorder %s15, 1
    %p59 = por %p57, %p58
    %p61 = scmp.ne.s32.totalorder %s46, %s60
    %p62 = scmp.eq.s32.totalorder %s15, 0
    %p63 = por %p61, %p62
    %s65 = sadd.s32 %s64, 1
    %p68 = scmp.eq.s32.totalorder %s9, 1
    %p69 = scmp.ne.s32.totalorder %s64, %s66
    %p70 = scmp.eq.s32.totalorder %s9, 0
    %p71 = por %p69, %p70
    %p72 = scmp.ne.s32.totalorder %s64, %s66
    %p73 = scmp.eq.s32.totalorder %s14, 1
    %p74 = por %p72, %p73
    %p75 = scmp.ne.s32.totalorder %s66, %s67
    %p76 = scmp.eq.s32.totalorder %s14, 0
    %p77 = por %p75, %p76
    %p78 = scmp.ne.s32.totalorder %s66, %s67
    %p79 = scmp.eq.s32.totalorder %s15, 1
    %p80 = por %p78, %p79
    %p82 = scmp.ne.s32.totalorder %s67, %s81
    %p83 = scmp.eq.s32.totalorder %s15, 0
    %p84 = por %p82, %p83
    %s85 = ssub.s32 %s9, %s16
    %p86 = scmp.eq.s32.totalorder %s85, 0
    %s88 = sadd.s32 %s87, 1
    %s89 = scalar_select %p86, %s87, %s88
    %p92 = pneg %p86
    %p93 = scmp.eq.s32.totalorder %s9, 1
    %p94 = por %p92, %p93
    %p95 = scmp.ne.s32.totalorder %s87, %s90
    %p96 = scmp.eq.s32.totalorder %s9, 0
    %p97 = por %p95, %p96
    %p98 = scmp.ne.s32.totalorder %s87, %s90
    %p99 = scmp.eq.s32.totalorder %s14, 1
    %p100 = por %p98, %p99
    %p101 = scmp.ne.s32.totalorder %s90, %s91
    %p102 = scmp.eq.s32.totalorder %s14, 0
    %p103 = por %p101, %p102
    %p104 = scmp.ne.s32.totalorder %s90, %s91
    %p105 = scmp.eq.s32.totalorder %s15, 1
    %p106 = por %p104, %p105
    %p108 = scmp.ne.s32.totalorder %s91, %s107
    %p109 = scmp.eq.s32.totalorder %s15, 0
    %p110 = por %p108, %p109
    %p111 = scmp.le.s32.totalorder 1, %s9
    %p112 = scmp.lt.s32.totalorder %s9, 3
    %p113 = pnand %p111, %p112
    %p114 = pneg %p113
    // Predicated region
    $region9: #{_lambda_.10} parent=5 // pred_check
      _
    $region10: #{_lambda_.10} parent=5 // pred_check_branch
      %116 = sbr.rel (%p113) target = $region12
    $region11: #{_lambda_.10} parent=5 // pred_region
      %s117 = ssub.s32 %s9, 1
      // Predicated region
      $region13: #{_lambda_.10} parent=11 // pred_check
        %p118 = pneg %p56
      $region14: #{_lambda_.10} parent=11 // pred_check_branch
        %120 = sbr.rel (%p118) target = $region16
      $region15: #{_lambda_.10} parent=11 // pred_region
        _
      $region16: #{_lambda_.10} parent=11 // pred_fallthru
        _
      // Predicated region
      $region17: #{_lambda_.10} parent=11 // pred_check
        %p121 = pneg %p77
      $region18: #{_lambda_.10} parent=11 // pred_check_branch
        %123 = sbr.rel (%p121) target = $region20
      $region19: #{_lambda_.10} parent=11 // pred_region
        _
      $region20: #{_lambda_.10} parent=11 // pred_fallthru
        _
    $region12: #{_lambda_.10} parent=5 // pred_fallthru
      _
    %p124 = scmp.lt.s32.totalorder %s9, 2
    // Predicated region
    $region21: #{_lambda_.10} parent=5 // pred_check
      %p125 = pneg %p124
    $region22: #{_lambda_.10} parent=5 // pred_check_branch
      %127 = sbr.rel (%p125) target = $region24
    $region23: #{_lambda_.10} parent=5 // pred_region
      // Predicated region
      $region25: #{_lambda_.10} parent=23 // pred_check
        %p128 = pneg %p29
      $region26: #{_lambda_.10} parent=23 // pred_check_branch
        %130 = sbr.rel (%p128) target = $region28
      $region27: #{_lambda_.10} parent=23 // pred_region
        %s131 = smul.u32 26, %s9
        %p132 = scmp.lt.s32.totalorder %s131, 51
        %s133 = scalar_select %p132, %s131, 51
        %s134 = smul.addr %s133, 4
        %s135 = scalar_lea.vmem %s0, %s134
        %s136 = smul.u32 26, %s9
      $region28: #{_lambda_.10} parent=23 // pred_fallthru
        _
    $region24: #{_lambda_.10} parent=5 // pred_fallthru
      _
    %p137 = scmp.le.s32.totalorder 1, %s9
    %p138 = scmp.lt.s32.totalorder %s9, 3
    %p139 = pnand %p137, %p138
    %p140 = pneg %p139
    // Predicated region
    $region29: #{_lambda_.10} parent=5 // pred_check
      _
    $region30: #{_lambda_.10} parent=5 // pred_check_branch
      %142 = sbr.rel (%p139) target = $region32
    $region31: #{_lambda_.10} parent=5 // pred_region
      %s143 = ssub.s32 %s9, 1
      %s144 = smul.u32 26, %s14
      %p145 = scmp.lt.s32.totalorder %s144, 51
      %s146 = scalar_select %p145, %s144, 51
      %s147 = smul.addr %s146, 4
      %s148 = scalar_lea.vmem %s0, %s147
      %p149 = pneg %p35
      %p150 = pneg %p32
      %p151 = pneg %p56
      %p152 = pneg %p53
      %p153 = pneg %p77
      %p154 = pneg %p74
      %p155 = pneg %p103
      %p156 = pneg %p100
      %s157 = smul.u32 26, %s14
      %p158 = scmp.lt.s32.totalorder %s157, 51
      %s159 = scalar_select %p158, %s157, 51
      %s160 = smul.addr %s159, 4
      %s161 = scalar_lea.vmem %s3, %s160
      %s162 = smul.u32 26, %s14
      %p163 = scmp.lt.s32.totalorder %s162, 51
      %s164 = scalar_select %p163, %s162, 51
      %s165 = smul.addr %s164, 4
      %s166 = scalar_lea.vmem %s0, %s165
      %s167 = smul.u32 26, %s14
      %s168 = smul.u32 26, %s14
      %p169 = scmp.lt.s32.totalorder %s168, 51
      %s170 = scalar_select %p169, %s168, 51
      %s171 = smul.addr %s170, 4
      %s172 = scalar_lea.vmem %s3, %s171
      %s173 = smul.u32 26, %s14
      %v175 = vld [vmem:[%s166] sm:$0xf]
      %v176 = vld [vmem:[%s166 + $0x4] sm:$0xf]
      %v177 = vld [vmem:[%s166 + $0x8] sm:$0xf]
      %v178 = vld [vmem:[%s166 + $0xc] sm:$0xf]
      %v179 = vld [vmem:[%s166 + $0x10] sm:$0xf]
      %v180 = vld [vmem:[%s166 + $0x14] sm:$0xf]
      %v181 = vld [vmem:[%s166 + $0x18] sm:$0xf]
      %v182 = vld [vmem:[%s166 + $0x1c] sm:$0xf]
      %v183 = vld [vmem:[%s166 + $0x20] sm:$0xf]
      %v184 = vld [vmem:[%s166 + $0x24] sm:$0xf]
      %v185 = vld [vmem:[%s166 + $0x28] sm:$0xf]
      %v186 = vld [vmem:[%s166 + $0x2c] sm:$0xf]
      %v187 = vld [vmem:[%s166 + $0x30] sm:$0xf]
      %v188 = vld [vmem:[%s166 + $0x34] sm:$0xf]
      %v189 = vld [vmem:[%s166 + $0x38] sm:$0xf]
      %v190 = vld [vmem:[%s166 + $0x3c] sm:$0xf]
      %v191 = vld [vmem:[%s166 + $0x40] sm:$0xf]
      %v192 = vld [vmem:[%s166 + $0x44] sm:$0xf]
      %v193 = vld [vmem:[%s166 + $0x48] sm:$0xf]
      %v194 = vld [vmem:[%s166 + $0x4c] sm:$0xf]
      %v195 = vld [vmem:[%s166 + $0x50] sm:$0xf]
      %v196 = vld [vmem:[%s166 + $0x54] sm:$0xf]
      %v197 = vld [vmem:[%s166 + $0x58] sm:$0xf]
      %v198 = vld [vmem:[%s166 + $0x5c] sm:$0xf]
      %v199 = vld [vmem:[%s166 + $0x60] sm:$0xf]
      %v200 = vld [vmem:[%s166 + $0x64] sm:$0xf]
      %v201 = vld [vmem:[%s1] sm:$0xf]
      %v202 = vld [vmem:[%s1 + $0x4] sm:$0x7]
      %v203 = vld [vmem:[%s2] sm:$0x1]
      %v205 = vlaneseq
      %v206 = vshrl.u32 %v205, 7
      %v207 = vsub.s32 0, %v206
      %v208 = vrot.slane %v203, %v207
      %v236 = vunpack.c.l.b16 %v175
      %v237 = vunpack.c.l.b16 %v176
      %v238 = vunpack.c.l.b16 %v177
      %v239 = vunpack.c.l.b16 %v178
      %v240 = vunpack.c.l.b16 %v179
      %v241 = vunpack.c.l.b16 %v180
      %v242 = vunpack.c.l.b16 %v181
      %v243 = vunpack.c.l.b16 %v182
      %v244 = vunpack.c.l.b16 %v183
      %v245 = vunpack.c.l.b16 %v184
      %v246 = vunpack.c.l.b16 %v185
      %v247 = vunpack.c.l.b16 %v186
      %v248 = vunpack.c.l.b16 %v187
      %v249 = vunpack.c.l.b16 %v188
      %v250 = vunpack.c.l.b16 %v189
      %v251 = vunpack.c.l.b16 %v190
      %v252 = vunpack.c.l.b16 %v191
      %v253 = vunpack.c.l.b16 %v192
      %v254 = vunpack.c.l.b16 %v193
      %v255 = vunpack.c.l.b16 %v194
      %v256 = vunpack.c.l.b16 %v195
      %v257 = vunpack.c.l.b16 %v196
      %v258 = vunpack.c.l.b16 %v197
      %v259 = vunpack.c.l.b16 %v198
      %v260 = vunpack.c.l.b16 %v199
      %v261 = vunpack.c.l.b16 %v200
      %v262 = vpack.c.b16 %v237, %v236
      %v263 = vpack.c.b16 %v239, %v238
      %v264 = vpack.c.b16 %v241, %v240
      %v265 = vpack.c.b16 %v243, %v242
      %v266 = vpack.c.b16 %v245, %v244
      %v267 = vpack.c.b16 %v247, %v246
      %v268 = vpack.c.b16 %v249, %v248
      %v269 = vpack.c.b16 %v251, %v250
      %v270 = vpack.c.b16 %v253, %v252
      %v271 = vpack.c.b16 %v255, %v254
      %v272 = vpack.c.b16 %v257, %v256
      %v273 = vpack.c.b16 %v259, %v258
      %v274 = vpack.c.b16 %v261, %v260
      %v277 = vunpack.c.l.b16 %v201
      %v278 = vunpack.c.l.b16 %v202
      %v279 = vpack.c.b16 %v278, %v277
      %vm280 = vcmask 113664
      %v282 = vsel %vm280, %v262, 0
      %v285 = vsel %vm280, %v263, 0
      %v288 = vsel %vm280, %v264, 0
      %v291 = vsel %vm280, %v265, 0
      %v294 = vsel %vm280, %v266, 0
      %v297 = vsel %vm280, %v267, 0
      %v300 = vsel %vm280, %v268, 0
      %v303 = vsel %vm280, %v269, 0
      %v306 = vsel %vm280, %v270, 0
      %v309 = vsel %vm280, %v271, 0
      %v312 = vsel %vm280, %v272, 0
      %v315 = vsel %vm280, %v273, 0
      %v318 = vsel %vm280, %v274, 0
      %vm320 = vcmask 1046528
      %v322 = vsel %vm320, %v279, 0
      %324 = vmatprep.subr.bf16.mxu0 0
      %325 = vmatpush1.bf16.msra.mxu0 0
      %326 = vmatprep.subr.bf16.mxu0 0
      %327 = vmatpush1.bf16.msra.mxu0 0
      %328 = vmatprep.subr.bf16.mxu0 0
      %329 = vmatpush1.bf16.msra.mxu0 0
      %330 = vmatprep.subr.bf16.mxu0 0
      %331 = vmatpush1.bf16.msra.mxu0 0
      %332 = vmatprep.subr.bf16.mxu0 0
      %333 = vmatpush1.bf16.msra.mxu0 0
      %334 = vmatprep.subr.bf16.mxu0 0
      %335 = vmatpush1.bf16.msra.mxu0 0
      %336 = vmatprep.subr.bf16.mxu0 0
      %337 = vmatpush1.bf16.msra.mxu0 0
      %338 = vmatprep.subr.bf16.mxu0 0
      %339 = vmatpush1.bf16.msra.mxu0 %v322
      %340 = vmatprep.subr.bf16.mxu0 0
      %341 = vmatpush2.bf16.msra.mxu0 0
      %342 = vmatprep.subr.bf16.mxu0 0
      %343 = vmatpush2.bf16.msra.mxu0 0
      %344 = vmatprep.subr.bf16.mxu0 0
      %345 = vmatpush2.bf16.msra.mxu0 0
      %346 = vmatprep.subr.bf16.mxu0 0
      %347 = vmatpush2.bf16.msra.mxu0 0
      %348 = vmatprep.subr.bf16.mxu0 0
      %349 = vmatpush2.bf16.msra.mxu0 0
      %350 = vmatprep.subr.bf16.mxu0 0
      %351 = vmatpush2.bf16.msra.mxu0 0
      %352 = vmatprep.subr.bf16.mxu0 0
      %353 = vmatpush2.bf16.msra.mxu0 0
      %354 = vmatprep.subr.bf16.mxu0 0
      %355 = vmatpush2.bf16.msra.mxu0 0
      %356 = vmatprep.mubr.bf16.mxu0 0
      %357 = vmatmul.mubr.bf16.gmra.mxu0 %v282
      %v358 = vpop.f32.mrf.mxu0
      %v359 = vadd.f32 %v208, %v358
      %v360 = vpop.f32.mrf.mxu0
      %v361 = vpop.f32.mrf.mxu0
      %v362 = vadd.f32 %v208, %v361
      %v363 = vpop.f32.mrf.mxu0
      %364 = vmatprep.mubr.bf16.mxu0 0
      %365 = vmatmul.mubr.bf16.gmra.mxu0 %v285
      %v366 = vpop.f32.mrf.mxu0
      %v367 = vadd.f32 %v208, %v366
      %v368 = vpop.f32.mrf.mxu0
      %v369 = vpop.f32.mrf.mxu0
      %v370 = vadd.f32 %v208, %v369
      %v371 = vpop.f32.mrf.mxu0
      %372 = vmatprep.mubr.bf16.mxu0 0
      %373 = vmatmul.mubr.bf16.gmra.mxu0 %v288
      %v374 = vpop.f32.mrf.mxu0
      %v375 = vadd.f32 %v208, %v374
      %v376 = vpop.f32.mrf.mxu0
      %v377 = vpop.f32.mrf.mxu0
      %v378 = vadd.f32 %v208, %v377
      %v379 = vpop.f32.mrf.mxu0
      %380 = vmatprep.mubr.bf16.mxu0 0
      %381 = vmatmul.mubr.bf16.gmra.mxu0 %v291
      %v382 = vpop.f32.mrf.mxu0
      %v383 = vadd.f32 %v208, %v382
      %v384 = vpop.f32.mrf.mxu0
      %v385 = vpop.f32.mrf.mxu0
      %v386 = vadd.f32 %v208, %v385
      %v387 = vpop.f32.mrf.mxu0
      %388 = vmatprep.mubr.bf16.mxu0 0
      %389 = vmatmul.mubr.bf16.gmra.mxu0 %v294
      %v390 = vpop.f32.mrf.mxu0
      %v391 = vadd.f32 %v208, %v390
      %v392 = vpop.f32.mrf.mxu0
      %v393 = vpop.f32.mrf.mxu0
      %v394 = vadd.f32 %v208, %v393
      %v395 = vpop.f32.mrf.mxu0
      %396 = vmatprep.mubr.bf16.mxu0 0
      %397 = vmatmul.mubr.bf16.gmra.mxu0 %v297
      %v398 = vpop.f32.mrf.mxu0
      %v399 = vadd.f32 %v208, %v398
      %v400 = vpop.f32.mrf.mxu0
      %v401 = vpop.f32.mrf.mxu0
      %v402 = vadd.f32 %v208, %v401
      %v403 = vpop.f32.mrf.mxu0
      %404 = vmatprep.mubr.bf16.mxu0 0
      %405 = vmatmul.mubr.bf16.gmra.mxu0 %v300
      %v406 = vpop.f32.mrf.mxu0
      %v407 = vadd.f32 %v208, %v406
      %v408 = vpop.f32.mrf.mxu0
      %v409 = vpop.f32.mrf.mxu0
      %v410 = vadd.f32 %v208, %v409
      %v411 = vpop.f32.mrf.mxu0
      %412 = vmatprep.mubr.bf16.mxu0 0
      %413 = vmatmul.mubr.bf16.gmra.mxu0 %v303
      %v414 = vpop.f32.mrf.mxu0
      %v415 = vadd.f32 %v208, %v414
      %v416 = vpop.f32.mrf.mxu0
      %v417 = vpop.f32.mrf.mxu0
      %v418 = vadd.f32 %v208, %v417
      %v419 = vpop.f32.mrf.mxu0
      %420 = vmatprep.mubr.bf16.mxu0 0
      %421 = vmatmul.mubr.bf16.gmra.mxu0 %v306
      %v422 = vpop.f32.mrf.mxu0
      %v423 = vadd.f32 %v208, %v422
      %v424 = vpop.f32.mrf.mxu0
      %v425 = vpop.f32.mrf.mxu0
      %v426 = vadd.f32 %v208, %v425
      %v427 = vpop.f32.mrf.mxu0
      %428 = vmatprep.mubr.bf16.mxu0 0
      %429 = vmatmul.mubr.bf16.gmra.mxu0 %v309
      %v430 = vpop.f32.mrf.mxu0
      %v431 = vadd.f32 %v208, %v430
      %v432 = vpop.f32.mrf.mxu0
      %v433 = vpop.f32.mrf.mxu0
      %v434 = vadd.f32 %v208, %v433
      %v435 = vpop.f32.mrf.mxu0
      %436 = vmatprep.mubr.bf16.mxu0 0
      %437 = vmatmul.mubr.bf16.gmra.mxu0 %v312
      %v438 = vpop.f32.mrf.mxu0
      %v439 = vadd.f32 %v208, %v438
      %v440 = vpop.f32.mrf.mxu0
      %v441 = vpop.f32.mrf.mxu0
      %v442 = vadd.f32 %v208, %v441
      %v443 = vpop.f32.mrf.mxu0
      %444 = vmatprep.mubr.bf16.mxu0 0
      %445 = vmatmul.mubr.bf16.gmra.mxu0 %v315
      %v446 = vpop.f32.mrf.mxu0
      %v447 = vadd.f32 %v208, %v446
      %v448 = vpop.f32.mrf.mxu0
      %v449 = vpop.f32.mrf.mxu0
      %v450 = vadd.f32 %v208, %v449
      %v451 = vpop.f32.mrf.mxu0
      %452 = vmatprep.mubr.bf16.mxu0 0
      %453 = vmatmul.mubr.bf16.gmra.mxu0 %v318
      %v454 = vpop.f32.mrf.mxu0
      %v455 = vadd.f32 %v208, %v454
      %v456 = vpop.f32.mrf.mxu0
      %v457 = vpop.f32.mrf.mxu0
      %v458 = vadd.f32 %v208, %v457
      %v459 = vpop.f32.mrf.mxu0
      %460 = vdwg.mxu0
      %v461 = vmax.f32 %v359, 0.0
      %v462 = vmax.f32 %v362, 0.0
      %v463 = vmax.f32 %v367, 0.0
      %v464 = vmax.f32 %v370, 0.0
      %v465 = vmax.f32 %v375, 0.0
      %v466 = vmax.f32 %v378, 0.0
      %v467 = vmax.f32 %v383, 0.0
      %v468 = vmax.f32 %v386, 0.0
      %v469 = vmax.f32 %v391, 0.0
      %v470 = vmax.f32 %v394, 0.0
      %v471 = vmax.f32 %v399, 0.0
      %v472 = vmax.f32 %v402, 0.0
      %v473 = vmax.f32 %v407, 0.0
      %v474 = vmax.f32 %v410, 0.0
      %v475 = vmax.f32 %v415, 0.0
      %v476 = vmax.f32 %v418, 0.0
      %v477 = vmax.f32 %v423, 0.0
      %v478 = vmax.f32 %v426, 0.0
      %v479 = vmax.f32 %v431, 0.0
      %v480 = vmax.f32 %v434, 0.0
      %v481 = vmax.f32 %v439, 0.0
      %v482 = vmax.f32 %v442, 0.0
      %v483 = vmax.f32 %v447, 0.0
      %v484 = vmax.f32 %v450, 0.0
      %v485 = vmax.f32 %v455, 0.0
      %v486 = vmax.f32 %v458, 0.0
      %v487 = vpack.c.bf16 %v462, %v461
      %v488 = vpack.c.bf16 %v464, %v463
      %v489 = vpack.c.bf16 %v466, %v465
      %v490 = vpack.c.bf16 %v468, %v467
      %v491 = vpack.c.bf16 %v470, %v469
      %v492 = vpack.c.bf16 %v472, %v471
      %v493 = vpack.c.bf16 %v474, %v473
      %v494 = vpack.c.bf16 %v476, %v475
      %v495 = vpack.c.bf16 %v478, %v477
      %v496 = vpack.c.bf16 %v480, %v479
      %v497 = vpack.c.bf16 %v482, %v481
      %v498 = vpack.c.bf16 %v484, %v483
      %v499 = vpack.c.bf16 %v486, %v485
      %v513 = vunpack.c.l.b16 %v487
      %v514 = vunpack.c.h.b16 %v487
      %v515 = vunpack.c.l.b16 %v488
      %v516 = vunpack.c.h.b16 %v488
      %v517 = vunpack.c.l.b16 %v489
      %v518 = vunpack.c.h.b16 %v489
      %v519 = vunpack.c.l.b16 %v490
      %v520 = vunpack.c.h.b16 %v490
      %v521 = vunpack.c.l.b16 %v491
      %v522 = vunpack.c.h.b16 %v491
      %v523 = vunpack.c.l.b16 %v492
      %v524 = vunpack.c.h.b16 %v492
      %v525 = vunpack.c.l.b16 %v493
      %v526 = vunpack.c.h.b16 %v493
      %v527 = vunpack.c.l.b16 %v494
      %v528 = vunpack.c.h.b16 %v494
      %v529 = vunpack.c.l.b16 %v495
      %v530 = vunpack.c.h.b16 %v495
      %v531 = vunpack.c.l.b16 %v496
      %v532 = vunpack.c.h.b16 %v496
      %v533 = vunpack.c.l.b16 %v497
      %v534 = vunpack.c.h.b16 %v497
      %v535 = vunpack.c.l.b16 %v498
      %v536 = vunpack.c.h.b16 %v498
      %v537 = vunpack.c.l.b16 %v499
      %v538 = vunpack.c.h.b16 %v499
      %v539 = vpack.c.b16 %v513, %v513
      %v540 = vpack.c.b16 %v514, %v514
      %v541 = vpack.c.b16 %v515, %v515
      %v542 = vpack.c.b16 %v516, %v516
      %v543 = vpack.c.b16 %v517, %v517
      %v544 = vpack.c.b16 %v518, %v518
      %v545 = vpack.c.b16 %v519, %v519
      %v546 = vpack.c.b16 %v520, %v520
      %v547 = vpack.c.b16 %v521, %v521
      %v548 = vpack.c.b16 %v522, %v522
      %v549 = vpack.c.b16 %v523, %v523
      %v550 = vpack.c.b16 %v524, %v524
      %v551 = vpack.c.b16 %v525, %v525
      %v552 = vpack.c.b16 %v526, %v526
      %v553 = vpack.c.b16 %v527, %v527
      %v554 = vpack.c.b16 %v528, %v528
      %v555 = vpack.c.b16 %v529, %v529
      %v556 = vpack.c.b16 %v530, %v530
      %v557 = vpack.c.b16 %v531, %v531
      %v558 = vpack.c.b16 %v532, %v532
      %v559 = vpack.c.b16 %v533, %v533
      %v560 = vpack.c.b16 %v534, %v534
      %v561 = vpack.c.b16 %v535, %v535
      %v562 = vpack.c.b16 %v536, %v536
      %v563 = vpack.c.b16 %v537, %v537
      %v564 = vpack.c.b16 %v538, %v538
      %591 = vst [vmem:[%s172] sm:$0xf] %v539
      %592 = vst [vmem:[%s172 + $0x4] sm:$0xf] %v540
      %593 = vst [vmem:[%s172 + $0x8] sm:$0xf] %v541
      %594 = vst [vmem:[%s172 + $0xc] sm:$0xf] %v542
      %595 = vst [vmem:[%s172 + $0x10] sm:$0xf] %v543
      %596 = vst [vmem:[%s172 + $0x14] sm:$0xf] %v544
      %597 = vst [vmem:[%s172 + $0x18] sm:$0xf] %v545
      %598 = vst [vmem:[%s172 + $0x1c] sm:$0xf] %v546
      %599 = vst [vmem:[%s172 + $0x20] sm:$0xf] %v547
      %600 = vst [vmem:[%s172 + $0x24] sm:$0xf] %v548
      %601 = vst [vmem:[%s172 + $0x28] sm:$0xf] %v549
      %602 = vst [vmem:[%s172 + $0x2c] sm:$0xf] %v550
      %603 = vst [vmem:[%s172 + $0x30] sm:$0xf] %v551
      %604 = vst [vmem:[%s172 + $0x34] sm:$0xf] %v552
      %605 = vst [vmem:[%s172 + $0x38] sm:$0xf] %v553
      %606 = vst [vmem:[%s172 + $0x3c] sm:$0xf] %v554
      %607 = vst [vmem:[%s172 + $0x40] sm:$0xf] %v555
      %608 = vst [vmem:[%s172 + $0x44] sm:$0xf] %v556
      %609 = vst [vmem:[%s172 + $0x48] sm:$0xf] %v557
      %610 = vst [vmem:[%s172 + $0x4c] sm:$0xf] %v558
      %611 = vst [vmem:[%s172 + $0x50] sm:$0xf] %v559
      %612 = vst [vmem:[%s172 + $0x54] sm:$0xf] %v560
      %613 = vst [vmem:[%s172 + $0x58] sm:$0xf] %v561
      %614 = vst [vmem:[%s172 + $0x5c] sm:$0xf] %v562
      %615 = vst [vmem:[%s172 + $0x60] sm:$0xf] %v563
      %616 = vst [vmem:[%s172 + $0x64] sm:$0xf] %v564
      %s617 = smul.u32 26, %s14
      %p618 = scmp.lt.s32.totalorder %s617, 51
      %s619 = scalar_select %p618, %s617, 51
      %s620 = smul.addr %s619, 4
      %s621 = scalar_lea.vmem %s3, %s620
      // Predicated region
      $region33: #{_lambda_.10} parent=31 // pred_check
        %p622 = pneg %p100
      $region34: #{_lambda_.10} parent=31 // pred_check_branch
        %624 = sbr.rel (%p622) target = $region36
      $region35: #{_lambda_.10} parent=31 // pred_region
        %s625 = smul.u32 26, %s14
      $region36: #{_lambda_.10} parent=31 // pred_fallthru
        _
    $region32: #{_lambda_.10} parent=5 // pred_fallthru
      _
    %p626 = scmp.le.s32.totalorder 2, %s9
    // Predicated region
    $region37: #{_lambda_.10} parent=5 // pred_check
      %p627 = pneg %p626
    $region38: #{_lambda_.10} parent=5 // pred_check_branch
      %629 = sbr.rel (%p627) target = $region40
    $region39: #{_lambda_.10} parent=5 // pred_region
      %s630 = ssub.s32 %s9, 2
      // Predicated region
      $region41: #{_lambda_.10} parent=39 // pred_check
        %p631 = pneg %p106
      $region42: #{_lambda_.10} parent=39 // pred_check_branch
        %633 = sbr.rel (%p631) target = $region44
      $region43: #{_lambda_.10} parent=39 // pred_region
        %s634 = smul.u32 26, %s15
        %p635 = scmp.lt.s32.totalorder %s634, 51
        %s636 = scalar_select %p635, %s634, 51
        %s637 = smul.addr %s636, 4
        %s638 = scalar_lea.vmem %s3, %s637
      $region44: #{_lambda_.10} parent=39 // pred_fallthru
        _
    $region40: #{_lambda_.10} parent=5 // pred_fallthru
      _
  $region6: #{_lambda_.10} parent=0 // loop_footer
    %s13 = sadd.s32 1, %s9
  $region7: #{_lambda_.10} parent=0 // loop_footer_branch
    %8 = sbr.rel target = $region3
  $region8: #{_lambda_.10} parent=0 // loop_exit
    _

// kernel: _lambda_.11
$region0: #{_lambda_.11}
  #allocation0 [shape = 'u32[]', space=smem, size = 0x4, offset = 0x4, fixed_abs, tag = 'smem constant byte address 0x4 - core index']
  #allocation1 [shape = 'u32[144,128]{1,0:T(1,128)}', space=vmem, size = 0x12000, scoped, tag = 'internal scratch']
  %s0 = inlined_call_operand.vmem [shape: bf16[192,88], index: 0, kind: input, shape index: {}]
  %s1 = inlined_call_operand.vmem [shape: bf16[88,128], index: 1, kind: input, shape index: {}]
  %s2 = inlined_call_operand.vmem [shape: f32[1,128], index: 2, kind: input, shape index: {}]
  %s3 = inlined_call_operand.vmem [shape: bf16[192,128], index: 3, kind: output, shape index: {}]
  %s4 = sld [smem:[#allocation0]]
  $region45: #{_lambda_.11} parent=0
    _
  %s6 = ssub.s32 1, %s4
  %s7 = scalar_select 0, %s6, %s4
  loop: start=0, step=1, limit=4
  $region2: #{_lambda_.11} parent=0 // loop_pre_header
    _
  $region3: #{_lambda_.11} parent=0 // loop_header
    %s9 = sphi 0, %s13
    %p10 = scmp.ge.s32.totalorder %s9, 4
    %s19 = sphi 0, %s21
    %s22 = sphi 0, %s19
    %s23 = sphi 0, %s22
    %s39 = sphi 0, %s23
    %s43 = sphi 0, %s43
    %s45 = sphi 0, %s43
    %s46 = sphi 0, %s45
    %s60 = sphi 0, %s46
    %s64 = sphi 0, %s64
    %s66 = sphi 0, %s64
    %s67 = sphi 0, %s66
    %s81 = sphi 0, %s67
    %s87 = sphi 0, %s89
    %s90 = sphi 0, %s87
    %s91 = sphi 0, %s90
    %s107 = sphi 0, %s91
  $region4: #{_lambda_.11} parent=0 // loop_header_branch
    %12 = sbr.rel (%p10) target = $region8
  $region5: #{_lambda_.11} parent=0 // loop_body
    %s14 = ssub.s32 %s9, 1
    %s15 = ssub.s32 %s9, 2
    %s16 = sadd.s32 %s9, 1
    %s17 = ssub.s32 %s9, %s16
    %p18 = scmp.eq.s32.totalorder %s17, 0
    %s20 = sadd.s32 %s19, 1
    %s21 = scalar_select %p18, %s19, %s20
    %p24 = pneg %p18
    %p25 = scmp.eq.s32.totalorder %s9, 1
    %p26 = por %p24, %p25
    %p27 = scmp.ne.s32.totalorder %s19, %s22
    %p28 = scmp.eq.s32.totalorder %s9, 0
    %p29 = por %p27, %p28
    %p30 = scmp.ne.s32.totalorder %s19, %s22
    %p31 = scmp.eq.s32.totalorder %s14, 1
    %p32 = por %p30, %p31
    %p33 = scmp.ne.s32.totalorder %s22, %s23
    %p34 = scmp.eq.s32.totalorder %s14, 0
    %p35 = por %p33, %p34
    %p36 = scmp.ne.s32.totalorder %s22, %s23
    %p37 = scmp.eq.s32.totalorder %s15, 1
    %p38 = por %p36, %p37
    %p40 = scmp.ne.s32.totalorder %s23, %s39
    %p41 = scmp.eq.s32.totalorder %s15, 0
    %p42 = por %p40, %p41
    %s44 = sadd.s32 %s43, 1
    %p47 = scmp.eq.s32.totalorder %s9, 1
    %p48 = scmp.ne.s32.totalorder %s43, %s45
    %p49 = scmp.eq.s32.totalorder %s9, 0
    %p50 = por %p48, %p49
    %p51 = scmp.ne.s32.totalorder %s43, %s45
    %p52 = scmp.eq.s32.totalorder %s14, 1
    %p53 = por %p51, %p52
    %p54 = scmp.ne.s32.totalorder %s45, %s46
    %p55 = scmp.eq.s32.totalorder %s14, 0
    %p56 = por %p54, %p55
    %p57 = scmp.ne.s32.totalorder %s45, %s46
    %p58 = scmp.eq.s32.totalorder %s15, 1
    %p59 = por %p57, %p58
    %p61 = scmp.ne.s32.totalorder %s46, %s60
    %p62 = scmp.eq.s32.totalorder %s15, 0
    %p63 = por %p61, %p62
    %s65 = sadd.s32 %s64, 1
    %p68 = scmp.eq.s32.totalorder %s9, 1
    %p69 = scmp.ne.s32.totalorder %s64, %s66
    %p70 = scmp.eq.s32.totalorder %s9, 0
    %p71 = por %p69, %p70
    %p72 = scmp.ne.s32.totalorder %s64, %s66
    %p73 = scmp.eq.s32.totalorder %s14, 1
    %p74 = por %p72, %p73
    %p75 = scmp.ne.s32.totalorder %s66, %s67
    %p76 = scmp.eq.s32.totalorder %s14, 0
    %p77 = por %p75, %p76
    %p78 = scmp.ne.s32.totalorder %s66, %s67
    %p79 = scmp.eq.s32.totalorder %s15, 1
    %p80 = por %p78, %p79
    %p82 = scmp.ne.s32.totalorder %s67, %s81
    %p83 = scmp.eq.s32.totalorder %s15, 0
    %p84 = por %p82, %p83
    %s85 = ssub.s32 %s9, %s16
    %p86 = scmp.eq.s32.totalorder %s85, 0
    %s88 = sadd.s32 %s87, 1
    %s89 = scalar_select %p86, %s87, %s88
    %p92 = pneg %p86
    %p93 = scmp.eq.s32.totalorder %s9, 1
    %p94 = por %p92, %p93
    %p95 = scmp.ne.s32.totalorder %s87, %s90
    %p96 = scmp.eq.s32.totalorder %s9, 0
    %p97 = por %p95, %p96
    %p98 = scmp.ne.s32.totalorder %s87, %s90
    %p99 = scmp.eq.s32.totalorder %s14, 1
    %p100 = por %p98, %p99
    %p101 = scmp.ne.s32.totalorder %s90, %s91
    %p102 = scmp.eq.s32.totalorder %s14, 0
    %p103 = por %p101, %p102
    %p104 = scmp.ne.s32.totalorder %s90, %s91
    %p105 = scmp.eq.s32.totalorder %s15, 1
    %p106 = por %p104, %p105
    %p108 = scmp.ne.s32.totalorder %s91, %s107
    %p109 = scmp.eq.s32.totalorder %s15, 0
    %p110 = por %p108, %p109
    %p111 = scmp.le.s32.totalorder 1, %s9
    %p112 = scmp.lt.s32.totalorder %s9, 3
    %p113 = pnand %p111, %p112
    %p114 = pneg %p113
    // Predicated region
    $region9: #{_lambda_.11} parent=5 // pred_check
      _
    $region10: #{_lambda_.11} parent=5 // pred_check_branch
      %116 = sbr.rel (%p113) target = $region12
    $region11: #{_lambda_.11} parent=5 // pred_region
      %s117 = ssub.s32 %s9, 1
      // Predicated region
      $region13: #{_lambda_.11} parent=11 // pred_check
        %p118 = pneg %p56
      $region14: #{_lambda_.11} parent=11 // pred_check_branch
        %120 = sbr.rel (%p118) target = $region16
      $region15: #{_lambda_.11} parent=11 // pred_region
        _
      $region16: #{_lambda_.11} parent=11 // pred_fallthru
        _
      // Predicated region
      $region17: #{_lambda_.11} parent=11 // pred_check
        %p121 = pneg %p77
      $region18: #{_lambda_.11} parent=11 // pred_check_branch
        %123 = sbr.rel (%p121) target = $region20
      $region19: #{_lambda_.11} parent=11 // pred_region
        _
      $region20: #{_lambda_.11} parent=11 // pred_fallthru
        _
    $region12: #{_lambda_.11} parent=5 // pred_fallthru
      _
    %p124 = scmp.lt.s32.totalorder %s9, 2
    // Predicated region
    $region21: #{_lambda_.11} parent=5 // pred_check
      %p125 = pneg %p124
    $region22: #{_lambda_.11} parent=5 // pred_check_branch
      %127 = sbr.rel (%p125) target = $region24
    $region23: #{_lambda_.11} parent=5 // pred_region
      // Predicated region
      $region25: #{_lambda_.11} parent=23 // pred_check
        %p128 = pneg %p29
      $region26: #{_lambda_.11} parent=23 // pred_check_branch
        %130 = sbr.rel (%p128) target = $region28
      $region27: #{_lambda_.11} parent=23 // pred_region
        %s131 = smul.u32 12, %s9
        %p132 = scmp.lt.s32.totalorder %s131, 23
        %s133 = scalar_select %p132, %s131, 23
        %s134 = smul.addr %s133, 4
        %s135 = scalar_lea.vmem %s0, %s134
        %s136 = smul.u32 12, %s9
      $region28: #{_lambda_.11} parent=23 // pred_fallthru
        _
    $region24: #{_lambda_.11} parent=5 // pred_fallthru
      _
    %p137 = scmp.le.s32.totalorder 1, %s9
    %p138 = scmp.lt.s32.totalorder %s9, 3
    %p139 = pnand %p137, %p138
    %p140 = pneg %p139
    // Predicated region
    $region29: #{_lambda_.11} parent=5 // pred_check
      _
    $region30: #{_lambda_.11} parent=5 // pred_check_branch
      %142 = sbr.rel (%p139) target = $region32
    $region31: #{_lambda_.11} parent=5 // pred_region
      %s143 = ssub.s32 %s9, 1
      %s144 = smul.u32 12, %s14
      %p145 = scmp.lt.s32.totalorder %s144, 23
      %s146 = scalar_select %p145, %s144, 23
      %s147 = smul.addr %s146, 4
      %s148 = scalar_lea.vmem %s0, %s147
      %p149 = pneg %p35
      %p150 = pneg %p32
      %p151 = pneg %p56
      %p152 = pneg %p53
      %p153 = pneg %p77
      %p154 = pneg %p74
      %p155 = pneg %p103
      %p156 = pneg %p100
      %s157 = smul.u32 12, %s14
      %p158 = scmp.lt.s32.totalorder %s157, 23
      %s159 = scalar_select %p158, %s157, 23
      %s160 = smul.addr %s159, 4
      %s161 = scalar_lea.vmem %s3, %s160
      %s162 = smul.u32 12, %s14
      %p163 = scmp.lt.s32.totalorder %s162, 23
      %s164 = scalar_select %p163, %s162, 23
      %s165 = smul.addr %s164, 4
      %s166 = scalar_lea.vmem %s0, %s165
      %s167 = smul.u32 12, %s14
      %s168 = smul.u32 12, %s14
      %p169 = scmp.lt.s32.totalorder %s168, 23
      %s170 = scalar_select %p169, %s168, 23
      %s171 = smul.addr %s170, 4
      %s172 = scalar_lea.vmem %s3, %s171
      %s173 = smul.u32 12, %s14
      %v175 = vld [vmem:[%s166] sm:$0xf]
      %v176 = vld [vmem:[%s166 + $0x4] sm:$0xf]
      %v177 = vld [vmem:[%s166 + $0x8] sm:$0xf]
      %v178 = vld [vmem:[%s166 + $0xc] sm:$0xf]
      %v179 = vld [vmem:[%s166 + $0x10] sm:$0xf]
      %v180 = vld [vmem:[%s166 + $0x14] sm:$0xf]
      %v181 = vld [vmem:[%s166 + $0x18] sm:$0xf]
      %v182 = vld [vmem:[%s166 + $0x1c] sm:$0xf]
      %v183 = vld [vmem:[%s166 + $0x20] sm:$0xf]
      %v184 = vld [vmem:[%s166 + $0x24] sm:$0xf]
      %v185 = vld [vmem:[%s166 + $0x28] sm:$0xf]
      %v186 = vld [vmem:[%s166 + $0x2c] sm:$0xf]
      %v187 = vld [vmem:[%s1] sm:$0xf]
      %v188 = vld [vmem:[%s1 + $0x4] sm:$0xf]
      %v189 = vld [vmem:[%s1 + $0x8] sm:$0xf]
      %v190 = vld [vmem:[%s1 + $0xc] sm:$0xf]
      %v191 = vld [vmem:[%s1 + $0x10] sm:$0xf]
      %v192 = vld [vmem:[%s1 + $0x14] sm:$0xf]
      %v193 = vld [vmem:[%s1 + $0x18] sm:$0xf]
      %v194 = vld [vmem:[%s1 + $0x1c] sm:$0xf]
      %v195 = vld [vmem:[%s1 + $0x20] sm:$0xf]
      %v196 = vld [vmem:[%s1 + $0x24] sm:$0xf]
      %v197 = vld [vmem:[%s1 + $0x28] sm:$0xf]
      %v198 = vld [vmem:[%s2] sm:$0x1]
      %v200 = vlaneseq
      %v201 = vshrl.u32 %v200, 7
      %v202 = vsub.s32 0, %v201
      %v203 = vrot.slane %v198, %v202
      %v217 = vunpack.c.l.b16 %v175
      %v218 = vunpack.c.l.b16 %v176
      %v219 = vunpack.c.l.b16 %v177
      %v220 = vunpack.c.l.b16 %v178
      %v221 = vunpack.c.l.b16 %v179
      %v222 = vunpack.c.l.b16 %v180
      %v223 = vunpack.c.l.b16 %v181
      %v224 = vunpack.c.l.b16 %v182
      %v225 = vunpack.c.l.b16 %v183
      %v226 = vunpack.c.l.b16 %v184
      %v227 = vunpack.c.l.b16 %v185
      %v228 = vunpack.c.l.b16 %v186
      %v229 = vpack.c.b16 %v218, %v217
      %v230 = vpack.c.b16 %v220, %v219
      %v231 = vpack.c.b16 %v222, %v221
      %v232 = vpack.c.b16 %v224, %v223
      %v233 = vpack.c.b16 %v226, %v225
      %v234 = vpack.c.b16 %v228, %v227
      %v246 = vunpack.c.l.b16 %v187
      %v247 = vunpack.c.l.b16 %v188
      %v248 = vunpack.c.l.b16 %v189
      %v249 = vunpack.c.l.b16 %v190
      %v250 = vunpack.c.l.b16 %v191
      %v251 = vunpack.c.l.b16 %v192
      %v252 = vunpack.c.l.b16 %v193
      %v253 = vunpack.c.l.b16 %v194
      %v254 = vunpack.c.l.b16 %v195
      %v255 = vunpack.c.l.b16 %v196
      %v256 = vunpack.c.l.b16 %v197
      %v257 = vpack.c.b16 %v247, %v246
      %v258 = vpack.c.b16 %v249, %v248
      %v259 = vpack.c.b16 %v251, %v250
      %v260 = vpack.c.b16 %v253, %v252
      %v261 = vpack.c.b16 %v255, %v254
      %v262 = vpack.c.b16 %v256, %v256
      %vm268 = vcmask 719872
      %v270 = vsel %vm268, %v229, 0
      %v273 = vsel %vm268, %v230, 0
      %v276 = vsel %vm268, %v231, 0
      %v279 = vsel %vm268, %v232, 0
      %v282 = vsel %vm268, %v233, 0
      %v285 = vsel %vm268, %v234, 0
      %vm287 = vcmask 1043456
      %v289 = vsel %vm287, %v262, 0
      %291 = vmatprep.subr.bf16.mxu0 0
      %292 = vmatpush1.bf16.msra.mxu0 0
      %293 = vmatprep.subr.bf16.mxu0 0
      %294 = vmatpush1.bf16.msra.mxu0 0
      %295 = vmatprep.subr.bf16.mxu0 0
      %296 = vmatpush1.bf16.msra.mxu0 %v289
      %297 = vmatprep.subr.bf16.mxu0 0
      %298 = vmatpush1.bf16.msra.mxu0 %v261
      %299 = vmatprep.subr.bf16.mxu0 0
      %300 = vmatpush1.bf16.msra.mxu0 %v260
      %301 = vmatprep.subr.bf16.mxu0 0
      %302 = vmatpush1.bf16.msra.mxu0 %v259
      %303 = vmatprep.subr.bf16.mxu0 0
      %304 = vmatpush1.bf16.msra.mxu0 %v258
      %305 = vmatprep.subr.bf16.mxu0 0
      %306 = vmatpush1.bf16.msra.mxu0 %v257
      %307 = vmatprep.subr.bf16.mxu0 0
      %308 = vmatpush2.bf16.msra.mxu0 0
      %309 = vmatprep.subr.bf16.mxu0 0
      %310 = vmatpush2.bf16.msra.mxu0 0
      %311 = vmatprep.subr.bf16.mxu0 0
      %312 = vmatpush2.bf16.msra.mxu0 0
      %313 = vmatprep.subr.bf16.mxu0 0
      %314 = vmatpush2.bf16.msra.mxu0 0
      %315 = vmatprep.subr.bf16.mxu0 0
      %316 = vmatpush2.bf16.msra.mxu0 0
      %317 = vmatprep.subr.bf16.mxu0 0
      %318 = vmatpush2.bf16.msra.mxu0 0
      %319 = vmatprep.subr.bf16.mxu0 0
      %320 = vmatpush2.bf16.msra.mxu0 0
      %321 = vmatprep.subr.bf16.mxu0 0
      %322 = vmatpush2.bf16.msra.mxu0 0
      %323 = vmatprep.mubr.bf16.mxu0 0
      %324 = vmatmul.mubr.bf16.gmra.mxu0 %v270
      %v325 = vpop.f32.mrf.mxu0
      %v326 = vadd.f32 %v203, %v325
      %v327 = vpop.f32.mrf.mxu0
      %v328 = vpop.f32.mrf.mxu0
      %v329 = vadd.f32 %v203, %v328
      %v330 = vpop.f32.mrf.mxu0
      %331 = vmatprep.mubr.bf16.mxu0 0
      %332 = vmatmul.mubr.bf16.gmra.mxu0 %v273
      %v333 = vpop.f32.mrf.mxu0
      %v334 = vadd.f32 %v203, %v333
      %v335 = vpop.f32.mrf.mxu0
      %v336 = vpop.f32.mrf.mxu0
      %v337 = vadd.f32 %v203, %v336
      %v338 = vpop.f32.mrf.mxu0
      %339 = vmatprep.mubr.bf16.mxu0 0
      %340 = vmatmul.mubr.bf16.gmra.mxu0 %v276
      %v341 = vpop.f32.mrf.mxu0
      %v342 = vadd.f32 %v203, %v341
      %v343 = vpop.f32.mrf.mxu0
      %v344 = vpop.f32.mrf.mxu0
      %v345 = vadd.f32 %v203, %v344
      %v346 = vpop.f32.mrf.mxu0
      %347 = vmatprep.mubr.bf16.mxu0 0
      %348 = vmatmul.mubr.bf16.gmra.mxu0 %v279
      %v349 = vpop.f32.mrf.mxu0
      %v350 = vadd.f32 %v203, %v349
      %v351 = vpop.f32.mrf.mxu0
      %v352 = vpop.f32.mrf.mxu0
      %v353 = vadd.f32 %v203, %v352
      %v354 = vpop.f32.mrf.mxu0
      %355 = vmatprep.mubr.bf16.mxu0 0
      %356 = vmatmul.mubr.bf16.gmra.mxu0 %v282
      %v357 = vpop.f32.mrf.mxu0
      %v358 = vadd.f32 %v203, %v357
      %v359 = vpop.f32.mrf.mxu0
      %v360 = vpop.f32.mrf.mxu0
      %v361 = vadd.f32 %v203, %v360
      %v362 = vpop.f32.mrf.mxu0
      %363 = vmatprep.mubr.bf16.mxu0 0
      %364 = vmatmul.mubr.bf16.gmra.mxu0 %v285
      %v365 = vpop.f32.mrf.mxu0
      %v366 = vadd.f32 %v203, %v365
      %v367 = vpop.f32.mrf.mxu0
      %v368 = vpop.f32.mrf.mxu0
      %v369 = vadd.f32 %v203, %v368
      %v370 = vpop.f32.mrf.mxu0
      %371 = vdwg.mxu0
      %v372 = vmax.f32 %v326, 0.0
      %v373 = vmax.f32 %v329, 0.0
      %v374 = vmax.f32 %v334, 0.0
      %v375 = vmax.f32 %v337, 0.0
      %v376 = vmax.f32 %v342, 0.0
      %v377 = vmax.f32 %v345, 0.0
      %v378 = vmax.f32 %v350, 0.0
      %v379 = vmax.f32 %v353, 0.0
      %v380 = vmax.f32 %v358, 0.0
      %v381 = vmax.f32 %v361, 0.0
      %v382 = vmax.f32 %v366, 0.0
      %v383 = vmax.f32 %v369, 0.0
      %v384 = vpack.c.bf16 %v373, %v372
      %v385 = vpack.c.bf16 %v375, %v374
      %v386 = vpack.c.bf16 %v377, %v376
      %v387 = vpack.c.bf16 %v379, %v378
      %v388 = vpack.c.bf16 %v381, %v380
      %v389 = vpack.c.bf16 %v383, %v382
      %v396 = vunpack.c.l.b16 %v384
      %v397 = vunpack.c.h.b16 %v384
      %v398 = vunpack.c.l.b16 %v385
      %v399 = vunpack.c.h.b16 %v385
      %v400 = vunpack.c.l.b16 %v386
      %v401 = vunpack.c.h.b16 %v386
      %v402 = vunpack.c.l.b16 %v387
      %v403 = vunpack.c.h.b16 %v387
      %v404 = vunpack.c.l.b16 %v388
      %v405 = vunpack.c.h.b16 %v388
      %v406 = vunpack.c.l.b16 %v389
      %v407 = vunpack.c.h.b16 %v389
      %v408 = vpack.c.b16 %v396, %v396
      %v409 = vpack.c.b16 %v397, %v397
      %v410 = vpack.c.b16 %v398, %v398
      %v411 = vpack.c.b16 %v399, %v399
      %v412 = vpack.c.b16 %v400, %v400
      %v413 = vpack.c.b16 %v401, %v401
      %v414 = vpack.c.b16 %v402, %v402
      %v415 = vpack.c.b16 %v403, %v403
      %v416 = vpack.c.b16 %v404, %v404
      %v417 = vpack.c.b16 %v405, %v405
      %v418 = vpack.c.b16 %v406, %v406
      %v419 = vpack.c.b16 %v407, %v407
      %432 = vst [vmem:[%s172] sm:$0xf] %v408
      %433 = vst [vmem:[%s172 + $0x4] sm:$0xf] %v409
      %434 = vst [vmem:[%s172 + $0x8] sm:$0xf] %v410
      %435 = vst [vmem:[%s172 + $0xc] sm:$0xf] %v411
      %436 = vst [vmem:[%s172 + $0x10] sm:$0xf] %v412
      %437 = vst [vmem:[%s172 + $0x14] sm:$0xf] %v413
      %438 = vst [vmem:[%s172 + $0x18] sm:$0xf] %v414
      %439 = vst [vmem:[%s172 + $0x1c] sm:$0xf] %v415
      %440 = vst [vmem:[%s172 + $0x20] sm:$0xf] %v416
      %441 = vst [vmem:[%s172 + $0x24] sm:$0xf] %v417
      %442 = vst [vmem:[%s172 + $0x28] sm:$0xf] %v418
      %443 = vst [vmem:[%s172 + $0x2c] sm:$0xf] %v419
      %s444 = smul.u32 12, %s14
      %p445 = scmp.lt.s32.totalorder %s444, 23
      %s446 = scalar_select %p445, %s444, 23
      %s447 = smul.addr %s446, 4
      %s448 = scalar_lea.vmem %s3, %s447
      // Predicated region
      $region33: #{_lambda_.11} parent=31 // pred_check
        %p449 = pneg %p100
      $region34: #{_lambda_.11} parent=31 // pred_check_branch
        %451 = sbr.rel (%p449) target = $region36
      $region35: #{_lambda_.11} parent=31 // pred_region
        %s452 = smul.u32 12, %s14
      $region36: #{_lambda_.11} parent=31 // pred_fallthru
        _
    $region32: #{_lambda_.11} parent=5 // pred_fallthru
      _
    %p453 = scmp.le.s32.totalorder 2, %s9
    // Predicated region
    $region37: #{_lambda_.11} parent=5 // pred_check
      %p454 = pneg %p453
    $region38: #{_lambda_.11} parent=5 // pred_check_branch
      %456 = sbr.rel (%p454) target = $region40
    $region39: #{_lambda_.11} parent=5 // pred_region
      %s457 = ssub.s32 %s9, 2
      // Predicated region
      $region41: #{_lambda_.11} parent=39 // pred_check
        %p458 = pneg %p106
      $region42: #{_lambda_.11} parent=39 // pred_check_branch
        %460 = sbr.rel (%p458) target = $region44
      $region43: #{_lambda_.11} parent=39 // pred_region
        %s461 = smul.u32 12, %s15
        %p462 = scmp.lt.s32.totalorder %s461, 23
        %s463 = scalar_select %p462, %s461, 23
        %s464 = smul.addr %s463, 4
        %s465 = scalar_lea.vmem %s3, %s464
      $region44: #{_lambda_.11} parent=39 // pred_fallthru
        _
    $region40: #{_lambda_.11} parent=5 // pred_fallthru
      _
  $region6: #{_lambda_.11} parent=0 // loop_footer
    %s13 = sadd.s32 1, %s9
  $region7: #{_lambda_.11} parent=0 // loop_footer_branch
    %8 = sbr.rel target = $region3
  $region8: #{_lambda_.11} parent=0 // loop_exit
    _

// kernel: _lambda_.12
$region0: #{_lambda_.12}
  #allocation0 [shape = 'u32[]', space=smem, size = 0x4, offset = 0x4, fixed_abs, tag = 'smem constant byte address 0x4 - core index']
  #allocation1 [shape = 'u32[144,128]{1,0:T(1,128)}', space=vmem, size = 0x12000, scoped, tag = 'internal scratch']
  %s0 = inlined_call_operand.vmem [shape: bf16[96,176], index: 0, kind: input, shape index: {}]
  %s1 = inlined_call_operand.vmem [shape: bf16[176,128], index: 1, kind: input, shape index: {}]
  %s2 = inlined_call_operand.vmem [shape: f32[1,128], index: 2, kind: input, shape index: {}]
  %s3 = inlined_call_operand.vmem [shape: bf16[96,128], index: 3, kind: output, shape index: {}]
  %s4 = sld [smem:[#allocation0]]
  $region45: #{_lambda_.12} parent=0
    _
  %s6 = ssub.s32 1, %s4
  %s7 = scalar_select 0, %s6, %s4
  loop: start=0, step=1, limit=4
  $region2: #{_lambda_.12} parent=0 // loop_pre_header
    _
  $region3: #{_lambda_.12} parent=0 // loop_header
    %s9 = sphi 0, %s13
    %p10 = scmp.ge.s32.totalorder %s9, 4
    %s19 = sphi 0, %s21
    %s22 = sphi 0, %s19
    %s23 = sphi 0, %s22
    %s39 = sphi 0, %s23
    %s43 = sphi 0, %s43
    %s45 = sphi 0, %s43
    %s46 = sphi 0, %s45
    %s60 = sphi 0, %s46
    %s64 = sphi 0, %s64
    %s66 = sphi 0, %s64
    %s67 = sphi 0, %s66
    %s81 = sphi 0, %s67
    %s87 = sphi 0, %s89
    %s90 = sphi 0, %s87
    %s91 = sphi 0, %s90
    %s107 = sphi 0, %s91
  $region4: #{_lambda_.12} parent=0 // loop_header_branch
    %12 = sbr.rel (%p10) target = $region8
  $region5: #{_lambda_.12} parent=0 // loop_body
    %s14 = ssub.s32 %s9, 1
    %s15 = ssub.s32 %s9, 2
    %s16 = sadd.s32 %s9, 1
    %s17 = ssub.s32 %s9, %s16
    %p18 = scmp.eq.s32.totalorder %s17, 0
    %s20 = sadd.s32 %s19, 1
    %s21 = scalar_select %p18, %s19, %s20
    %p24 = pneg %p18
    %p25 = scmp.eq.s32.totalorder %s9, 1
    %p26 = por %p24, %p25
    %p27 = scmp.ne.s32.totalorder %s19, %s22
    %p28 = scmp.eq.s32.totalorder %s9, 0
    %p29 = por %p27, %p28
    %p30 = scmp.ne.s32.totalorder %s19, %s22
    %p31 = scmp.eq.s32.totalorder %s14, 1
    %p32 = por %p30, %p31
    %p33 = scmp.ne.s32.totalorder %s22, %s23
    %p34 = scmp.eq.s32.totalorder %s14, 0
    %p35 = por %p33, %p34
    %p36 = scmp.ne.s32.totalorder %s22, %s23
    %p37 = scmp.eq.s32.totalorder %s15, 1
    %p38 = por %p36, %p37
    %p40 = scmp.ne.s32.totalorder %s23, %s39
    %p41 = scmp.eq.s32.totalorder %s15, 0
    %p42 = por %p40, %p41
    %s44 = sadd.s32 %s43, 1
    %p47 = scmp.eq.s32.totalorder %s9, 1
    %p48 = scmp.ne.s32.totalorder %s43, %s45
    %p49 = scmp.eq.s32.totalorder %s9, 0
    %p50 = por %p48, %p49
    %p51 = scmp.ne.s32.totalorder %s43, %s45
    %p52 = scmp.eq.s32.totalorder %s14, 1
    %p53 = por %p51, %p52
    %p54 = scmp.ne.s32.totalorder %s45, %s46
    %p55 = scmp.eq.s32.totalorder %s14, 0
    %p56 = por %p54, %p55
    %p57 = scmp.ne.s32.totalorder %s45, %s46
    %p58 = scmp.eq.s32.totalorder %s15, 1
    %p59 = por %p57, %p58
    %p61 = scmp.ne.s32.totalorder %s46, %s60
    %p62 = scmp.eq.s32.totalorder %s15, 0
    %p63 = por %p61, %p62
    %s65 = sadd.s32 %s64, 1
    %p68 = scmp.eq.s32.totalorder %s9, 1
    %p69 = scmp.ne.s32.totalorder %s64, %s66
    %p70 = scmp.eq.s32.totalorder %s9, 0
    %p71 = por %p69, %p70
    %p72 = scmp.ne.s32.totalorder %s64, %s66
    %p73 = scmp.eq.s32.totalorder %s14, 1
    %p74 = por %p72, %p73
    %p75 = scmp.ne.s32.totalorder %s66, %s67
    %p76 = scmp.eq.s32.totalorder %s14, 0
    %p77 = por %p75, %p76
    %p78 = scmp.ne.s32.totalorder %s66, %s67
    %p79 = scmp.eq.s32.totalorder %s15, 1
    %p80 = por %p78, %p79
    %p82 = scmp.ne.s32.totalorder %s67, %s81
    %p83 = scmp.eq.s32.totalorder %s15, 0
    %p84 = por %p82, %p83
    %s85 = ssub.s32 %s9, %s16
    %p86 = scmp.eq.s32.totalorder %s85, 0
    %s88 = sadd.s32 %s87, 1
    %s89 = scalar_select %p86, %s87, %s88
    %p92 = pneg %p86
    %p93 = scmp.eq.s32.totalorder %s9, 1
    %p94 = por %p92, %p93
    %p95 = scmp.ne.s32.totalorder %s87, %s90
    %p96 = scmp.eq.s32.totalorder %s9, 0
    %p97 = por %p95, %p96
    %p98 = scmp.ne.s32.totalorder %s87, %s90
    %p99 = scmp.eq.s32.totalorder %s14, 1
    %p100 = por %p98, %p99
    %p101 = scmp.ne.s32.totalorder %s90, %s91
    %p102 = scmp.eq.s32.totalorder %s14, 0
    %p103 = por %p101, %p102
    %p104 = scmp.ne.s32.totalorder %s90, %s91
    %p105 = scmp.eq.s32.totalorder %s15, 1
    %p106 = por %p104, %p105
    %p108 = scmp.ne.s32.totalorder %s91, %s107
    %p109 = scmp.eq.s32.totalorder %s15, 0
    %p110 = por %p108, %p109
    %p111 = scmp.le.s32.totalorder 1, %s9
    %p112 = scmp.lt.s32.totalorder %s9, 3
    %p113 = pnand %p111, %p112
    %p114 = pneg %p113
    // Predicated region
    $region9: #{_lambda_.12} parent=5 // pred_check
      _
    $region10: #{_lambda_.12} parent=5 // pred_check_branch
      %116 = sbr.rel (%p113) target = $region12
    $region11: #{_lambda_.12} parent=5 // pred_region
      %s117 = ssub.s32 %s9, 1
      // Predicated region
      $region13: #{_lambda_.12} parent=11 // pred_check
        %p118 = pneg %p56
      $region14: #{_lambda_.12} parent=11 // pred_check_branch
        %120 = sbr.rel (%p118) target = $region16
      $region15: #{_lambda_.12} parent=11 // pred_region
        _
      $region16: #{_lambda_.12} parent=11 // pred_fallthru
        _
      // Predicated region
      $region17: #{_lambda_.12} parent=11 // pred_check
        %p121 = pneg %p77
      $region18: #{_lambda_.12} parent=11 // pred_check_branch
        %123 = sbr.rel (%p121) target = $region20
      $region19: #{_lambda_.12} parent=11 // pred_region
        _
      $region20: #{_lambda_.12} parent=11 // pred_fallthru
        _
    $region12: #{_lambda_.12} parent=5 // pred_fallthru
      _
    %p124 = scmp.lt.s32.totalorder %s9, 2
    // Predicated region
    $region21: #{_lambda_.12} parent=5 // pred_check
      %p125 = pneg %p124
    $region22: #{_lambda_.12} parent=5 // pred_check_branch
      %127 = sbr.rel (%p125) target = $region24
    $region23: #{_lambda_.12} parent=5 // pred_region
      // Predicated region
      $region25: #{_lambda_.12} parent=23 // pred_check
        %p128 = pneg %p29
      $region26: #{_lambda_.12} parent=23 // pred_check_branch
        %130 = sbr.rel (%p128) target = $region28
      $region27: #{_lambda_.12} parent=23 // pred_region
        %s131 = smul.u32 6, %s9
        %p132 = scmp.lt.s32.totalorder %s131, 11
        %s133 = scalar_select %p132, %s131, 11
        %s134 = smul.addr %s133, 2
        %s135 = smul.addr %s134, 4
        %s136 = scalar_lea.vmem %s0, %s135
        %s137 = smul.u32 6, %s9
      $region28: #{_lambda_.12} parent=23 // pred_fallthru
        _
    $region24: #{_lambda_.12} parent=5 // pred_fallthru
      _
    %p138 = scmp.le.s32.totalorder 1, %s9
    %p139 = scmp.lt.s32.totalorder %s9, 3
    %p140 = pnand %p138, %p139
    %p141 = pneg %p140
    // Predicated region
    $region29: #{_lambda_.12} parent=5 // pred_check
      _
    $region30: #{_lambda_.12} parent=5 // pred_check_branch
      %143 = sbr.rel (%p140) target = $region32
    $region31: #{_lambda_.12} parent=5 // pred_region
      %s144 = ssub.s32 %s9, 1
      %s145 = smul.u32 6, %s14
      %p146 = scmp.lt.s32.totalorder %s145, 11
      %s147 = scalar_select %p146, %s145, 11
      %s148 = smul.addr %s147, 2
      %s149 = smul.addr %s148, 4
      %s150 = scalar_lea.vmem %s0, %s149
      %p151 = pneg %p35
      %p152 = pneg %p32
      %p153 = pneg %p56
      %p154 = pneg %p53
      %p155 = pneg %p77
      %p156 = pneg %p74
      %p157 = pneg %p103
      %p158 = pneg %p100
      %s159 = smul.u32 6, %s14
      %p160 = scmp.lt.s32.totalorder %s159, 11
      %s161 = scalar_select %p160, %s159, 11
      %s162 = smul.addr %s161, 4
      %s163 = scalar_lea.vmem %s3, %s162
      %s164 = smul.u32 6, %s14
      %p165 = scmp.lt.s32.totalorder %s164, 11
      %s166 = scalar_select %p165, %s164, 11
      %s167 = smul.addr %s166, 2
      %s168 = smul.addr %s167, 4
      %s169 = scalar_lea.vmem %s0, %s168
      %s170 = smul.u32 6, %s14
      %s171 = smul.u32 6, %s14
      %p172 = scmp.lt.s32.totalorder %s171, 11
      %s173 = scalar_select %p172, %s171, 11
      %s174 = smul.addr %s173, 4
      %s175 = scalar_lea.vmem %s3, %s174
      %s176 = smul.u32 6, %s14
      %v178 = vld [vmem:[%s169] sm:$0xff]
      %v179 = vld [vmem:[%s169 + $0x8] sm:$0xff]
      %v180 = vld [vmem:[%s169 + $0x10] sm:$0xff]
      %v181 = vld [vmem:[%s169 + $0x18] sm:$0xff]
      %v182 = vld [vmem:[%s169 + $0x20] sm:$0xff]
      %v183 = vld [vmem:[%s169 + $0x28] sm:$0xff]
      %v184 = vld [vmem:[%s1] sm:$0xf]
      %v185 = vld [vmem:[%s1 + $0x4] sm:$0xf]
      %v186 = vld [vmem:[%s1 + $0x8] sm:$0xf]
      %v187 = vld [vmem:[%s1 + $0xc] sm:$0xf]
      %v188 = vld [vmem:[%s1 + $0x10] sm:$0xf]
      %v189 = vld [vmem:[%s1 + $0x14] sm:$0xf]
      %v190 = vld [vmem:[%s1 + $0x18] sm:$0xf]
      %v191 = vld [vmem:[%s1 + $0x1c] sm:$0xf]
      %v192 = vld [vmem:[%s1 + $0x20] sm:$0xf]
      %v193 = vld [vmem:[%s1 + $0x24] sm:$0xf]
      %v194 = vld [vmem:[%s1 + $0x28] sm:$0xf]
      %v195 = vld [vmem:[%s1 + $0x2c] sm:$0xf]
      %v196 = vld [vmem:[%s1 + $0x30] sm:$0xf]
      %v197 = vld [vmem:[%s1 + $0x34] sm:$0xf]
      %v198 = vld [vmem:[%s1 + $0x38] sm:$0xf]
      %v199 = vld [vmem:[%s1 + $0x3c] sm:$0xf]
      %v200 = vld [vmem:[%s1 + $0x40] sm:$0xf]
      %v201 = vld [vmem:[%s1 + $0x44] sm:$0xf]
      %v202 = vld [vmem:[%s1 + $0x48] sm:$0xf]
      %v203 = vld [vmem:[%s1 + $0x4c] sm:$0xf]
      %v204 = vld [vmem:[%s1 + $0x50] sm:$0xf]
      %v205 = vld [vmem:[%s1 + $0x54] sm:$0xf]
      %v206 = vld [vmem:[%s2] sm:$0x1]
      %v208 = vlaneseq
      %v209 = vshrl.u32 %v208, 7
      %v210 = vsub.s32 0, %v209
      %v211 = vrot.slane %v206, %v210
      %v219 = vunpack.c.l.b16 %v178
      %v220 = vunpack.c.h.b16 %v178
      %v221 = vunpack.c.l.b16 %v179
      %v222 = vunpack.c.h.b16 %v179
      %v223 = vunpack.c.l.b16 %v180
      %v224 = vunpack.c.h.b16 %v180
      %v225 = vunpack.c.l.b16 %v181
      %v226 = vunpack.c.h.b16 %v181
      %v227 = vunpack.c.l.b16 %v182
      %v228 = vunpack.c.h.b16 %v182
      %v229 = vunpack.c.l.b16 %v183
      %v230 = vunpack.c.h.b16 %v183
      %v231 = vpack.c.b16 %v221, %v219
      %v232 = vpack.c.b16 %v222, %v220
      %v233 = vpack.c.b16 %v225, %v223
      %v234 = vpack.c.b16 %v226, %v224
      %v235 = vpack.c.b16 %v229, %v227
      %v236 = vpack.c.b16 %v230, %v228
      %v262 = vunpack.c.l.b16 %v184
      %v263 = vunpack.c.l.b16 %v185
      %v264 = vunpack.c.l.b16 %v186
      %v265 = vunpack.c.l.b16 %v187
      %v266 = vunpack.c.l.b16 %v188
      %v267 = vunpack.c.l.b16 %v189
      %v268 = vunpack.c.l.b16 %v190
      %v269 = vunpack.c.l.b16 %v191
      %v270 = vunpack.c.l.b16 %v192
      %v271 = vunpack.c.l.b16 %v193
      %v272 = vunpack.c.l.b16 %v194
      %v273 = vunpack.c.l.b16 %v195
      %v274 = vunpack.c.l.b16 %v196
      %v275 = vunpack.c.l.b16 %v197
      %v276 = vunpack.c.l.b16 %v198
      %v277 = vunpack.c.l.b16 %v199
      %v278 = vunpack.c.l.b16 %v200
      %v279 = vunpack.c.l.b16 %v201
      %v280 = vunpack.c.l.b16 %v202
      %v281 = vunpack.c.l.b16 %v203
      %v282 = vunpack.c.l.b16 %v204
      %v283 = vunpack.c.l.b16 %v205
      %v284 = vpack.c.b16 %v263, %v262
      %v285 = vpack.c.b16 %v265, %v264
      %v286 = vpack.c.b16 %v267, %v266
      %v287 = vpack.c.b16 %v269, %v268
      %v288 = vpack.c.b16 %v271, %v270
      %v289 = vpack.c.b16 %v273, %v272
      %v290 = vpack.c.b16 %v275, %v274
      %v291 = vpack.c.b16 %v277, %v276
      %v292 = vpack.c.b16 %v279, %v278
      %v293 = vpack.c.b16 %v281, %v280
      %v294 = vpack.c.b16 %v283, %v282
      %vm306 = vcmask 392192
      %v308 = vsel %vm306, %v232, 0
      %v311 = vsel %vm306, %v234, 0
      %v314 = vsel %vm306, %v236, 0
      %316 = vmatprep.subr.bf16.mxu0 0
      %317 = vmatpush1.bf16.msra.mxu0 %v291
      %318 = vmatprep.subr.bf16.mxu0 0
      %319 = vmatpush1.bf16.msra.mxu0 %v290
      %320 = vmatprep.subr.bf16.mxu0 0
      %321 = vmatpush1.bf16.msra.mxu0 %v289
      %322 = vmatprep.subr.bf16.mxu0 0
      %323 = vmatpush1.bf16.msra.mxu0 %v288
      %324 = vmatprep.subr.bf16.mxu0 0
      %325 = vmatpush1.bf16.msra.mxu0 %v287
      %326 = vmatprep.subr.bf16.mxu0 0
      %327 = vmatpush1.bf16.msra.mxu0 %v286
      %328 = vmatprep.subr.bf16.mxu0 0
      %329 = vmatpush1.bf16.msra.mxu0 %v285
      %330 = vmatprep.subr.bf16.mxu0 0
      %331 = vmatpush1.bf16.msra.mxu0 %v284
      %332 = vmatprep.subr.bf16.mxu0 0
      %333 = vmatpush2.bf16.msra.mxu0 0
      %334 = vmatprep.subr.bf16.mxu0 0
      %335 = vmatpush2.bf16.msra.mxu0 0
      %336 = vmatprep.subr.bf16.mxu0 0
      %337 = vmatpush2.bf16.msra.mxu0 0
      %338 = vmatprep.subr.bf16.mxu0 0
      %339 = vmatpush2.bf16.msra.mxu0 0
      %340 = vmatprep.subr.bf16.mxu0 0
      %341 = vmatpush2.bf16.msra.mxu0 0
      %342 = vmatprep.subr.bf16.mxu0 0
      %343 = vmatpush2.bf16.msra.mxu0 %v294
      %344 = vmatprep.subr.bf16.mxu0 0
      %345 = vmatpush2.bf16.msra.mxu0 %v293
      %346 = vmatprep.subr.bf16.mxu0 0
      %347 = vmatpush2.bf16.msra.mxu0 %v292
      %348 = vmatprep.mubr.bf16.mxu0 %v308
      %349 = vmatmul.mubr.bf16.gmra.mxu0 %v231
      %v350 = vpop.f32.mrf.mxu0
      %v351 = vadd.f32 %v211, %v350
      %v352 = vpop.f32.mrf.mxu0
      %v353 = vpop.f32.mrf.mxu0
      %v354 = vadd.f32 %v211, %v353
      %v355 = vpop.f32.mrf.mxu0
      %356 = vmatprep.mubr.bf16.mxu0 %v311
      %357 = vmatmul.mubr.bf16.gmra.mxu0 %v233
      %v358 = vpop.f32.mrf.mxu0
      %v359 = vadd.f32 %v211, %v358
      %v360 = vpop.f32.mrf.mxu0
      %v361 = vpop.f32.mrf.mxu0
      %v362 = vadd.f32 %v211, %v361
      %v363 = vpop.f32.mrf.mxu0
      %364 = vmatprep.mubr.bf16.mxu0 %v314
      %365 = vmatmul.mubr.bf16.gmra.mxu0 %v235
      %v366 = vpop.f32.mrf.mxu0
      %v367 = vadd.f32 %v211, %v366
      %v368 = vpop.f32.mrf.mxu0
      %v369 = vpop.f32.mrf.mxu0
      %v370 = vadd.f32 %v211, %v369
      %v371 = vpop.f32.mrf.mxu0
      %372 = vdwg.mxu0
      %v373 = vmax.f32 %v351, 0.0
      %v374 = vmax.f32 %v354, 0.0
      %v375 = vmax.f32 %v359, 0.0
      %v376 = vmax.f32 %v362, 0.0
      %v377 = vmax.f32 %v367, 0.0
      %v378 = vmax.f32 %v370, 0.0
      %v379 = vpack.c.bf16 %v374, %v373
      %v380 = vpack.c.bf16 %v376, %v375
      %v381 = vpack.c.bf16 %v378, %v377
      %v385 = vunpack.c.l.b16 %v379
      %v386 = vunpack.c.h.b16 %v379
      %v387 = vunpack.c.l.b16 %v380
      %v388 = vunpack.c.h.b16 %v380
      %v389 = vunpack.c.l.b16 %v381
      %v390 = vunpack.c.h.b16 %v381
      %v391 = vpack.c.b16 %v385, %v385
      %v392 = vpack.c.b16 %v386, %v386
      %v393 = vpack.c.b16 %v387, %v387
      %v394 = vpack.c.b16 %v388, %v388
      %v395 = vpack.c.b16 %v389, %v389
      %v396 = vpack.c.b16 %v390, %v390
      %403 = vst [vmem:[%s175] sm:$0xf] %v391
      %404 = vst [vmem:[%s175 + $0x4] sm:$0xf] %v392
      %405 = vst [vmem:[%s175 + $0x8] sm:$0xf] %v393
      %406 = vst [vmem:[%s175 + $0xc] sm:$0xf] %v394
      %407 = vst [vmem:[%s175 + $0x10] sm:$0xf] %v395
      %408 = vst [vmem:[%s175 + $0x14] sm:$0xf] %v396
      %s409 = smul.u32 6, %s14
      %p410 = scmp.lt.s32.totalorder %s409, 11
      %s411 = scalar_select %p410, %s409, 11
      %s412 = smul.addr %s411, 4
      %s413 = scalar_lea.vmem %s3, %s412
      // Predicated region
      $region33: #{_lambda_.12} parent=31 // pred_check
        %p414 = pneg %p100
      $region34: #{_lambda_.12} parent=31 // pred_check_branch
        %416 = sbr.rel (%p414) target = $region36
      $region35: #{_lambda_.12} parent=31 // pred_region
        %s417 = smul.u32 6, %s14
      $region36: #{_lambda_.12} parent=31 // pred_fallthru
        _
    $region32: #{_lambda_.12} parent=5 // pred_fallthru
      _
    %p418 = scmp.le.s32.totalorder 2, %s9
    // Predicated region
    $region37: #{_lambda_.12} parent=5 // pred_check
      %p419 = pneg %p418
    $region38: #{_lambda_.12} parent=5 // pred_check_branch
      %421 = sbr.rel (%p419) target = $region40
    $region39: #{_lambda_.12} parent=5 // pred_region
      %s422 = ssub.s32 %s9, 2
      // Predicated region
      $region41: #{_lambda_.12} parent=39 // pred_check
        %p423 = pneg %p106
      $region42: #{_lambda_.12} parent=39 // pred_check_branch
        %425 = sbr.rel (%p423) target = $region44
      $region43: #{_lambda_.12} parent=39 // pred_region
        %s426 = smul.u32 6, %s15
        %p427 = scmp.lt.s32.totalorder %s426, 11
        %s428 = scalar_select %p427, %s426, 11
        %s429 = smul.addr %s428, 4
        %s430 = scalar_lea.vmem %s3, %s429
      $region44: #{_lambda_.12} parent=39 // pred_fallthru
        _
    $region40: #{_lambda_.12} parent=5 // pred_fallthru
      _
  $region6: #{_lambda_.12} parent=0 // loop_footer
    %s13 = sadd.s32 1, %s9
  $region7: #{_lambda_.12} parent=0 // loop_footer_branch
    %8 = sbr.rel target = $region3
  $region8: #{_lambda_.12} parent=0 // loop_exit
    _

// kernel: _lambda_.13
$region0: #{_lambda_.13}
  #allocation0 [shape = 'u32[]', space=smem, size = 0x4, offset = 0x4, fixed_abs, tag = 'smem constant byte address 0x4 - core index']
  #allocation1 [shape = 'u32[144,128]{1,0:T(1,128)}', space=vmem, size = 0x12000, scoped, tag = 'internal scratch']
  %s0 = inlined_call_operand.vmem [shape: bf16[32,112], index: 0, kind: input, shape index: {}]
  %s1 = inlined_call_operand.vmem [shape: bf16[112,128], index: 1, kind: input, shape index: {}]
  %s2 = inlined_call_operand.vmem [shape: f32[1,128], index: 2, kind: input, shape index: {}]
  %s3 = inlined_call_operand.vmem [shape: bf16[32,128], index: 3, kind: output, shape index: {}]
  %s4 = sld [smem:[#allocation0]]
  $region22: #{_lambda_.13} parent=0
    _
  %s6 = ssub.s32 1, %s4
  %s7 = scalar_select 0, %s6, %s4
  // Predicated region
  $region2: #{_lambda_.13} parent=0 // pred_check
    _
  $region3: #{_lambda_.13} parent=0 // pred_check_branch
    %9 = sbr.rel (0) target = $region5
  $region4: #{_lambda_.13} parent=0 // pred_region
    _
  $region5: #{_lambda_.13} parent=0 // pred_fallthru
    _
  // Predicated region
  $region6: #{_lambda_.13} parent=0 // pred_check
    _
  $region7: #{_lambda_.13} parent=0 // pred_check_branch
    %11 = sbr.rel (0) target = $region9
  $region8: #{_lambda_.13} parent=0 // pred_region
    _
  $region9: #{_lambda_.13} parent=0 // pred_fallthru
    _
  // Predicated region
  $region10: #{_lambda_.13} parent=0 // pred_check
    _
  $region11: #{_lambda_.13} parent=0 // pred_check_branch
    %13 = sbr.rel (0) target = $region13
  $region12: #{_lambda_.13} parent=0 // pred_region
    _
  $region13: #{_lambda_.13} parent=0 // pred_fallthru
    _
  %v15 = vld [vmem:[%s0] sm:$0xf]
  %v16 = vld [vmem:[%s0 + $0x4] sm:$0xf]
  %v17 = vld [vmem:[%s0 + $0x8] sm:$0xf]
  %v18 = vld [vmem:[%s0 + $0xc] sm:$0xf]
  %v19 = vld [vmem:[%s1] sm:$0xf]
  %v20 = vld [vmem:[%s1 + $0x4] sm:$0xf]
  %v21 = vld [vmem:[%s1 + $0x8] sm:$0xf]
  %v22 = vld [vmem:[%s1 + $0xc] sm:$0xf]
  %v23 = vld [vmem:[%s1 + $0x10] sm:$0xf]
  %v24 = vld [vmem:[%s1 + $0x14] sm:$0xf]
  %v25 = vld [vmem:[%s1 + $0x18] sm:$0xf]
  %v26 = vld [vmem:[%s1 + $0x1c] sm:$0xf]
  %v27 = vld [vmem:[%s1 + $0x20] sm:$0xf]
  %v28 = vld [vmem:[%s1 + $0x24] sm:$0xf]
  %v29 = vld [vmem:[%s1 + $0x28] sm:$0xf]
  %v30 = vld [vmem:[%s1 + $0x2c] sm:$0xf]
  %v31 = vld [vmem:[%s1 + $0x30] sm:$0xf]
  %v32 = vld [vmem:[%s1 + $0x34] sm:$0xf]
  %v33 = vld [vmem:[%s2] sm:$0x1]
  %v35 = vlaneseq
  %v36 = vshrl.u32 %v35, 7
  %v37 = vsub.s32 0, %v36
  %v38 = vrot.slane %v33, %v37
  %v44 = vunpack.c.l.b16 %v15
  %v45 = vunpack.c.l.b16 %v16
  %v46 = vunpack.c.l.b16 %v17
  %v47 = vunpack.c.l.b16 %v18
  %v48 = vpack.c.b16 %v45, %v44
  %v49 = vpack.c.b16 %v47, %v46
  %v64 = vunpack.c.l.b16 %v19
  %v65 = vunpack.c.l.b16 %v20
  %v66 = vunpack.c.l.b16 %v21
  %v67 = vunpack.c.l.b16 %v22
  %v68 = vunpack.c.l.b16 %v23
  %v69 = vunpack.c.l.b16 %v24
  %v70 = vunpack.c.l.b16 %v25
  %v71 = vunpack.c.l.b16 %v26
  %v72 = vunpack.c.l.b16 %v27
  %v73 = vunpack.c.l.b16 %v28
  %v74 = vunpack.c.l.b16 %v29
  %v75 = vunpack.c.l.b16 %v30
  %v76 = vunpack.c.l.b16 %v31
  %v77 = vunpack.c.l.b16 %v32
  %v78 = vpack.c.b16 %v65, %v64
  %v79 = vpack.c.b16 %v67, %v66
  %v80 = vpack.c.b16 %v69, %v68
  %v81 = vpack.c.b16 %v71, %v70
  %v82 = vpack.c.b16 %v73, %v72
  %v83 = vpack.c.b16 %v75, %v74
  %v84 = vpack.c.b16 %v77, %v76
  %vm92 = vcmask 916480
  %v94 = vsel %vm92, %v48, 0
  %v97 = vsel %vm92, %v49, 0
  %99 = vmatprep.subr.bf16.mxu0 0
  %100 = vmatpush1.bf16.msra.mxu0 0
  %101 = vmatprep.subr.bf16.mxu0 0
  %102 = vmatpush1.bf16.msra.mxu0 %v84
  %103 = vmatprep.subr.bf16.mxu0 0
  %104 = vmatpush1.bf16.msra.mxu0 %v83
  %105 = vmatprep.subr.bf16.mxu0 0
  %106 = vmatpush1.bf16.msra.mxu0 %v82
  %107 = vmatprep.subr.bf16.mxu0 0
  %108 = vmatpush1.bf16.msra.mxu0 %v81
  %109 = vmatprep.subr.bf16.mxu0 0
  %110 = vmatpush1.bf16.msra.mxu0 %v80
  %111 = vmatprep.subr.bf16.mxu0 0
  %112 = vmatpush1.bf16.msra.mxu0 %v79
  %113 = vmatprep.subr.bf16.mxu0 0
  %114 = vmatpush1.bf16.msra.mxu0 %v78
  %115 = vmatprep.subr.bf16.mxu0 0
  %116 = vmatpush2.bf16.msra.mxu0 0
  %117 = vmatprep.subr.bf16.mxu0 0
  %118 = vmatpush2.bf16.msra.mxu0 0
  %119 = vmatprep.subr.bf16.mxu0 0
  %120 = vmatpush2.bf16.msra.mxu0 0
  %121 = vmatprep.subr.bf16.mxu0 0
  %122 = vmatpush2.bf16.msra.mxu0 0
  %123 = vmatprep.subr.bf16.mxu0 0
  %124 = vmatpush2.bf16.msra.mxu0 0
  %125 = vmatprep.subr.bf16.mxu0 0
  %126 = vmatpush2.bf16.msra.mxu0 0
  %127 = vmatprep.subr.bf16.mxu0 0
  %128 = vmatpush2.bf16.msra.mxu0 0
  %129 = vmatprep.subr.bf16.mxu0 0
  %130 = vmatpush2.bf16.msra.mxu0 0
  %131 = vmatprep.mubr.bf16.mxu0 0
  %132 = vmatmul.mubr.bf16.gmra.mxu0 %v94
  %v133 = vpop.f32.mrf.mxu0
  %v134 = vadd.f32 %v38, %v133
  %v135 = vpop.f32.mrf.mxu0
  %v136 = vpop.f32.mrf.mxu0
  %v137 = vadd.f32 %v38, %v136
  %v138 = vpop.f32.mrf.mxu0
  %139 = vmatprep.mubr.bf16.mxu0 0
  %140 = vmatmul.mubr.bf16.gmra.mxu0 %v97
  %v141 = vpop.f32.mrf.mxu0
  %v142 = vadd.f32 %v38, %v141
  %v143 = vpop.f32.mrf.mxu0
  %v144 = vpop.f32.mrf.mxu0
  %v145 = vadd.f32 %v38, %v144
  %v146 = vpop.f32.mrf.mxu0
  %147 = vdwg.mxu0
  %v148 = vmax.f32 %v134, 0.0
  %v149 = vmax.f32 %v137, 0.0
  %v150 = vmax.f32 %v142, 0.0
  %v151 = vmax.f32 %v145, 0.0
  %v152 = vpack.c.bf16 %v149, %v148
  %v153 = vpack.c.bf16 %v151, %v150
  %v156 = vunpack.c.l.b16 %v152
  %v157 = vunpack.c.h.b16 %v152
  %v158 = vunpack.c.l.b16 %v153
  %v159 = vunpack.c.h.b16 %v153
  %v160 = vpack.c.b16 %v156, %v156
  %v161 = vpack.c.b16 %v157, %v157
  %v162 = vpack.c.b16 %v158, %v158
  %v163 = vpack.c.b16 %v159, %v159
  %168 = vst [vmem:[%s3] sm:$0xf] %v160
  %169 = vst [vmem:[%s3 + $0x4] sm:$0xf] %v161
  %170 = vst [vmem:[%s3 + $0x8] sm:$0xf] %v162
  %171 = vst [vmem:[%s3 + $0xc] sm:$0xf] %v163
  // Predicated region
  $region14: #{_lambda_.13} parent=0 // pred_check
    _
  $region15: #{_lambda_.13} parent=0 // pred_check_branch
    %173 = sbr.rel (0) target = $region17
  $region16: #{_lambda_.13} parent=0 // pred_region
    _
  $region17: #{_lambda_.13} parent=0 // pred_fallthru
    _
  // Predicated region
  $region18: #{_lambda_.13} parent=0 // pred_check
    _
  $region19: #{_lambda_.13} parent=0 // pred_check_branch
    %175 = sbr.rel (0) target = $region21
  $region20: #{_lambda_.13} parent=0 // pred_region
    _
  $region21: #{_lambda_.13} parent=0 // pred_fallthru
    _

// kernel: _lambda_.19
$region0: #{_lambda_.19}
  #allocation0 [shape = 'u32[]', space=smem, size = 0x4, offset = 0x4, fixed_abs, tag = 'smem constant byte address 0x4 - core index']
  #allocation1 [shape = 'u32[144,128]{1,0:T(1,128)}', space=vmem, size = 0x12000, scoped, tag = 'internal scratch']
  %s0 = inlined_call_operand.vmem [shape: f32[8,128], index: 0, kind: input, shape index: {}]
  %s1 = inlined_call_operand.vmem [shape: f32[8,128], index: 1, kind: input, shape index: {}]
  %s2 = inlined_call_operand.vmem [shape: bf16[128,128], index: 2, kind: input, shape index: {}]
  %s3 = inlined_call_operand.vmem [shape: bf16[128,128], index: 3, kind: input, shape index: {}]
  %s4 = inlined_call_operand.vmem [shape: f32[1,128], index: 4, kind: input, shape index: {}]
  %s5 = inlined_call_operand.vmem [shape: f32[8,128], index: 5, kind: output, shape index: {}]
  %s6 = sld [smem:[#allocation0]]
  $region30: #{_lambda_.19} parent=0
    _
  %s8 = ssub.s32 1, %s6
  %s9 = scalar_select 0, %s8, %s6
  // Predicated region
  $region2: #{_lambda_.19} parent=0 // pred_check
    _
  $region3: #{_lambda_.19} parent=0 // pred_check_branch
    %11 = sbr.rel (0) target = $region5
  $region4: #{_lambda_.19} parent=0 // pred_region
    _
  $region5: #{_lambda_.19} parent=0 // pred_fallthru
    _
  // Predicated region
  $region6: #{_lambda_.19} parent=0 // pred_check
    _
  $region7: #{_lambda_.19} parent=0 // pred_check_branch
    %13 = sbr.rel (0) target = $region9
  $region8: #{_lambda_.19} parent=0 // pred_region
    _
  $region9: #{_lambda_.19} parent=0 // pred_fallthru
    _
  // Predicated region
  $region10: #{_lambda_.19} parent=0 // pred_check
    _
  $region11: #{_lambda_.19} parent=0 // pred_check_branch
    %15 = sbr.rel (0) target = $region13
  $region12: #{_lambda_.19} parent=0 // pred_region
    _
  $region13: #{_lambda_.19} parent=0 // pred_fallthru
    _
  // Predicated region
  $region14: #{_lambda_.19} parent=0 // pred_check
    _
  $region15: #{_lambda_.19} parent=0 // pred_check_branch
    %17 = sbr.rel (0) target = $region17
  $region16: #{_lambda_.19} parent=0 // pred_region
    _
  $region17: #{_lambda_.19} parent=0 // pred_fallthru
    _
  // Predicated region
  $region18: #{_lambda_.19} parent=0 // pred_check
    _
  $region19: #{_lambda_.19} parent=0 // pred_check_branch
    %19 = sbr.rel (0) target = $region21
  $region20: #{_lambda_.19} parent=0 // pred_region
    _
  $region21: #{_lambda_.19} parent=0 // pred_fallthru
    _
  %v21 = vld [vmem:[%s0] sm:$0xff]
  %v22 = vld [vmem:[%s1] sm:$0xff]
  %v23 = vmul.f32 %v21, %v21
  %24 = vadd.xlane.f32.xlu0 %v23
  %v25 = vpop.xlane.xlu0 %24
  %v26 = vmax.f32 %v25, 1e-24
  %v27 = vrsqrt.pop %v26
  %v28 = vmul.f32 %v21, %v27
  %v29 = vmul.f32 %v22, %v22
  %30 = vadd.xlane.f32.xlu0 %v29
  %v31 = vpop.xlane.xlu0 %30
  %v32 = vmax.f32 %v31, 1e-24
  %v33 = vrsqrt.pop %v32
  %v34 = vmul.f32 %v22, %v33
  %v35 = vpack.c.bf16 %v28, %v28
  %v36 = vld [vmem:[%s2] sm:$0xf]
  %v37 = vld [vmem:[%s2 + $0x4] sm:$0xf]
  %v38 = vld [vmem:[%s2 + $0x8] sm:$0xf]
  %v39 = vld [vmem:[%s2 + $0xc] sm:$0xf]
  %v40 = vld [vmem:[%s2 + $0x10] sm:$0xf]
  %v41 = vld [vmem:[%s2 + $0x14] sm:$0xf]
  %v42 = vld [vmem:[%s2 + $0x18] sm:$0xf]
  %v43 = vld [vmem:[%s2 + $0x1c] sm:$0xf]
  %v44 = vld [vmem:[%s2 + $0x20] sm:$0xf]
  %v45 = vld [vmem:[%s2 + $0x24] sm:$0xf]
  %v46 = vld [vmem:[%s2 + $0x28] sm:$0xf]
  %v47 = vld [vmem:[%s2 + $0x2c] sm:$0xf]
  %v48 = vld [vmem:[%s2 + $0x30] sm:$0xf]
  %v49 = vld [vmem:[%s2 + $0x34] sm:$0xf]
  %v50 = vld [vmem:[%s2 + $0x38] sm:$0xf]
  %v51 = vld [vmem:[%s2 + $0x3c] sm:$0xf]
  %v52 = vpack.c.bf16 %v34, %v34
  %v53 = vld [vmem:[%s3] sm:$0xf]
  %v54 = vld [vmem:[%s3 + $0x4] sm:$0xf]
  %v55 = vld [vmem:[%s3 + $0x8] sm:$0xf]
  %v56 = vld [vmem:[%s3 + $0xc] sm:$0xf]
  %v57 = vld [vmem:[%s3 + $0x10] sm:$0xf]
  %v58 = vld [vmem:[%s3 + $0x14] sm:$0xf]
  %v59 = vld [vmem:[%s3 + $0x18] sm:$0xf]
  %v60 = vld [vmem:[%s3 + $0x1c] sm:$0xf]
  %v61 = vld [vmem:[%s3 + $0x20] sm:$0xf]
  %v62 = vld [vmem:[%s3 + $0x24] sm:$0xf]
  %v63 = vld [vmem:[%s3 + $0x28] sm:$0xf]
  %v64 = vld [vmem:[%s3 + $0x2c] sm:$0xf]
  %v65 = vld [vmem:[%s3 + $0x30] sm:$0xf]
  %v66 = vld [vmem:[%s3 + $0x34] sm:$0xf]
  %v67 = vld [vmem:[%s3 + $0x38] sm:$0xf]
  %v68 = vld [vmem:[%s3 + $0x3c] sm:$0xf]
  %v85 = vunpack.c.l.b16 %v53
  %v86 = vunpack.c.l.b16 %v54
  %v87 = vunpack.c.l.b16 %v55
  %v88 = vunpack.c.l.b16 %v56
  %v89 = vunpack.c.l.b16 %v57
  %v90 = vunpack.c.l.b16 %v58
  %v91 = vunpack.c.l.b16 %v59
  %v92 = vunpack.c.l.b16 %v60
  %v93 = vunpack.c.l.b16 %v61
  %v94 = vunpack.c.l.b16 %v62
  %v95 = vunpack.c.l.b16 %v63
  %v96 = vunpack.c.l.b16 %v64
  %v97 = vunpack.c.l.b16 %v65
  %v98 = vunpack.c.l.b16 %v66
  %v99 = vunpack.c.l.b16 %v67
  %v100 = vunpack.c.l.b16 %v68
  %v101 = vpack.c.b16 %v86, %v85
  %v102 = vpack.c.b16 %v88, %v87
  %v103 = vpack.c.b16 %v90, %v89
  %v104 = vpack.c.b16 %v92, %v91
  %v105 = vpack.c.b16 %v94, %v93
  %v106 = vpack.c.b16 %v96, %v95
  %v107 = vpack.c.b16 %v98, %v97
  %v108 = vpack.c.b16 %v100, %v99
  %117 = vmatprep.subr.bf16.mxu0 0
  %118 = vmatpush1.bf16.msra.mxu0 %v108
  %119 = vmatprep.subr.bf16.mxu0 0
  %120 = vmatpush1.bf16.msra.mxu0 %v107
  %121 = vmatprep.subr.bf16.mxu0 0
  %122 = vmatpush1.bf16.msra.mxu0 %v106
  %123 = vmatprep.subr.bf16.mxu0 0
  %124 = vmatpush1.bf16.msra.mxu0 %v105
  %125 = vmatprep.subr.bf16.mxu0 0
  %126 = vmatpush1.bf16.msra.mxu0 %v104
  %127 = vmatprep.subr.bf16.mxu0 0
  %128 = vmatpush1.bf16.msra.mxu0 %v103
  %129 = vmatprep.subr.bf16.mxu0 0
  %130 = vmatpush1.bf16.msra.mxu0 %v102
  %131 = vmatprep.subr.bf16.mxu0 0
  %132 = vmatpush1.bf16.msra.mxu0 %v101
  %133 = vmatprep.subr.bf16.mxu0 0
  %134 = vmatpush2.bf16.msra.mxu0 0
  %135 = vmatprep.subr.bf16.mxu0 0
  %136 = vmatpush2.bf16.msra.mxu0 0
  %137 = vmatprep.subr.bf16.mxu0 0
  %138 = vmatpush2.bf16.msra.mxu0 0
  %139 = vmatprep.subr.bf16.mxu0 0
  %140 = vmatpush2.bf16.msra.mxu0 0
  %141 = vmatprep.subr.bf16.mxu0 0
  %142 = vmatpush2.bf16.msra.mxu0 0
  %143 = vmatprep.subr.bf16.mxu0 0
  %144 = vmatpush2.bf16.msra.mxu0 0
  %145 = vmatprep.subr.bf16.mxu0 0
  %146 = vmatpush2.bf16.msra.mxu0 0
  %147 = vmatprep.subr.bf16.mxu0 0
  %148 = vmatpush2.bf16.msra.mxu0 0
  %149 = vmatprep.mubr.bf16.mxu0 0
  %150 = vmatmul.mubr.bf16.gmra.mxu0 %v52
  %v151 = vpop.f32.mrf.mxu0
  %v152 = vadd.f32 0.0, %v151
  %v153 = vpop.f32.mrf.mxu0
  %v154 = vpop.f32.mrf.mxu0
  %v155 = vpop.f32.mrf.mxu0
  %156 = vdwg.mxu0
  %v173 = vunpack.c.l.b16 %v36
  %v174 = vunpack.c.l.b16 %v37
  %v175 = vunpack.c.l.b16 %v38
  %v176 = vunpack.c.l.b16 %v39
  %v177 = vunpack.c.l.b16 %v40
  %v178 = vunpack.c.l.b16 %v41
  %v179 = vunpack.c.l.b16 %v42
  %v180 = vunpack.c.l.b16 %v43
  %v181 = vunpack.c.l.b16 %v44
  %v182 = vunpack.c.l.b16 %v45
  %v183 = vunpack.c.l.b16 %v46
  %v184 = vunpack.c.l.b16 %v47
  %v185 = vunpack.c.l.b16 %v48
  %v186 = vunpack.c.l.b16 %v49
  %v187 = vunpack.c.l.b16 %v50
  %v188 = vunpack.c.l.b16 %v51
  %v189 = vpack.c.b16 %v174, %v173
  %v190 = vpack.c.b16 %v176, %v175
  %v191 = vpack.c.b16 %v178, %v177
  %v192 = vpack.c.b16 %v180, %v179
  %v193 = vpack.c.b16 %v182, %v181
  %v194 = vpack.c.b16 %v184, %v183
  %v195 = vpack.c.b16 %v186, %v185
  %v196 = vpack.c.b16 %v188, %v187
  %205 = vmatprep.subr.bf16.mxu0 0
  %206 = vmatpush1.bf16.msra.mxu0 %v196
  %207 = vmatprep.subr.bf16.mxu0 0
  %208 = vmatpush1.bf16.msra.mxu0 %v195
  %209 = vmatprep.subr.bf16.mxu0 0
  %210 = vmatpush1.bf16.msra.mxu0 %v194
  %211 = vmatprep.subr.bf16.mxu0 0
  %212 = vmatpush1.bf16.msra.mxu0 %v193
  %213 = vmatprep.subr.bf16.mxu0 0
  %214 = vmatpush1.bf16.msra.mxu0 %v192
  %215 = vmatprep.subr.bf16.mxu0 0
  %216 = vmatpush1.bf16.msra.mxu0 %v191
  %217 = vmatprep.subr.bf16.mxu0 0
  %218 = vmatpush1.bf16.msra.mxu0 %v190
  %219 = vmatprep.subr.bf16.mxu0 0
  %220 = vmatpush1.bf16.msra.mxu0 %v189
  %221 = vmatprep.subr.bf16.mxu0 0
  %222 = vmatpush2.bf16.msra.mxu0 0
  %223 = vmatprep.subr.bf16.mxu0 0
  %224 = vmatpush2.bf16.msra.mxu0 0
  %225 = vmatprep.subr.bf16.mxu0 0
  %226 = vmatpush2.bf16.msra.mxu0 0
  %227 = vmatprep.subr.bf16.mxu0 0
  %228 = vmatpush2.bf16.msra.mxu0 0
  %229 = vmatprep.subr.bf16.mxu0 0
  %230 = vmatpush2.bf16.msra.mxu0 0
  %231 = vmatprep.subr.bf16.mxu0 0
  %232 = vmatpush2.bf16.msra.mxu0 0
  %233 = vmatprep.subr.bf16.mxu0 0
  %234 = vmatpush2.bf16.msra.mxu0 0
  %235 = vmatprep.subr.bf16.mxu0 0
  %236 = vmatpush2.bf16.msra.mxu0 0
  %237 = vmatprep.mubr.bf16.mxu0 0
  %238 = vmatmul.mubr.bf16.gmra.mxu0 %v35
  %v239 = vpop.f32.mrf.mxu0
  %v240 = vadd.f32 %v152, %v239
  %v241 = vpop.f32.mrf.mxu0
  %v242 = vpop.f32.mrf.mxu0
  %v243 = vpop.f32.mrf.mxu0
  %244 = vdwg.mxu0
  %v245 = vld [vmem:[%s4] sm:$0x1]
  %v247 = vlaneseq
  %v248 = vshrl.u32 %v247, 7
  %v249 = vsub.s32 0, %v248
  %v250 = vrot.slane %v245, %v249
  %v252 = vadd.f32 %v240, %v250
  %253 = vst [vmem:[%s5] sm:$0xff] %v252
  // Predicated region
  $region22: #{_lambda_.19} parent=0 // pred_check
    _
  $region23: #{_lambda_.19} parent=0 // pred_check_branch
    %255 = sbr.rel (0) target = $region25
  $region24: #{_lambda_.19} parent=0 // pred_region
    _
  $region25: #{_lambda_.19} parent=0 // pred_fallthru
    _
  // Predicated region
  $region26: #{_lambda_.19} parent=0 // pred_check
    _
  $region27: #{_lambda_.19} parent=0 // pred_check_branch
    %257 = sbr.rel (0) target = $region29
  $region28: #{_lambda_.19} parent=0 // pred_region
    _
  $region29: #{_lambda_.19} parent=0 // pred_fallthru
    _

</llo_original>
